<compile_context>
chip_gen: v6e
topology: v6e:2x2x1
jax: 0.10.0
libtpu: 0.0.40
codegen_flags: <defaults>
</compile_context>

<pallas_src>
import functools
import math

import jax
import jax.numpy as jnp
from jax import lax
from jax.experimental import pallas as pl
from jax.experimental.pallas import tpu as pltpu

_LN_EPS = 1e-5  # torch.nn.LayerNorm default


def _round_up(a, b):
    return ((a + b - 1) // b) * b


def _vmem_limit(est_bytes):
    # Footprint-derived scoped-VMEM request with headroom, capped at 48 MiB so
    # it is safe on v7x (64 MiB/TC) and never over-asks on v5e/v6e.
    return int(min(48 * 1024 * 1024, max(16 * 1024 * 1024, 2 * est_bytes)))


def _layernorm_f32(x, gamma, beta):
    mu = jnp.mean(x, axis=-1, keepdims=True)
    xc = x - mu
    var = jnp.mean(xc * xc, axis=-1, keepdims=True)
    return xc * lax.rsqrt(var + _LN_EPS) * gamma + beta


# ----------------------------------------------------------------------------
# Kernel 1: x + MSA(LN1(x))
# ----------------------------------------------------------------------------
def _ln_msa_kernel(x_ref, g_ref, b_ref, wqkv_ref, wo_ref, bo_ref, o_ref,
                   ho_ref, *, heads, dim_head):
    x = x_ref[0].astype(jnp.float32)                        # (S, D)
    dim = heads * dim_head
    ln = _layernorm_f32(x, g_ref[...], b_ref[...])

    # Single full-width QKV projection (bf16 operands, f32 accumulation).
    qkv = jnp.dot(ln.astype(jnp.bfloat16), wqkv_ref[...],
                  preferred_element_type=jnp.float32)       # (S, 3D) f32

    # Fold the 1/dim_head score scale into q once (spec divides by d, not
    # sqrt(d)); O(S*D) VPU work instead of O(S^2) per head.
    q = qkv[:, :dim] * (1.0 / dim_head)
    k = qkv[:, dim:2 * dim]
    v = qkv[:, 2 * dim:]

    # Per-head attention with deferred softmax normalisation; every head's
    # output lands in the bf16 concat scratch so Wo is a single matmul.
    for h in range(heads):                                  # static unroll
        sl = slice(h * dim_head, (h + 1) * dim_head)
        qh = q[:, sl].astype(jnp.bfloat16)
        kh = k[:, sl].astype(jnp.bfloat16)
        vh = v[:, sl].astype(jnp.bfloat16)

        dots = lax.dot_general(qh, kh, (((1,), (1,)), ((), ())),
                               preferred_element_type=jnp.float32)  # (S, S)
        e = jnp.exp(dots - jnp.max(dots, axis=-1, keepdims=True))   # f32
        denom = jnp.sum(e, axis=-1, keepdims=True)                  # (S, 1)
        oh = jnp.dot(e.astype(jnp.bfloat16), vh,
                     preferred_element_type=jnp.float32)            # (S, dh)
        oh = oh * pl.reciprocal(denom, approx=True)                 # f32, EUP
        ho_ref[:, sl] = oh.astype(ho_ref.dtype)

    # Single output projection: K = D fills the MXU contraction depth.
    y = (jnp.dot(ho_ref[...], wo_ref[...], preferred_element_type=jnp.float32)
         + bo_ref[...].astype(jnp.float32))
    o_ref[0] = (x + y).astype(o_ref.dtype)


def ln_msa_residual(x, ln_g, ln_b, wqkv, wo, bo, *, heads):
    B, S, D = x.shape
    assert D % heads == 0, "dim must be divisible by heads"
    dim_head = D // heads

    kernel = functools.partial(_ln_msa_kernel, heads=heads, dim_head=dim_head)

    weight_bytes = (D * 3 * D + D * D) * 2                  # bf16 weights
    flops = (2 * B * S * D * (3 * D)      # qkv projection
             + 4 * B * S * S * D          # q@k^T and attn@v
             + 2 * B * S * D * D)         # output projection
    cost = pl.CostEstimate(
        flops=flops,
        transcendentals=B * heads * S * S,
        bytes_accessed=2 * B * S * D * x.dtype.itemsize + weight_bytes)

    # Footprint: double-buffered x/out blocks, resident weights, qkv f32
    # temporary, per-head (S,S) scores, and the bf16 head-output scratch.
    est = (4 * S * D * 4 + weight_bytes + S * 3 * D * 4
           + 2 * S * S * 4 + S * D * 2)

    return pl.pallas_call(
        kernel,
        out_shape=jax.ShapeDtypeStruct((B, S, D), x.dtype),
        grid_spec=pltpu.PrefetchScalarGridSpec(
            num_scalar_prefetch=0,
            grid=(B,),
            in_specs=[
                pl.BlockSpec((1, S, D), lambda b: (b, 0, 0)),   # x
                pl.BlockSpec((1, D), lambda b: (0, 0)),         # ln1 gamma
                pl.BlockSpec((1, D), lambda b: (0, 0)),         # ln1 beta
                pl.BlockSpec((D, 3 * D), lambda b: (0, 0)),     # Wqkv (bf16)
                pl.BlockSpec((D, D), lambda b: (0, 0)),         # Wo (bf16)
                pl.BlockSpec((1, D), lambda b: (0, 0)),         # bo
            ],
            out_specs=pl.BlockSpec((1, S, D), lambda b: (b, 0, 0)),
            scratch_shapes=[pltpu.VMEM((S, D), jnp.bfloat16)],  # head concat
        ),
        compiler_params=pltpu.CompilerParams(
            dimension_semantics=("parallel",),
            vmem_limit_bytes=_vmem_limit(est)),
        cost_estimate=cost,
    )(x, ln_g.reshape(1, D), ln_b.reshape(1, D),
      wqkv.astype(jnp.bfloat16), wo.astype(jnp.bfloat16), bo.reshape(1, D))


# ----------------------------------------------------------------------------
# Kernel 2: x + MLP(LN2(x))   (row tiles x hidden chunks, f32 accumulator)
# ----------------------------------------------------------------------------
def _ln_mlp_kernel(x_ref, g_ref, b_ref, w1_ref, b1_ref, w2_ref, b2_ref,
                   o_ref, acc_ref, ln_ref):
    k = pl.program_id(1)

    @pl.when(k == 0)
    def _():
        x = x_ref[...].astype(jnp.float32)
        ln = _layernorm_f32(x, g_ref[...], b_ref[...])
        ln_ref[...] = ln.astype(ln_ref.dtype)     # cache LN(x) in bf16
        acc_ref[...] = jnp.zeros_like(acc_ref)

    # Hidden chunk: h_c = GELU(LN(x) @ W1[:, c] + b1[c]);  acc += h_c @ W2[c,:]
    h = jnp.dot(ln_ref[...], w1_ref[...], preferred_element_type=jnp.float32)
    h = h + b1_ref[...].astype(jnp.float32)
    # Exact (erf-based) GELU, matching torch.nn.GELU() default (kept in f32).
    h = 0.5 * h * (1.0 + lax.erf(h * (1.0 / math.sqrt(2.0))))
    acc_ref[...] += jnp.dot(h.astype(w2_ref.dtype), w2_ref[...],
                            preferred_element_type=jnp.float32)

    @pl.when(k == pl.num_programs(1) - 1)
    def _():
        y = (acc_ref[...] + b2_ref[...].astype(jnp.float32)
             + x_ref[...].astype(jnp.float32))
        o_ref[...] = y.astype(o_ref.dtype)


def ln_mlp_residual(x, ln_g, ln_b, w1, b1, w2, b2, *, tm=256, block_h=None):
    B, S, D = x.shape
    hidden = w1.shape[1]
    M = B * S

    # Row tile: pick <= tm, multiple of 8; pad rows instead of asserting.
    tm = _round_up(max(8, min(tm, _round_up(M, 8))), 8)
    Mp = _round_up(M, tm)

    # Hidden chunk size.  Prefer the full hidden dim (weights grid-invariant ->
    # W1/W2 are DMA'd from HBM exactly once); fall back to 128-multiple chunks
    # only when the bf16 weights would blow the VMEM budget.
    weight_budget = 24 * 1024 * 1024
    if block_h is None:
        block_h = hidden if 2 * D * hidden * 2 <= weight_budget else 1024
    tk = hidden
    if block_h < hidden and hidden % 128 == 0:
        cand = max(128, (min(block_h, hidden) // 128) * 128)
        while cand >= 128:
            if hidden % cand == 0:
                tk = cand
                break
            cand -= 128
    nk = hidden // tk
    num_row_tiles = Mp // tm

    x2 = x.reshape(M, D)
    if Mp != M:
        x2 = jnp.pad(x2, ((0, Mp - M), (0, 0)))

    # Streamed weight bytes: once when resident (nk==1), once per row tile
    # when chunk-streaming is kept.
    streamed_w = 2 * D * hidden * 2 * (num_row_tiles if nk > 1 else 1)
    cost = pl.CostEstimate(flops=4 * Mp * D * hidden,
                           transcendentals=Mp * hidden,
                           bytes_accessed=2 * Mp * D * 4 + streamed_w)

    # Footprint: double-buffered x/out tiles, W1/W2 blocks (double-buffered
    # only when chunked), f32 hidden activation, accumulator + LN cache.
    est = (4 * tm * D * 4
           + 2 * D * tk * 2 * (2 if nk > 1 else 1)
           + tm * tk * 4
           + tm * D * 4 + tm * D * 2)

    out = pl.pallas_call(
        _ln_mlp_kernel,
        out_shape=jax.ShapeDtypeStruct((Mp, D), x.dtype),
        grid_spec=pltpu.PrefetchScalarGridSpec(
            num_scalar_prefetch=0,
            grid=(num_row_tiles, nk),
            in_specs=[
                pl.BlockSpec((tm, D), lambda i, k: (i, 0)),     # x rows
                pl.BlockSpec((1, D), lambda i, k: (0, 0)),      # ln2 gamma
                pl.BlockSpec((1, D), lambda i, k: (0, 0)),      # ln2 beta
                pl.BlockSpec((D, tk), lambda i, k: (0, k)),     # W1 chunk
                pl.BlockSpec((1, tk), lambda i, k: (0, k)),     # b1 chunk
                pl.BlockSpec((tk, D), lambda i, k: (k, 0)),     # W2 chunk
                pl.BlockSpec((1, D), lambda i, k: (0, 0)),      # b2
            ],
            out_specs=pl.BlockSpec((tm, D), lambda i, k: (i, 0)),
            scratch_shapes=[pltpu.VMEM((tm, D), jnp.float32),   # accumulator
                            pltpu.VMEM((tm, D), jnp.bfloat16)], # LN(x) cache
        ),
        compiler_params=pltpu.CompilerParams(
            dimension_semantics=("parallel", "arbitrary"),
            vmem_limit_bytes=_vmem_limit(est)),
        cost_estimate=cost,
    )(x2, ln_g.reshape(1, D), ln_b.reshape(1, D),
      w1.astype(jnp.bfloat16), b1.reshape(1, hidden),
      w2.astype(jnp.bfloat16), b2.reshape(1, D))
    return out[:M].reshape(B, S, D)


# ----------------------------------------------------------------------------
# Full TransformerBlock forward
# ----------------------------------------------------------------------------
def transformer_block_pallas(x, p, *, heads, tm=256, block_h=None):
    x = ln_msa_residual(x, p["ln1_g"], p["ln1_b"], p["wqkv"], p["wo"],
                        p["bo"], heads=heads)
    x = ln_mlp_residual(x, p["ln2_g"], p["ln2_b"], p["w1"], p["b1"],
                        p["w2"], p["b2"], tm=tm, block_h=block_h)
    return x


def transformer_block_reference(x, p, *, heads):
    B, S, D = x.shape
    dh = D // heads

    def ln(t, g, b):
        mu = t.mean(-1, keepdims=True)
        var = ((t - mu) ** 2).mean(-1, keepdims=True)
        return (t - mu) * lax.rsqrt(var + _LN_EPS) * g + b

    h = ln(x, p["ln1_g"], p["ln1_b"])
    qkv = h @ p["wqkv"]
    q, k, v = jnp.split(qkv, 3, axis=-1)
    to_heads = lambda t: t.reshape(B, S, heads, dh).transpose(0, 2, 1, 3)
    q, k, v = map(to_heads, (q, k, v))
    dots = jnp.einsum("bhid,bhjd->bhij", q, k) / dh
    attn = jax.nn.softmax(dots, axis=-1)
    out = jnp.einsum("bhij,bhjd->bhid", attn, v)
    out = out.transpose(0, 2, 1, 3).reshape(B, S, D)
    x = x + out @ p["wo"] + p["bo"]

    h2 = ln(x, p["ln2_g"], p["ln2_b"])
    mlp = (jax.nn.gelu(h2 @ p["w1"] + p["b1"], approximate=False)
           @ p["w2"] + p["b2"])
    return x + mlp


if __name__ == "__main__":
    # Small but lane-dense shapes (dim multiple of 128 keeps stores unmasked).
    batch, seq, dim, heads, expansion = 2, 128, 128, 4, 4
    hidden = dim * expansion  # 512

    key = jax.random.PRNGKey(0)
    keys = jax.random.split(key, 12)

    x = jax.random.normal(keys[0], (batch, seq, dim), dtype=jnp.float32)

    lim_d = 1.0 / math.sqrt(dim)
    lim_h = 1.0 / math.sqrt(hidden)
    p = {
        "ln1_g": 1.0 + 0.1 * jax.random.normal(keys[1], (dim,), jnp.float32),
        "ln1_b": 0.1 * jax.random.normal(keys[2], (dim,), jnp.float32),
        "wqkv": jax.random.uniform(keys[3], (dim, 3 * dim), jnp.float32,
                                   -lim_d, lim_d),
        "wo": jax.random.uniform(keys[4], (dim, dim), jnp.float32,
                                 -lim_d, lim_d),
        "bo": jax.random.uniform(keys[5], (dim,), jnp.float32, -lim_d, lim_d),
        "ln2_g": 1.0 + 0.1 * jax.random.normal(keys[6], (dim,), jnp.float32),
        "ln2_b": 0.1 * jax.random.normal(keys[7], (dim,), jnp.float32),
        "w1": jax.random.uniform(keys[8], (dim, hidden), jnp.float32,
                                 -lim_d, lim_d),
        "b1": jax.random.uniform(keys[9], (hidden,), jnp.float32,
                                 -lim_d, lim_d),
        "w2": jax.random.uniform(keys[10], (hidden, dim), jnp.float32,
                                 -lim_h, lim_h),
        "b2": jax.random.uniform(keys[11], (dim,), jnp.float32,
                                 -lim_h, lim_h),
    }

    ref = transformer_block_reference(x, p, heads=heads)

    # 1) Default path: grid-resident MLP weights (tk = hidden, fetched once).
    out = transformer_block_pallas(x, p, heads=heads)
    jax.block_until_ready(out)
    assert jnp.allclose(out, ref, atol=5e-2, rtol=5e-2), (
        "resident-weights mismatch vs reference, max abs err = "
        f"{float(jnp.max(jnp.abs(out - ref)))}")

    # 2) Chunk-streaming fallback path: multiple row tiles + hidden chunks
    #    (exercises the accumulator / pl.when init-finalize logic).
    out2 = transformer_block_pallas(x, p, heads=heads, tm=128, block_h=256)
    jax.block_until_ready(out2)
    assert jnp.allclose(out2, ref, atol=5e-2, rtol=5e-2), (
        "chunked-weights mismatch vs reference, max abs err = "
        f"{float(jnp.max(jnp.abs(out2 - ref)))}")

    print("KERNEL_OK")
</pallas_src>

<mosaic_0001>
module attributes {stable_mosaic.version = 11 : i64} {
  func.func @_ln_msa_kernel(%arg0: i32, %arg1: memref<1x128x128xf32, #tpu.memory_space<vmem>>, %arg2: memref<1x128xf32, #tpu.memory_space<vmem>>, %arg3: memref<1x128xf32, #tpu.memory_space<vmem>>, %arg4: memref<128x384xbf16, #tpu.memory_space<vmem>>, %arg5: memref<128x128xbf16, #tpu.memory_space<vmem>>, %arg6: memref<1x128xf32, #tpu.memory_space<vmem>>, %arg7: memref<1x128x128xf32, #tpu.memory_space<vmem>>, %arg8: memref<128x128xbf16, #tpu.memory_space<vmem>>) attributes {dimension_semantics = [#tpu.dimension_semantics<parallel>], iteration_bounds = array<i64: 2>, scalar_prefetch = 0 : i64, scratch_operands = 1 : i64, tpu.core_type = #tpu.core_type<tc>, window_params = [{transform_indices = @transform_0, window_bounds = array<i64: 1, 128, 128>}, {pipeline_mode = #tpu.pipeline_mode<synchronous>, transform_indices = @transform_1, window_bounds = array<i64: 1, 128>}, {pipeline_mode = #tpu.pipeline_mode<synchronous>, transform_indices = @transform_2, window_bounds = array<i64: 1, 128>}, {pipeline_mode = #tpu.pipeline_mode<synchronous>, transform_indices = @transform_3, window_bounds = array<i64: 128, 384>}, {pipeline_mode = #tpu.pipeline_mode<synchronous>, transform_indices = @transform_4, window_bounds = array<i64: 128, 128>}, {pipeline_mode = #tpu.pipeline_mode<synchronous>, transform_indices = @transform_5, window_bounds = array<i64: 1, 128>}, {transform_indices = @transform_6, window_bounds = array<i64: 1, 128, 128>}]} {
    %c0 = arith.constant 0 : index
    %c0_0 = arith.constant 0 : index
    %c0_1 = arith.constant 0 : index
    %0 = vector.load %arg1[%c0, %c0_0, %c0_1] : memref<1x128x128xf32, #tpu.memory_space<vmem>>, vector<1x128x128xf32>
    %1 = vector.shape_cast %0 : vector<1x128x128xf32> to vector<128x128xf32>
    %c0_2 = arith.constant 0 : index
    %c0_3 = arith.constant 0 : index
    %2 = vector.load %arg2[%c0_2, %c0_3] : memref<1x128xf32, #tpu.memory_space<vmem>>, vector<1x128xf32>
    %c0_4 = arith.constant 0 : index
    %c0_5 = arith.constant 0 : index
    %3 = vector.load %arg3[%c0_4, %c0_5] : memref<1x128xf32, #tpu.memory_space<vmem>>, vector<1x128xf32>
    %cst = arith.constant dense<0.000000e+00> : vector<128xf32>
    %4 = vector.multi_reduction <add>, %1, %cst [1] : vector<128x128xf32> to vector<128xf32>
    %5 = vector.shape_cast %4 : vector<128xf32> to vector<128x1xf32>
    %cst_6 = arith.constant 1.280000e+02 : f32
    %6 = vector.broadcast %cst_6 : f32 to vector<128x1xf32>
    %7 = arith.divf %5, %6 : vector<128x1xf32>
    %8 = vector.broadcast %7 : vector<128x1xf32> to vector<128x128xf32>
    %9 = arith.subf %1, %8 : vector<128x128xf32>
    %10 = arith.mulf %9, %9 : vector<128x128xf32>
    %cst_7 = arith.constant dense<0.000000e+00> : vector<128xf32>
    %11 = vector.multi_reduction <add>, %10, %cst_7 [1] : vector<128x128xf32> to vector<128xf32>
    %12 = vector.shape_cast %11 : vector<128xf32> to vector<128x1xf32>
    %cst_8 = arith.constant 1.280000e+02 : f32
    %13 = vector.broadcast %cst_8 : f32 to vector<128x1xf32>
    %14 = arith.divf %12, %13 : vector<128x1xf32>
    %cst_9 = arith.constant 9.99999974E-6 : f32
    %15 = vector.broadcast %cst_9 : f32 to vector<128x1xf32>
    %16 = arith.addf %14, %15 : vector<128x1xf32>
    %17 = math.rsqrt %16 : vector<128x1xf32>
    %18 = vector.broadcast %17 : vector<128x1xf32> to vector<128x128xf32>
    %19 = arith.mulf %9, %18 : vector<128x128xf32>
    %20 = vector.broadcast %2 : vector<1x128xf32> to vector<128x128xf32>
    %21 = arith.mulf %19, %20 : vector<128x128xf32>
    %22 = vector.broadcast %3 : vector<1x128xf32> to vector<128x128xf32>
    %23 = arith.addf %21, %22 : vector<128x128xf32>
    %24 = arith.truncf %23 : vector<128x128xf32> to vector<128x128xbf16>
    %c0_10 = arith.constant 0 : index
    %c0_11 = arith.constant 0 : index
    %25 = vector.load %arg4[%c0_10, %c0_11] : memref<128x384xbf16, #tpu.memory_space<vmem>>, vector<128x384xbf16>
    %cst_12 = arith.constant dense<0.000000e+00> : vector<128x384xf32>
    %26 = tpu.matmul %24, %25, %cst_12 {dimension_numbers = #tpu.dot_dimension_numbers<[1], [0], [0], [1], [0, 0, 1, 1], [], []>} : vector<128x128xbf16>, vector<128x384xbf16>, vector<128x384xf32> -> vector<128x384xf32>
    %27 = vector.extract_strided_slice %26 {offsets = [0, 0], sizes = [128, 128], strides = [1, 1]} : vector<128x384xf32> to vector<128x128xf32>
    %cst_13 = arith.constant 3.125000e-02 : f32
    %28 = vector.broadcast %cst_13 : f32 to vector<128x128xf32>
    %29 = arith.mulf %27, %28 : vector<128x128xf32>
    %30 = vector.extract_strided_slice %26 {offsets = [0, 128], sizes = [128, 128], strides = [1, 1]} : vector<128x384xf32> to vector<128x128xf32>
    %31 = vector.extract_strided_slice %26 {offsets = [0, 256], sizes = [128, 128], strides = [1, 1]} : vector<128x384xf32> to vector<128x128xf32>
    %32 = vector.extract_strided_slice %29 {offsets = [0, 0], sizes = [128, 32], strides = [1, 1]} : vector<128x128xf32> to vector<128x32xf32>
    %33 = arith.truncf %32 : vector<128x32xf32> to vector<128x32xbf16>
    %34 = vector.extract_strided_slice %30 {offsets = [0, 0], sizes = [128, 32], strides = [1, 1]} : vector<128x128xf32> to vector<128x32xf32>
    %35 = arith.truncf %34 : vector<128x32xf32> to vector<128x32xbf16>
    %36 = vector.extract_strided_slice %31 {offsets = [0, 0], sizes = [128, 32], strides = [1, 1]} : vector<128x128xf32> to vector<128x32xf32>
    %37 = arith.truncf %36 : vector<128x32xf32> to vector<128x32xbf16>
    %cst_14 = arith.constant dense<0.000000e+00> : vector<128x128xf32>
    %38 = tpu.matmul %33, %35, %cst_14 {dimension_numbers = #tpu.dot_dimension_numbers<[1], [1], [0], [0], [0, 0, 1, 0], [], []>} : vector<128x32xbf16>, vector<128x32xbf16>, vector<128x128xf32> -> vector<128x128xf32>
    %cst_15 = arith.constant dense<0xFF800000> : vector<128xf32>
    %39 = vector.multi_reduction <maximumf>, %38, %cst_15 [1] : vector<128x128xf32> to vector<128xf32>
    %40 = vector.shape_cast %39 : vector<128xf32> to vector<128x1xf32>
    %41 = vector.broadcast %40 : vector<128x1xf32> to vector<128x128xf32>
    %42 = arith.subf %38, %41 : vector<128x128xf32>
    %43 = math.exp %42 : vector<128x128xf32>
    %cst_16 = arith.constant dense<0.000000e+00> : vector<128xf32>
    %44 = vector.multi_reduction <add>, %43, %cst_16 [1] : vector<128x128xf32> to vector<128xf32>
    %45 = vector.shape_cast %44 : vector<128xf32> to vector<128x1xf32>
    %46 = arith.truncf %43 : vector<128x128xf32> to vector<128x128xbf16>
    %cst_17 = arith.constant dense<0.000000e+00> : vector<128x32xf32>
    %47 = tpu.matmul %46, %37, %cst_17 {dimension_numbers = #tpu.dot_dimension_numbers<[1], [0], [0], [1], [0, 0, 1, 1], [], []>} : vector<128x128xbf16>, vector<128x32xbf16>, vector<128x32xf32> -> vector<128x32xf32>
    %48 = tpu.reciprocal %45 {approx = true} : vector<128x1xf32> -> vector<128x1xf32>
    %49 = vector.broadcast %48 : vector<128x1xf32> to vector<128x32xf32>
    %50 = arith.mulf %47, %49 : vector<128x32xf32>
    %51 = arith.truncf %50 : vector<128x32xf32> to vector<128x32xbf16>
    %c0_18 = arith.constant 0 : index
    %c0_19 = arith.constant 0 : index
    %52 = vector.load %arg8[%c0_18, %c0_19] : memref<128x128xbf16, #tpu.memory_space<vmem>>, vector<128x32xbf16>
    tpu.vector_store %arg8[%c0_18, %c0_19], %51 {strides = array<i32>} : memref<128x128xbf16, #tpu.memory_space<vmem>>, vector<128x32xbf16>,
    %53 = vector.extract_strided_slice %29 {offsets = [0, 32], sizes = [128, 32], strides = [1, 1]} : vector<128x128xf32> to vector<128x32xf32>
    %54 = arith.truncf %53 : vector<128x32xf32> to vector<128x32xbf16>
    %55 = vector.extract_strided_slice %30 {offsets = [0, 32], sizes = [128, 32], strides = [1, 1]} : vector<128x128xf32> to vector<128x32xf32>
    %56 = arith.truncf %55 : vector<128x32xf32> to vector<128x32xbf16>
    %57 = vector.extract_strided_slice %31 {offsets = [0, 32], sizes = [128, 32], strides = [1, 1]} : vector<128x128xf32> to vector<128x32xf32>
    %58 = arith.truncf %57 : vector<128x32xf32> to vector<128x32xbf16>
    %cst_20 = arith.constant dense<0.000000e+00> : vector<128x128xf32>
    %59 = tpu.matmul %54, %56, %cst_20 {dimension_numbers = #tpu.dot_dimension_numbers<[1], [1], [0], [0], [0, 0, 1, 0], [], []>} : vector<128x32xbf16>, vector<128x32xbf16>, vector<128x128xf32> -> vector<128x128xf32>
    %cst_21 = arith.constant dense<0xFF800000> : vector<128xf32>
    %60 = vector.multi_reduction <maximumf>, %59, %cst_21 [1] : vector<128x128xf32> to vector<128xf32>
    %61 = vector.shape_cast %60 : vector<128xf32> to vector<128x1xf32>
    %62 = vector.broadcast %61 : vector<128x1xf32> to vector<128x128xf32>
    %63 = arith.subf %59, %62 : vector<128x128xf32>
    %64 = math.exp %63 : vector<128x128xf32>
    %cst_22 = arith.constant dense<0.000000e+00> : vector<128xf32>
    %65 = vector.multi_reduction <add>, %64, %cst_22 [1] : vector<128x128xf32> to vector<128xf32>
    %66 = vector.shape_cast %65 : vector<128xf32> to vector<128x1xf32>
    %67 = arith.truncf %64 : vector<128x128xf32> to vector<128x128xbf16>
    %cst_23 = arith.constant dense<0.000000e+00> : vector<128x32xf32>
    %68 = tpu.matmul %67, %58, %cst_23 {dimension_numbers = #tpu.dot_dimension_numbers<[1], [0], [0], [1], [0, 0, 1, 1], [], []>} : vector<128x128xbf16>, vector<128x32xbf16>, vector<128x32xf32> -> vector<128x32xf32>
    %69 = tpu.reciprocal %66 {approx = true} : vector<128x1xf32> -> vector<128x1xf32>
    %70 = vector.broadcast %69 : vector<128x1xf32> to vector<128x32xf32>
    %71 = arith.mulf %68, %70 : vector<128x32xf32>
    %72 = arith.truncf %71 : vector<128x32xf32> to vector<128x32xbf16>
    %c0_24 = arith.constant 0 : index
    %c32 = arith.constant 32 : index
    %73 = vector.load %arg8[%c0_24, %c32] : memref<128x128xbf16, #tpu.memory_space<vmem>>, vector<128x32xbf16>
    tpu.vector_store %arg8[%c0_24, %c32], %72 {strides = array<i32>} : memref<128x128xbf16, #tpu.memory_space<vmem>>, vector<128x32xbf16>,
    %74 = vector.extract_strided_slice %29 {offsets = [0, 64], sizes = [128, 32], strides = [1, 1]} : vector<128x128xf32> to vector<128x32xf32>
    %75 = arith.truncf %74 : vector<128x32xf32> to vector<128x32xbf16>
    %76 = vector.extract_strided_slice %30 {offsets = [0, 64], sizes = [128, 32], strides = [1, 1]} : vector<128x128xf32> to vector<128x32xf32>
    %77 = arith.truncf %76 : vector<128x32xf32> to vector<128x32xbf16>
    %78 = vector.extract_strided_slice %31 {offsets = [0, 64], sizes = [128, 32], strides = [1, 1]} : vector<128x128xf32> to vector<128x32xf32>
    %79 = arith.truncf %78 : vector<128x32xf32> to vector<128x32xbf16>
    %cst_25 = arith.constant dense<0.000000e+00> : vector<128x128xf32>
    %80 = tpu.matmul %75, %77, %cst_25 {dimension_numbers = #tpu.dot_dimension_numbers<[1], [1], [0], [0], [0, 0, 1, 0], [], []>} : vector<128x32xbf16>, vector<128x32xbf16>, vector<128x128xf32> -> vector<128x128xf32>
    %cst_26 = arith.constant dense<0xFF800000> : vector<128xf32>
    %81 = vector.multi_reduction <maximumf>, %80, %cst_26 [1] : vector<128x128xf32> to vector<128xf32>
    %82 = vector.shape_cast %81 : vector<128xf32> to vector<128x1xf32>
    %83 = vector.broadcast %82 : vector<128x1xf32> to vector<128x128xf32>
    %84 = arith.subf %80, %83 : vector<128x128xf32>
    %85 = math.exp %84 : vector<128x128xf32>
    %cst_27 = arith.constant dense<0.000000e+00> : vector<128xf32>
    %86 = vector.multi_reduction <add>, %85, %cst_27 [1] : vector<128x128xf32> to vector<128xf32>
    %87 = vector.shape_cast %86 : vector<128xf32> to vector<128x1xf32>
    %88 = arith.truncf %85 : vector<128x128xf32> to vector<128x128xbf16>
    %cst_28 = arith.constant dense<0.000000e+00> : vector<128x32xf32>
    %89 = tpu.matmul %88, %79, %cst_28 {dimension_numbers = #tpu.dot_dimension_numbers<[1], [0], [0], [1], [0, 0, 1, 1], [], []>} : vector<128x128xbf16>, vector<128x32xbf16>, vector<128x32xf32> -> vector<128x32xf32>
    %90 = tpu.reciprocal %87 {approx = true} : vector<128x1xf32> -> vector<128x1xf32>
    %91 = vector.broadcast %90 : vector<128x1xf32> to vector<128x32xf32>
    %92 = arith.mulf %89, %91 : vector<128x32xf32>
    %93 = arith.truncf %92 : vector<128x32xf32> to vector<128x32xbf16>
    %c0_29 = arith.constant 0 : index
    %c64 = arith.constant 64 : index
    %94 = vector.load %arg8[%c0_29, %c64] : memref<128x128xbf16, #tpu.memory_space<vmem>>, vector<128x32xbf16>
    tpu.vector_store %arg8[%c0_29, %c64], %93 {strides = array<i32>} : memref<128x128xbf16, #tpu.memory_space<vmem>>, vector<128x32xbf16>,
    %95 = vector.extract_strided_slice %29 {offsets = [0, 96], sizes = [128, 32], strides = [1, 1]} : vector<128x128xf32> to vector<128x32xf32>
    %96 = arith.truncf %95 : vector<128x32xf32> to vector<128x32xbf16>
    %97 = vector.extract_strided_slice %30 {offsets = [0, 96], sizes = [128, 32], strides = [1, 1]} : vector<128x128xf32> to vector<128x32xf32>
    %98 = arith.truncf %97 : vector<128x32xf32> to vector<128x32xbf16>
    %99 = vector.extract_strided_slice %31 {offsets = [0, 96], sizes = [128, 32], strides = [1, 1]} : vector<128x128xf32> to vector<128x32xf32>
    %100 = arith.truncf %99 : vector<128x32xf32> to vector<128x32xbf16>
    %cst_30 = arith.constant dense<0.000000e+00> : vector<128x128xf32>
    %101 = tpu.matmul %96, %98, %cst_30 {dimension_numbers = #tpu.dot_dimension_numbers<[1], [1], [0], [0], [0, 0, 1, 0], [], []>} : vector<128x32xbf16>, vector<128x32xbf16>, vector<128x128xf32> -> vector<128x128xf32>
    %cst_31 = arith.constant dense<0xFF800000> : vector<128xf32>
    %102 = vector.multi_reduction <maximumf>, %101, %cst_31 [1] : vector<128x128xf32> to vector<128xf32>
    %103 = vector.shape_cast %102 : vector<128xf32> to vector<128x1xf32>
    %104 = vector.broadcast %103 : vector<128x1xf32> to vector<128x128xf32>
    %105 = arith.subf %101, %104 : vector<128x128xf32>
    %106 = math.exp %105 : vector<128x128xf32>
    %cst_32 = arith.constant dense<0.000000e+00> : vector<128xf32>
    %107 = vector.multi_reduction <add>, %106, %cst_32 [1] : vector<128x128xf32> to vector<128xf32>
    %108 = vector.shape_cast %107 : vector<128xf32> to vector<128x1xf32>
    %109 = arith.truncf %106 : vector<128x128xf32> to vector<128x128xbf16>
    %cst_33 = arith.constant dense<0.000000e+00> : vector<128x32xf32>
    %110 = tpu.matmul %109, %100, %cst_33 {dimension_numbers = #tpu.dot_dimension_numbers<[1], [0], [0], [1], [0, 0, 1, 1], [], []>} : vector<128x128xbf16>, vector<128x32xbf16>, vector<128x32xf32> -> vector<128x32xf32>
    %111 = tpu.reciprocal %108 {approx = true} : vector<128x1xf32> -> vector<128x1xf32>
    %112 = vector.broadcast %111 : vector<128x1xf32> to vector<128x32xf32>
    %113 = arith.mulf %110, %112 : vector<128x32xf32>
    %114 = arith.truncf %113 : vector<128x32xf32> to vector<128x32xbf16>
    %c0_34 = arith.constant 0 : index
    %c96 = arith.constant 96 : index
    %115 = vector.load %arg8[%c0_34, %c96] : memref<128x128xbf16, #tpu.memory_space<vmem>>, vector<128x32xbf16>
    tpu.vector_store %arg8[%c0_34, %c96], %114 {strides = array<i32>} : memref<128x128xbf16, #tpu.memory_space<vmem>>, vector<128x32xbf16>,
    %c0_35 = arith.constant 0 : index
    %c0_36 = arith.constant 0 : index
    %116 = vector.load %arg8[%c0_35, %c0_36] : memref<128x128xbf16, #tpu.memory_space<vmem>>, vector<128x128xbf16>
    %c0_37 = arith.constant 0 : index
    %c0_38 = arith.constant 0 : index
    %117 = vector.load %arg5[%c0_37, %c0_38] : memref<128x128xbf16, #tpu.memory_space<vmem>>, vector<128x128xbf16>
    %cst_39 = arith.constant dense<0.000000e+00> : vector<128x128xf32>
    %118 = tpu.matmul %116, %117, %cst_39 {dimension_numbers = #tpu.dot_dimension_numbers<[1], [0], [0], [1], [0, 0, 1, 1], [], []>} : vector<128x128xbf16>, vector<128x128xbf16>, vector<128x128xf32> -> vector<128x128xf32>
    %c0_40 = arith.constant 0 : index
    %c0_41 = arith.constant 0 : index
    %119 = vector.load %arg6[%c0_40, %c0_41] : memref<1x128xf32, #tpu.memory_space<vmem>>, vector<1x128xf32>
    %120 = vector.broadcast %119 : vector<1x128xf32> to vector<128x128xf32>
    %121 = arith.addf %118, %120 : vector<128x128xf32>
    %122 = arith.addf %1, %121 : vector<128x128xf32>
    %c0_42 = arith.constant 0 : index
    %c0_43 = arith.constant 0 : index
    %c0_44 = arith.constant 0 : index
    %123 = vector.load %arg7[%c0_42, %c0_43, %c0_44] : memref<1x128x128xf32, #tpu.memory_space<vmem>>, vector<1x128x128xf32>
    %124 = vector.shape_cast %123 : vector<1x128x128xf32> to vector<128x128xf32>
    %125 = vector.shape_cast %122 : vector<128x128xf32> to vector<1x128x128xf32>
    tpu.vector_store %arg7[%c0_42, %c0_43, %c0_44], %125 {strides = array<i32>} : memref<1x128x128xf32, #tpu.memory_space<vmem>>, vector<1x128x128xf32>,
    return
  }
  func.func @transform_0(%arg0: i32) -> (i32, i32, i32) {
    %c0_i32 = arith.constant 0 : i32
    %c0_i32_0 = arith.constant 0 : i32
    %c0_i32_1 = arith.constant 0 : i32
    return %arg0, %c0_i32, %c0_i32_0 : i32, i32, i32
  }
  func.func @transform_1(%arg0: i32) -> (i32, i32) {
    %c0_i32 = arith.constant 0 : i32
    %c0_i32_0 = arith.constant 0 : i32
    %c0_i32_1 = arith.constant 0 : i32
    return %c0_i32, %c0_i32_0 : i32, i32
  }
  func.func @transform_2(%arg0: i32) -> (i32, i32) {
    %c0_i32 = arith.constant 0 : i32
    %c0_i32_0 = arith.constant 0 : i32
    %c0_i32_1 = arith.constant 0 : i32
    return %c0_i32, %c0_i32_0 : i32, i32
  }
  func.func @transform_3(%arg0: i32) -> (i32, i32) {
    %c0_i32 = arith.constant 0 : i32
    %c0_i32_0 = arith.constant 0 : i32
    %c0_i32_1 = arith.constant 0 : i32
    return %c0_i32, %c0_i32_0 : i32, i32
  }
  func.func @transform_4(%arg0: i32) -> (i32, i32) {
    %c0_i32 = arith.constant 0 : i32
    %c0_i32_0 = arith.constant 0 : i32
    %c0_i32_1 = arith.constant 0 : i32
    return %c0_i32, %c0_i32_0 : i32, i32
  }
  func.func @transform_5(%arg0: i32) -> (i32, i32) {
    %c0_i32 = arith.constant 0 : i32
    %c0_i32_0 = arith.constant 0 : i32
    %c0_i32_1 = arith.constant 0 : i32
    return %c0_i32, %c0_i32_0 : i32, i32
  }
  func.func @transform_6(%arg0: i32) -> (i32, i32, i32) {
    %c0_i32 = arith.constant 0 : i32
    %c0_i32_0 = arith.constant 0 : i32
    %c0_i32_1 = arith.constant 0 : i32
    return %arg0, %c0_i32, %c0_i32_0 : i32, i32, i32
  }
}

</mosaic_0001>

<llo_original>
// kernel: tpu_custom_call.1
$region0: #{tpu_custom_call.1}
  #allocation0 [shape = 'u32[]', space=smem, size = 0x4, offset = 0x4, fixed_abs, tag = 'smem constant byte address 0x4 - core index']
  #allocation1 [shape = 'u32[144,128]{1,0:T(1,128)}', space=vmem, size = 0x12000, scoped, tag = 'internal scratch']
  #allocation2 [shape = 'bf16[128,128]{1,0:T(8,128)(2,1)}', space=vmem, size = 0x8000, scoped, tag = 'scratch operand']
  %s0 = inlined_call_operand.hbm [shape: f32[2,128,128], index: 0, kind: input, shape index: {}]
  %s1 = inlined_call_operand.vmem [shape: f32[1,128], index: 1, kind: input, shape index: {}]
  %s2 = inlined_call_operand.vmem [shape: f32[1,128], index: 2, kind: input, shape index: {}]
  %s3 = inlined_call_operand.hbm [shape: bf16[128,384], index: 3, kind: input, shape index: {}]
  %s4 = inlined_call_operand.hbm [shape: bf16[128,128], index: 4, kind: input, shape index: {}]
  %s5 = inlined_call_operand.vmem [shape: f32[1,128], index: 5, kind: input, shape index: {}]
  %s6 = inlined_call_operand.hbm [shape: f32[2,128,128], index: 6, kind: output, shape index: {}]
  %s7 = sld [smem:[#allocation0]]
  $region69: #{tpu_custom_call.1} parent=0
    _
  %s9 = ssub.s32 1, %s7
  %s10 = scalar_select 0, %s9, %s7
  $region1: #{tpu_custom_call.1} parent=0
    #allocation3 [shape = 'u8[131072]{0}', space=vmem, size = 0x20000, scoped, tag = 'input window, operand 0']
    #allocation4 [shape = 's32[2]{0}', space=sflag, size = 0x8, scoped, tag = 'scoped memory for tpu_custom_call.1']
    #allocation5 [shape = 's32[2]{0}', space=sflag, size = 0x8, scoped, tag = 'scoped memory for tpu_custom_call.1']
    #allocation6 [shape = 'u8[98304]{0}', space=vmem, size = 0x18000, scoped, tag = 'input window, operand 3, single buffered']
    #allocation7 [shape = 's32[1]{0}', space=sflag, size = 0x4, scoped, tag = 'scoped memory for tpu_custom_call.1']
    #allocation8 [shape = 'u8[32768]{0}', space=vmem, size = 0x8000, scoped, tag = 'input window, operand 4, single buffered']
    #allocation9 [shape = 'u8[131072]{0}', space=vmem, size = 0x20000, scoped, tag = 'output window, operand 0']
    %11 = vsyncpa [#allocation4], 0
    %s12 = scalar_lea.sflag [#allocation4], 1
    %13 = vsyncpa %s12, 0
    %14 = vsyncpa [#allocation7], 0
    %15 = vsyncpa [#allocation5], 0
    %s16 = scalar_lea.sflag [#allocation5], 1
    %17 = vsyncpa %s16, 0
    loop: start=0, step=1, limit=4
    $region2: #{tpu_custom_call.1} parent=1 // loop_pre_header
      _
    $region3: #{tpu_custom_call.1} parent=1 // loop_header
      %s19 = sphi 0, %s23
      %p20 = scmp.ge.s32.totalorder %s19, 4
      %s29 = sphi 0, %s31
      %s32 = sphi 0, %s29
      %s33 = sphi 0, %s32
      %s49 = sphi 0, %s33
      %s53 = sphi 0, %s53
      %s55 = sphi 0, %s53
      %s56 = sphi 0, %s55
      %s70 = sphi 0, %s56
      %s74 = sphi 0, %s74
      %s76 = sphi 0, %s74
      %s77 = sphi 0, %s76
      %s91 = sphi 0, %s77
      %s95 = sphi 0, %s95
      %s97 = sphi 0, %s95
      %s98 = sphi 0, %s97
      %s112 = sphi 0, %s98
      %s116 = sphi 0, %s116
      %s118 = sphi 0, %s116
      %s119 = sphi 0, %s118
      %s133 = sphi 0, %s119
      %s137 = sphi 0, %s137
      %s139 = sphi 0, %s137
      %s140 = sphi 0, %s139
      %s154 = sphi 0, %s140
      %s160 = sphi 0, %s162
      %s163 = sphi 0, %s160
      %s164 = sphi 0, %s163
      %s180 = sphi 0, %s164
    $region4: #{tpu_custom_call.1} parent=1 // loop_header_branch
      %22 = sbr.rel (%p20) target = $region8
    $region5: #{tpu_custom_call.1} parent=1 // loop_body
      %s24 = ssub.s32 %s19, 1
      %s25 = ssub.s32 %s19, 2
      %s26 = sadd.s32 %s19, 1
      %s27 = ssub.s32 %s19, %s26
      %p28 = scmp.eq.s32.totalorder %s27, 0
      %s30 = sadd.s32 %s29, 1
      %s31 = scalar_select %p28, %s29, %s30
      %p34 = pneg %p28
      %p35 = scmp.eq.s32.totalorder %s19, 1
      %p36 = por %p34, %p35
      %p37 = scmp.ne.s32.totalorder %s29, %s32
      %p38 = scmp.eq.s32.totalorder %s19, 0
      %p39 = por %p37, %p38
      %p40 = scmp.ne.s32.totalorder %s29, %s32
      %p41 = scmp.eq.s32.totalorder %s24, 1
      %p42 = por %p40, %p41
      %p43 = scmp.ne.s32.totalorder %s32, %s33
      %p44 = scmp.eq.s32.totalorder %s24, 0
      %p45 = por %p43, %p44
      %p46 = scmp.ne.s32.totalorder %s32, %s33
      %p47 = scmp.eq.s32.totalorder %s25, 1
      %p48 = por %p46, %p47
      %p50 = scmp.ne.s32.totalorder %s33, %s49
      %p51 = scmp.eq.s32.totalorder %s25, 0
      %p52 = por %p50, %p51
      %s54 = sadd.s32 %s53, 1
      %p57 = scmp.eq.s32.totalorder %s19, 1
      %p58 = scmp.ne.s32.totalorder %s53, %s55
      %p59 = scmp.eq.s32.totalorder %s19, 0
      %p60 = por %p58, %p59
      %p61 = scmp.ne.s32.totalorder %s53, %s55
      %p62 = scmp.eq.s32.totalorder %s24, 1
      %p63 = por %p61, %p62
      %p64 = scmp.ne.s32.totalorder %s55, %s56
      %p65 = scmp.eq.s32.totalorder %s24, 0
      %p66 = por %p64, %p65
      %p67 = scmp.ne.s32.totalorder %s55, %s56
      %p68 = scmp.eq.s32.totalorder %s25, 1
      %p69 = por %p67, %p68
      %p71 = scmp.ne.s32.totalorder %s56, %s70
      %p72 = scmp.eq.s32.totalorder %s25, 0
      %p73 = por %p71, %p72
      %s75 = sadd.s32 %s74, 1
      %p78 = scmp.eq.s32.totalorder %s19, 1
      %p79 = scmp.ne.s32.totalorder %s74, %s76
      %p80 = scmp.eq.s32.totalorder %s19, 0
      %p81 = por %p79, %p80
      %p82 = scmp.ne.s32.totalorder %s74, %s76
      %p83 = scmp.eq.s32.totalorder %s24, 1
      %p84 = por %p82, %p83
      %p85 = scmp.ne.s32.totalorder %s76, %s77
      %p86 = scmp.eq.s32.totalorder %s24, 0
      %p87 = por %p85, %p86
      %p88 = scmp.ne.s32.totalorder %s76, %s77
      %p89 = scmp.eq.s32.totalorder %s25, 1
      %p90 = por %p88, %p89
      %p92 = scmp.ne.s32.totalorder %s77, %s91
      %p93 = scmp.eq.s32.totalorder %s25, 0
      %p94 = por %p92, %p93
      %s96 = sadd.s32 %s95, 1
      %p99 = scmp.eq.s32.totalorder %s19, 1
      %p100 = scmp.ne.s32.totalorder %s95, %s97
      %p101 = scmp.eq.s32.totalorder %s19, 0
      %p102 = por %p100, %p101
      %p103 = scmp.ne.s32.totalorder %s95, %s97
      %p104 = scmp.eq.s32.totalorder %s24, 1
      %p105 = por %p103, %p104
      %p106 = scmp.ne.s32.totalorder %s97, %s98
      %p107 = scmp.eq.s32.totalorder %s24, 0
      %p108 = por %p106, %p107
      %p109 = scmp.ne.s32.totalorder %s97, %s98
      %p110 = scmp.eq.s32.totalorder %s25, 1
      %p111 = por %p109, %p110
      %p113 = scmp.ne.s32.totalorder %s98, %s112
      %p114 = scmp.eq.s32.totalorder %s25, 0
      %p115 = por %p113, %p114
      %s117 = sadd.s32 %s116, 1
      %p120 = scmp.eq.s32.totalorder %s19, 1
      %p121 = scmp.ne.s32.totalorder %s116, %s118
      %p122 = scmp.eq.s32.totalorder %s19, 0
      %p123 = por %p121, %p122
      %p124 = scmp.ne.s32.totalorder %s116, %s118
      %p125 = scmp.eq.s32.totalorder %s24, 1
      %p126 = por %p124, %p125
      %p127 = scmp.ne.s32.totalorder %s118, %s119
      %p128 = scmp.eq.s32.totalorder %s24, 0
      %p129 = por %p127, %p128
      %p130 = scmp.ne.s32.totalorder %s118, %s119
      %p131 = scmp.eq.s32.totalorder %s25, 1
      %p132 = por %p130, %p131
      %p134 = scmp.ne.s32.totalorder %s119, %s133
      %p135 = scmp.eq.s32.totalorder %s25, 0
      %p136 = por %p134, %p135
      %s138 = sadd.s32 %s137, 1
      %p141 = scmp.eq.s32.totalorder %s19, 1
      %p142 = scmp.ne.s32.totalorder %s137, %s139
      %p143 = scmp.eq.s32.totalorder %s19, 0
      %p144 = por %p142, %p143
      %p145 = scmp.ne.s32.totalorder %s137, %s139
      %p146 = scmp.eq.s32.totalorder %s24, 1
      %p147 = por %p145, %p146
      %p148 = scmp.ne.s32.totalorder %s139, %s140
      %p149 = scmp.eq.s32.totalorder %s24, 0
      %p150 = por %p148, %p149
      %p151 = scmp.ne.s32.totalorder %s139, %s140
      %p152 = scmp.eq.s32.totalorder %s25, 1
      %p153 = por %p151, %p152
      %p155 = scmp.ne.s32.totalorder %s140, %s154
      %p156 = scmp.eq.s32.totalorder %s25, 0
      %p157 = por %p155, %p156
      %s158 = ssub.s32 %s19, %s26
      %p159 = scmp.eq.s32.totalorder %s158, 0
      %s161 = sadd.s32 %s160, 1
      %s162 = scalar_select %p159, %s160, %s161
      %p165 = pneg %p159
      %p166 = scmp.eq.s32.totalorder %s19, 1
      %p167 = por %p165, %p166
      %p168 = scmp.ne.s32.totalorder %s160, %s163
      %p169 = scmp.eq.s32.totalorder %s19, 0
      %p170 = por %p168, %p169
      %p171 = scmp.ne.s32.totalorder %s160, %s163
      %p172 = scmp.eq.s32.totalorder %s24, 1
      %p173 = por %p171, %p172
      %p174 = scmp.ne.s32.totalorder %s163, %s164
      %p175 = scmp.eq.s32.totalorder %s24, 0
      %p176 = por %p174, %p175
      %p177 = scmp.ne.s32.totalorder %s163, %s164
      %p178 = scmp.eq.s32.totalorder %s25, 1
      %p179 = por %p177, %p178
      %p181 = scmp.ne.s32.totalorder %s164, %s180
      %p182 = scmp.eq.s32.totalorder %s25, 0
      %p183 = por %p181, %p182
      %p184 = scmp.le.s32.totalorder 1, %s19
      %p185 = scmp.lt.s32.totalorder %s19, 3
      %p186 = pnand %p184, %p185
      %p187 = pneg %p186
      // Predicated region
      $region9: #{tpu_custom_call.1} parent=5 // pred_check
        _
      $region10: #{tpu_custom_call.1} parent=5 // pred_check_branch
        %189 = sbr.rel (%p186) target = $region12
      $region11: #{tpu_custom_call.1} parent=5 // pred_region
        %s190 = ssub.s32 %s19, 1
        // Predicated region
        $region13: #{tpu_custom_call.1} parent=11 // pred_check
          %p191 = pneg %p66
        $region14: #{tpu_custom_call.1} parent=11 // pred_check_branch
          %193 = sbr.rel (%p191) target = $region16
        $region15: #{tpu_custom_call.1} parent=11 // pred_region
          _
        $region16: #{tpu_custom_call.1} parent=11 // pred_fallthru
          _
        // Predicated region
        $region17: #{tpu_custom_call.1} parent=11 // pred_check
          %p194 = pneg %p87
        $region18: #{tpu_custom_call.1} parent=11 // pred_check_branch
          %196 = sbr.rel (%p194) target = $region20
        $region19: #{tpu_custom_call.1} parent=11 // pred_region
          _
        $region20: #{tpu_custom_call.1} parent=11 // pred_fallthru
          _
        // Predicated region
        $region21: #{tpu_custom_call.1} parent=11 // pred_check
          %p197 = pneg %p108
        $region22: #{tpu_custom_call.1} parent=11 // pred_check_branch
          %199 = sbr.rel (%p197) target = $region24
        $region23: #{tpu_custom_call.1} parent=11 // pred_region
          %s201 = ssub.s32 3072, 3072
          %202 = vsyncadd [#allocation7], %s201
          %s203 = sshll.u32 [#allocation6], 4
          %s204 = int_to_ptr.vmem [resolvable:$true] %s203
          %209 = dma.hbm_to_vmem [thread:$0]  %s3, 3072, %s204, [#allocation7], 192, 192, 12
        $region24: #{tpu_custom_call.1} parent=11 // pred_fallthru
          _
        // Predicated region
        $region25: #{tpu_custom_call.1} parent=11 // pred_check
          %p210 = pneg %p129
        $region26: #{tpu_custom_call.1} parent=11 // pred_check_branch
          %212 = sbr.rel (%p210) target = $region28
        $region27: #{tpu_custom_call.1} parent=11 // pred_region
          %s214 = ssub.s32 1024, 1024
          %215 = vsyncadd [#allocation7], %s214
          %s216 = sshll.u32 [#allocation8], 4
          %s217 = int_to_ptr.vmem [resolvable:$true] %s216
          %222 = dma.hbm_to_vmem [thread:$0]  %s4, 1024, %s217, [#allocation7], 64, 64, 4
        $region28: #{tpu_custom_call.1} parent=11 // pred_fallthru
          _
        // Predicated region
        $region29: #{tpu_custom_call.1} parent=11 // pred_check
          %p223 = pneg %p150
        $region30: #{tpu_custom_call.1} parent=11 // pred_check_branch
          %225 = sbr.rel (%p223) target = $region32
        $region31: #{tpu_custom_call.1} parent=11 // pred_region
          _
        $region32: #{tpu_custom_call.1} parent=11 // pred_fallthru
          _
      $region12: #{tpu_custom_call.1} parent=5 // pred_fallthru
        _
      %p226 = scmp.lt.s32.totalorder %s19, 2
      // Predicated region
      $region33: #{tpu_custom_call.1} parent=5 // pred_check
        %p227 = pneg %p226
      $region34: #{tpu_custom_call.1} parent=5 // pred_check_branch
        %229 = sbr.rel (%p227) target = $region36
      $region35: #{tpu_custom_call.1} parent=5 // pred_region
        // Predicated region
        $region37: #{tpu_custom_call.1} parent=35 // pred_check
          %p230 = pneg %p39
        $region38: #{tpu_custom_call.1} parent=35 // pred_check_branch
          %232 = sbr.rel (%p230) target = $region40
        $region39: #{tpu_custom_call.1} parent=35 // pred_region
          %s233 = sand.u32 %s29, 1
          %s234 = scalar_lea.sflag [#allocation4], %s233
          %s235 = sand.u32 %s29, 1
          %s236 = smul.addr %s235, 128
          %s237 = scalar_lea.vmem [#allocation3], %s236
          %s239 = ssub.s32 2048, 2048
          %240 = vsyncadd %s234, %s239
          %s241 = smul.addr %s19, 16
          %s242 = smul.addr %s241, 128
          %s243 = scalar_lea.hbm %s0, %s242
          %s244 = sshll.u32 %s237, 4
          %s245 = int_to_ptr.vmem [resolvable:$true] %s244
          %250 = dma.hbm_to_vmem [thread:$0]  %s243, 2048, %s245, %s234, 128, 128, 8
        $region40: #{tpu_custom_call.1} parent=35 // pred_fallthru
          _
      $region36: #{tpu_custom_call.1} parent=5 // pred_fallthru
        _
      %p251 = scmp.le.s32.totalorder 1, %s19
      %p252 = scmp.lt.s32.totalorder %s19, 3
      %p253 = pnand %p251, %p252
      %p254 = pneg %p253
      // Predicated region
      $region41: #{tpu_custom_call.1} parent=5 // pred_check
        _
      $region42: #{tpu_custom_call.1} parent=5 // pred_check_branch
        %256 = sbr.rel (%p253) target = $region44
      $region43: #{tpu_custom_call.1} parent=5 // pred_region
        %s257 = ssub.s32 %s19, 1
        %s258 = sand.u32 %s32, 1
        %s259 = scalar_lea.sflag [#allocation4], %s258
        %s260 = sand.u32 %s32, 1
        %s261 = smul.addr %s260, 128
        %s262 = scalar_lea.vmem [#allocation3], %s261
        // Predicated region
        $region45: #{tpu_custom_call.1} parent=43 // pred_check
          %p263 = pneg %p45
        $region46: #{tpu_custom_call.1} parent=43 // pred_check_branch
          %265 = sbr.rel (%p263) target = $region48
        $region47: #{tpu_custom_call.1} parent=43 // pred_region
          %266 = dma.done %s259, 2048
        $region48: #{tpu_custom_call.1} parent=43 // pred_fallthru
          _
        // Predicated region
        $region49: #{tpu_custom_call.1} parent=43 // pred_check
          %p267 = pneg %p108
        $region50: #{tpu_custom_call.1} parent=43 // pred_check_branch
          %269 = sbr.rel (%p267) target = $region52
        $region51: #{tpu_custom_call.1} parent=43 // pred_region
          %270 = dma.done [#allocation7], 3072
        $region52: #{tpu_custom_call.1} parent=43 // pred_fallthru
          _
        // Predicated region
        $region53: #{tpu_custom_call.1} parent=43 // pred_check
          %p271 = pneg %p129
        $region54: #{tpu_custom_call.1} parent=43 // pred_check_branch
          %273 = sbr.rel (%p271) target = $region56
        $region55: #{tpu_custom_call.1} parent=43 // pred_region
          %274 = dma.done [#allocation7], 1024
        $region56: #{tpu_custom_call.1} parent=43 // pred_fallthru
          _
        %s275 = sand.u32 %s32, 1
        %s276 = scalar_lea.sflag [#allocation4], %s275
        %s277 = sand.u32 %s32, 1
        %s278 = smul.addr %s277, 128
        %s279 = scalar_lea.vmem [#allocation3], %s278
        %p280 = pneg %p45
        %p281 = pneg %p42
        %p282 = pneg %p66
        %p283 = pneg %p63
        %p284 = pneg %p87
        %p285 = pneg %p84
        %p286 = pneg %p108
        %p287 = pneg %p105
        %p288 = pneg %p129
        %p289 = pneg %p126
        %p290 = pneg %p150
        %p291 = pneg %p147
        %p292 = pneg %p176
        %p293 = pneg %p173
        %s294 = sand.u32 %s163, 1
        %s295 = scalar_lea.sflag [#allocation5], %s294
        %s296 = sand.u32 %s163, 1
        %s297 = smul.addr %s296, 128
        %s298 = scalar_lea.vmem [#allocation9], %s297
        %v300 = vld [vmem:[%s262] sm:$0xff]
        %v301 = vld [vmem:[%s262 + $0x8] sm:$0xff]
        %v302 = vld [vmem:[%s262 + $0x10] sm:$0xff]
        %v303 = vld [vmem:[%s262 + $0x18] sm:$0xff]
        %v304 = vld [vmem:[%s262 + $0x20] sm:$0xff]
        %v305 = vld [vmem:[%s262 + $0x28] sm:$0xff]
        %v306 = vld [vmem:[%s262 + $0x30] sm:$0xff]
        %v307 = vld [vmem:[%s262 + $0x38] sm:$0xff]
        %v308 = vld [vmem:[%s262 + $0x40] sm:$0xff]
        %v309 = vld [vmem:[%s262 + $0x48] sm:$0xff]
        %v310 = vld [vmem:[%s262 + $0x50] sm:$0xff]
        %v311 = vld [vmem:[%s262 + $0x58] sm:$0xff]
        %v312 = vld [vmem:[%s262 + $0x60] sm:$0xff]
        %v313 = vld [vmem:[%s262 + $0x68] sm:$0xff]
        %v314 = vld [vmem:[%s262 + $0x70] sm:$0xff]
        %v315 = vld [vmem:[%s262 + $0x78] sm:$0xff]
        %v316 = vld [vmem:[%s1] sm:$0x1]
        %v317 = vld [vmem:[%s2] sm:$0x1]
        %318 = vadd.xlane.f32.xlu0 %v300
        %v319 = vpop.xlane.xlu0 %318
        %320 = vadd.xlane.f32.xlu0 %v301
        %v321 = vpop.xlane.xlu0 %320
        %322 = vadd.xlane.f32.xlu0 %v302
        %v323 = vpop.xlane.xlu0 %322
        %324 = vadd.xlane.f32.xlu0 %v303
        %v325 = vpop.xlane.xlu0 %324
        %326 = vadd.xlane.f32.xlu0 %v304
        %v327 = vpop.xlane.xlu0 %326
        %328 = vadd.xlane.f32.xlu0 %v305
        %v329 = vpop.xlane.xlu0 %328
        %330 = vadd.xlane.f32.xlu0 %v306
        %v331 = vpop.xlane.xlu0 %330
        %332 = vadd.xlane.f32.xlu0 %v307
        %v333 = vpop.xlane.xlu0 %332
        %334 = vadd.xlane.f32.xlu0 %v308
        %v335 = vpop.xlane.xlu0 %334
        %336 = vadd.xlane.f32.xlu0 %v309
        %v337 = vpop.xlane.xlu0 %336
        %338 = vadd.xlane.f32.xlu0 %v310
        %v339 = vpop.xlane.xlu0 %338
        %340 = vadd.xlane.f32.xlu0 %v311
        %v341 = vpop.xlane.xlu0 %340
        %342 = vadd.xlane.f32.xlu0 %v312
        %v343 = vpop.xlane.xlu0 %342
        %344 = vadd.xlane.f32.xlu0 %v313
        %v345 = vpop.xlane.xlu0 %344
        %346 = vadd.xlane.f32.xlu0 %v314
        %v347 = vpop.xlane.xlu0 %346
        %348 = vadd.xlane.f32.xlu0 %v315
        %v349 = vpop.xlane.xlu0 %348
        %v350 = vrcp.pop 128.0
        %v351 = vmul.f32 %v319, %v350
        %v352 = vmul.f32 %v321, %v350
        %v353 = vmul.f32 %v323, %v350
        %v354 = vmul.f32 %v325, %v350
        %v355 = vmul.f32 %v327, %v350
        %v356 = vmul.f32 %v329, %v350
        %v357 = vmul.f32 %v331, %v350
        %v358 = vmul.f32 %v333, %v350
        %v359 = vmul.f32 %v335, %v350
        %v360 = vmul.f32 %v337, %v350
        %v361 = vmul.f32 %v339, %v350
        %v362 = vmul.f32 %v341, %v350
        %v363 = vmul.f32 %v343, %v350
        %v364 = vmul.f32 %v345, %v350
        %v365 = vmul.f32 %v347, %v350
        %v366 = vmul.f32 %v349, %v350
        %v367 = vsub.f32 %v300, %v351
        %v368 = vsub.f32 %v301, %v352
        %v369 = vsub.f32 %v302, %v353
        %v370 = vsub.f32 %v303, %v354
        %v371 = vsub.f32 %v304, %v355
        %v372 = vsub.f32 %v305, %v356
        %v373 = vsub.f32 %v306, %v357
        %v374 = vsub.f32 %v307, %v358
        %v375 = vsub.f32 %v308, %v359
        %v376 = vsub.f32 %v309, %v360
        %v377 = vsub.f32 %v310, %v361
        %v378 = vsub.f32 %v311, %v362
        %v379 = vsub.f32 %v312, %v363
        %v380 = vsub.f32 %v313, %v364
        %v381 = vsub.f32 %v314, %v365
        %v382 = vsub.f32 %v315, %v366
        %v383 = vmul.f32 %v367, %v367
        %v384 = vmul.f32 %v368, %v368
        %v385 = vmul.f32 %v369, %v369
        %v386 = vmul.f32 %v370, %v370
        %v387 = vmul.f32 %v371, %v371
        %v388 = vmul.f32 %v372, %v372
        %v389 = vmul.f32 %v373, %v373
        %v390 = vmul.f32 %v374, %v374
        %v391 = vmul.f32 %v375, %v375
        %v392 = vmul.f32 %v376, %v376
        %v393 = vmul.f32 %v377, %v377
        %v394 = vmul.f32 %v378, %v378
        %v395 = vmul.f32 %v379, %v379
        %v396 = vmul.f32 %v380, %v380
        %v397 = vmul.f32 %v381, %v381
        %v398 = vmul.f32 %v382, %v382
        %399 = vadd.xlane.f32.xlu0 %v383
        %v400 = vpop.xlane.xlu0 %399
        %401 = vadd.xlane.f32.xlu0 %v384
        %v402 = vpop.xlane.xlu0 %401
        %403 = vadd.xlane.f32.xlu0 %v385
        %v404 = vpop.xlane.xlu0 %403
        %405 = vadd.xlane.f32.xlu0 %v386
        %v406 = vpop.xlane.xlu0 %405
        %407 = vadd.xlane.f32.xlu0 %v387
        %v408 = vpop.xlane.xlu0 %407
        %409 = vadd.xlane.f32.xlu0 %v388
        %v410 = vpop.xlane.xlu0 %409
        %411 = vadd.xlane.f32.xlu0 %v389
        %v412 = vpop.xlane.xlu0 %411
        %413 = vadd.xlane.f32.xlu0 %v390
        %v414 = vpop.xlane.xlu0 %413
        %415 = vadd.xlane.f32.xlu0 %v391
        %v416 = vpop.xlane.xlu0 %415
        %417 = vadd.xlane.f32.xlu0 %v392
        %v418 = vpop.xlane.xlu0 %417
        %419 = vadd.xlane.f32.xlu0 %v393
        %v420 = vpop.xlane.xlu0 %419
        %421 = vadd.xlane.f32.xlu0 %v394
        %v422 = vpop.xlane.xlu0 %421
        %423 = vadd.xlane.f32.xlu0 %v395
        %v424 = vpop.xlane.xlu0 %423
        %425 = vadd.xlane.f32.xlu0 %v396
        %v426 = vpop.xlane.xlu0 %425
        %427 = vadd.xlane.f32.xlu0 %v397
        %v428 = vpop.xlane.xlu0 %427
        %429 = vadd.xlane.f32.xlu0 %v398
        %v430 = vpop.xlane.xlu0 %429
        %v431 = vmul.f32 %v400, %v350
        %v432 = vmul.f32 %v402, %v350
        %v433 = vmul.f32 %v404, %v350
        %v434 = vmul.f32 %v406, %v350
        %v435 = vmul.f32 %v408, %v350
        %v436 = vmul.f32 %v410, %v350
        %v437 = vmul.f32 %v412, %v350
        %v438 = vmul.f32 %v414, %v350
        %v439 = vmul.f32 %v416, %v350
        %v440 = vmul.f32 %v418, %v350
        %v441 = vmul.f32 %v420, %v350
        %v442 = vmul.f32 %v422, %v350
        %v443 = vmul.f32 %v424, %v350
        %v444 = vmul.f32 %v426, %v350
        %v445 = vmul.f32 %v428, %v350
        %v446 = vmul.f32 %v430, %v350
        %v447 = vadd.f32 %v431, 1e-05
        %v448 = vadd.f32 %v432, 1e-05
        %v449 = vadd.f32 %v433, 1e-05
        %v450 = vadd.f32 %v434, 1e-05
        %v451 = vadd.f32 %v435, 1e-05
        %v452 = vadd.f32 %v436, 1e-05
        %v453 = vadd.f32 %v437, 1e-05
        %v454 = vadd.f32 %v438, 1e-05
        %v455 = vadd.f32 %v439, 1e-05
        %v456 = vadd.f32 %v440, 1e-05
        %v457 = vadd.f32 %v441, 1e-05
        %v458 = vadd.f32 %v442, 1e-05
        %v459 = vadd.f32 %v443, 1e-05
        %v460 = vadd.f32 %v444, 1e-05
        %v461 = vadd.f32 %v445, 1e-05
        %v462 = vadd.f32 %v446, 1e-05
        %v463 = vrsqrt.pop %v447
        %v464 = vrsqrt.pop %v448
        %v465 = vrsqrt.pop %v449
        %v466 = vrsqrt.pop %v450
        %v467 = vrsqrt.pop %v451
        %v468 = vrsqrt.pop %v452
        %v469 = vrsqrt.pop %v453
        %v470 = vrsqrt.pop %v454
        %v471 = vrsqrt.pop %v455
        %v472 = vrsqrt.pop %v456
        %v473 = vrsqrt.pop %v457
        %v474 = vrsqrt.pop %v458
        %v475 = vrsqrt.pop %v459
        %v476 = vrsqrt.pop %v460
        %v477 = vrsqrt.pop %v461
        %v478 = vrsqrt.pop %v462
        %v479 = vmul.f32 %v367, %v463
        %v480 = vmul.f32 %v368, %v464
        %v481 = vmul.f32 %v369, %v465
        %v482 = vmul.f32 %v370, %v466
        %v483 = vmul.f32 %v371, %v467
        %v484 = vmul.f32 %v372, %v468
        %v485 = vmul.f32 %v373, %v469
        %v486 = vmul.f32 %v374, %v470
        %v487 = vmul.f32 %v375, %v471
        %v488 = vmul.f32 %v376, %v472
        %v489 = vmul.f32 %v377, %v473
        %v490 = vmul.f32 %v378, %v474
        %v491 = vmul.f32 %v379, %v475
        %v492 = vmul.f32 %v380, %v476
        %v493 = vmul.f32 %v381, %v477
        %v494 = vmul.f32 %v382, %v478
        %v496 = vlaneseq
        %v497 = vshrl.u32 %v496, 7
        %v498 = vsub.s32 0, %v497
        %v499 = vrot.slane %v316, %v498
        %v501 = vmul.f32 %v479, %v499
        %v502 = vmul.f32 %v480, %v499
        %v503 = vmul.f32 %v481, %v499
        %v504 = vmul.f32 %v482, %v499
        %v505 = vmul.f32 %v483, %v499
        %v506 = vmul.f32 %v484, %v499
        %v507 = vmul.f32 %v485, %v499
        %v508 = vmul.f32 %v486, %v499
        %v509 = vmul.f32 %v487, %v499
        %v510 = vmul.f32 %v488, %v499
        %v511 = vmul.f32 %v489, %v499
        %v512 = vmul.f32 %v490, %v499
        %v513 = vmul.f32 %v491, %v499
        %v514 = vmul.f32 %v492, %v499
        %v515 = vmul.f32 %v493, %v499
        %v516 = vmul.f32 %v494, %v499
        %v518 = vlaneseq
        %v519 = vshrl.u32 %v518, 7
        %v520 = vsub.s32 0, %v519
        %v521 = vrot.slane %v317, %v520
        %v523 = vadd.f32 %v501, %v521
        %v524 = vadd.f32 %v502, %v521
        %v525 = vadd.f32 %v503, %v521
        %v526 = vadd.f32 %v504, %v521
        %v527 = vadd.f32 %v505, %v521
        %v528 = vadd.f32 %v506, %v521
        %v529 = vadd.f32 %v507, %v521
        %v530 = vadd.f32 %v508, %v521
        %v531 = vadd.f32 %v509, %v521
        %v532 = vadd.f32 %v510, %v521
        %v533 = vadd.f32 %v511, %v521
        %v534 = vadd.f32 %v512, %v521
        %v535 = vadd.f32 %v513, %v521
        %v536 = vadd.f32 %v514, %v521
        %v537 = vadd.f32 %v515, %v521
        %v538 = vadd.f32 %v516, %v521
        %v539 = vpack.c.bf16 %v524, %v523
        %v540 = vpack.c.bf16 %v526, %v525
        %v541 = vpack.c.bf16 %v528, %v527
        %v542 = vpack.c.bf16 %v530, %v529
        %v543 = vpack.c.bf16 %v532, %v531
        %v544 = vpack.c.bf16 %v534, %v533
        %v545 = vpack.c.bf16 %v536, %v535
        %v546 = vpack.c.bf16 %v538, %v537
        %v547 = vld [vmem:[#allocation6] sm:$0xff]
        %v548 = vld [vmem:[#allocation6 + $0x8] sm:$0xf]
        %v549 = vld [vmem:[#allocation6 + $0xc] sm:$0xff]
        %v550 = vld [vmem:[#allocation6 + $0x14] sm:$0xf]
        %v551 = vld [vmem:[#allocation6 + $0x18] sm:$0xff]
        %v552 = vld [vmem:[#allocation6 + $0x20] sm:$0xf]
        %v553 = vld [vmem:[#allocation6 + $0x24] sm:$0xff]
        %v554 = vld [vmem:[#allocation6 + $0x2c] sm:$0xf]
        %v555 = vld [vmem:[#allocation6 + $0x30] sm:$0xff]
        %v556 = vld [vmem:[#allocation6 + $0x38] sm:$0xf]
        %v557 = vld [vmem:[#allocation6 + $0x3c] sm:$0xff]
        %v558 = vld [vmem:[#allocation6 + $0x44] sm:$0xf]
        %v559 = vld [vmem:[#allocation6 + $0x48] sm:$0xff]
        %v560 = vld [vmem:[#allocation6 + $0x50] sm:$0xf]
        %v561 = vld [vmem:[#allocation6 + $0x54] sm:$0xff]
        %v562 = vld [vmem:[#allocation6 + $0x5c] sm:$0xf]
        %v563 = vld [vmem:[#allocation6 + $0x60] sm:$0xff]
        %v564 = vld [vmem:[#allocation6 + $0x68] sm:$0xf]
        %v565 = vld [vmem:[#allocation6 + $0x6c] sm:$0xff]
        %v566 = vld [vmem:[#allocation6 + $0x74] sm:$0xf]
        %v567 = vld [vmem:[#allocation6 + $0x78] sm:$0xff]
        %v568 = vld [vmem:[#allocation6 + $0x80] sm:$0xf]
        %v569 = vld [vmem:[#allocation6 + $0x84] sm:$0xff]
        %v570 = vld [vmem:[#allocation6 + $0x8c] sm:$0xf]
        %v571 = vld [vmem:[#allocation6 + $0x90] sm:$0xff]
        %v572 = vld [vmem:[#allocation6 + $0x98] sm:$0xf]
        %v573 = vld [vmem:[#allocation6 + $0x9c] sm:$0xff]
        %v574 = vld [vmem:[#allocation6 + $0xa4] sm:$0xf]
        %v575 = vld [vmem:[#allocation6 + $0xa8] sm:$0xff]
        %v576 = vld [vmem:[#allocation6 + $0xb0] sm:$0xf]
        %v577 = vld [vmem:[#allocation6 + $0xb4] sm:$0xff]
        %v578 = vld [vmem:[#allocation6 + $0xbc] sm:$0xf]
        %v611 = vunpack.c.l.b16 %v547
        %v612 = vunpack.c.h.b16 %v547
        %v613 = vunpack.c.l.b16 %v548
        %v614 = vunpack.c.l.b16 %v549
        %v615 = vunpack.c.h.b16 %v549
        %v616 = vunpack.c.l.b16 %v550
        %v617 = vunpack.c.l.b16 %v551
        %v618 = vunpack.c.h.b16 %v551
        %v619 = vunpack.c.l.b16 %v552
        %v620 = vunpack.c.l.b16 %v553
        %v621 = vunpack.c.h.b16 %v553
        %v622 = vunpack.c.l.b16 %v554
        %v623 = vunpack.c.l.b16 %v555
        %v624 = vunpack.c.h.b16 %v555
        %v625 = vunpack.c.l.b16 %v556
        %v626 = vunpack.c.l.b16 %v557
        %v627 = vunpack.c.h.b16 %v557
        %v628 = vunpack.c.l.b16 %v558
        %v629 = vunpack.c.l.b16 %v559
        %v630 = vunpack.c.h.b16 %v559
        %v631 = vunpack.c.l.b16 %v560
        %v632 = vunpack.c.l.b16 %v561
        %v633 = vunpack.c.h.b16 %v561
        %v634 = vunpack.c.l.b16 %v562
        %v635 = vunpack.c.l.b16 %v563
        %v636 = vunpack.c.h.b16 %v563
        %v637 = vunpack.c.l.b16 %v564
        %v638 = vunpack.c.l.b16 %v565
        %v639 = vunpack.c.h.b16 %v565
        %v640 = vunpack.c.l.b16 %v566
        %v641 = vunpack.c.l.b16 %v567
        %v642 = vunpack.c.h.b16 %v567
        %v643 = vunpack.c.l.b16 %v568
        %v644 = vunpack.c.l.b16 %v569
        %v645 = vunpack.c.h.b16 %v569
        %v646 = vunpack.c.l.b16 %v570
        %v647 = vunpack.c.l.b16 %v571
        %v648 = vunpack.c.h.b16 %v571
        %v649 = vunpack.c.l.b16 %v572
        %v650 = vunpack.c.l.b16 %v573
        %v651 = vunpack.c.h.b16 %v573
        %v652 = vunpack.c.l.b16 %v574
        %v653 = vunpack.c.l.b16 %v575
        %v654 = vunpack.c.h.b16 %v575
        %v655 = vunpack.c.l.b16 %v576
        %v656 = vunpack.c.l.b16 %v577
        %v657 = vunpack.c.h.b16 %v577
        %v658 = vunpack.c.l.b16 %v578
        %v659 = vpack.c.b16 %v614, %v611
        %v660 = vpack.c.b16 %v615, %v612
        %v661 = vpack.c.b16 %v616, %v613
        %v662 = vpack.c.b16 %v620, %v617
        %v663 = vpack.c.b16 %v621, %v618
        %v664 = vpack.c.b16 %v622, %v619
        %v665 = vpack.c.b16 %v626, %v623
        %v666 = vpack.c.b16 %v627, %v624
        %v667 = vpack.c.b16 %v628, %v625
        %v668 = vpack.c.b16 %v632, %v629
        %v669 = vpack.c.b16 %v633, %v630
        %v670 = vpack.c.b16 %v634, %v631
        %v671 = vpack.c.b16 %v638, %v635
        %v672 = vpack.c.b16 %v639, %v636
        %v673 = vpack.c.b16 %v640, %v637
        %v674 = vpack.c.b16 %v644, %v641
        %v675 = vpack.c.b16 %v645, %v642
        %v676 = vpack.c.b16 %v646, %v643
        %v677 = vpack.c.b16 %v650, %v647
        %v678 = vpack.c.b16 %v651, %v648
        %v679 = vpack.c.b16 %v652, %v649
        %v680 = vpack.c.b16 %v656, %v653
        %v681 = vpack.c.b16 %v657, %v654
        %v682 = vpack.c.b16 %v658, %v655
        %707 = vmatprep.subr.bf16.mxu0 %v681
        %708 = vmatpush1.bf16.msra.mxu0 %v680
        %709 = vmatprep.subr.bf16.mxu0 %v678
        %710 = vmatpush1.bf16.msra.mxu0 %v677
        %711 = vmatprep.subr.bf16.mxu0 %v675
        %712 = vmatpush1.bf16.msra.mxu0 %v674
        %713 = vmatprep.subr.bf16.mxu0 %v672
        %714 = vmatpush1.bf16.msra.mxu0 %v671
        %715 = vmatprep.subr.bf16.mxu0 %v669
        %716 = vmatpush1.bf16.msra.mxu0 %v668
        %717 = vmatprep.subr.bf16.mxu0 %v666
        %718 = vmatpush1.bf16.msra.mxu0 %v665
        %719 = vmatprep.subr.bf16.mxu0 %v663
        %720 = vmatpush1.bf16.msra.mxu0 %v662
        %721 = vmatprep.subr.bf16.mxu0 %v660
        %722 = vmatpush1.bf16.msra.mxu0 %v659
        %723 = vmatprep.subr.bf16.mxu0 0
        %724 = vmatpush2.bf16.msra.mxu0 0
        %725 = vmatprep.subr.bf16.mxu0 0
        %726 = vmatpush2.bf16.msra.mxu0 0
        %727 = vmatprep.subr.bf16.mxu0 0
        %728 = vmatpush2.bf16.msra.mxu0 0
        %729 = vmatprep.subr.bf16.mxu0 0
        %730 = vmatpush2.bf16.msra.mxu0 0
        %731 = vmatprep.subr.bf16.mxu0 0
        %732 = vmatpush2.bf16.msra.mxu0 0
        %733 = vmatprep.subr.bf16.mxu0 0
        %734 = vmatpush2.bf16.msra.mxu0 0
        %735 = vmatprep.subr.bf16.mxu0 0
        %736 = vmatpush2.bf16.msra.mxu0 0
        %737 = vmatprep.subr.bf16.mxu0 0
        %738 = vmatpush2.bf16.msra.mxu0 0
        %739 = vmatprep.mubr.bf16.mxu0 0
        %740 = vmatmul.mubr.bf16.gmra.mxu0 %v539
        %v741 = vpop.f32.mrf.mxu0
        %v742 = vadd.f32 0.0, %v741
        %v743 = vpop.f32.mrf.mxu0
        %v744 = vadd.f32 0.0, %v743
        %v745 = vpop.f32.mrf.mxu0
        %v746 = vadd.f32 0.0, %v745
        %v747 = vpop.f32.mrf.mxu0
        %v748 = vadd.f32 0.0, %v747
        %749 = vmatprep.mubr.bf16.mxu0 0
        %750 = vmatmul.mubr.bf16.gmra.mxu0 %v540
        %v751 = vpop.f32.mrf.mxu0
        %v752 = vadd.f32 0.0, %v751
        %v753 = vpop.f32.mrf.mxu0
        %v754 = vadd.f32 0.0, %v753
        %v755 = vpop.f32.mrf.mxu0
        %v756 = vadd.f32 0.0, %v755
        %v757 = vpop.f32.mrf.mxu0
        %v758 = vadd.f32 0.0, %v757
        %759 = vmatprep.mubr.bf16.mxu0 0
        %760 = vmatmul.mubr.bf16.gmra.mxu0 %v541
        %v761 = vpop.f32.mrf.mxu0
        %v762 = vadd.f32 0.0, %v761
        %v763 = vpop.f32.mrf.mxu0
        %v764 = vadd.f32 0.0, %v763
        %v765 = vpop.f32.mrf.mxu0
        %v766 = vadd.f32 0.0, %v765
        %v767 = vpop.f32.mrf.mxu0
        %v768 = vadd.f32 0.0, %v767
        %769 = vmatprep.mubr.bf16.mxu0 0
        %770 = vmatmul.mubr.bf16.gmra.mxu0 %v542
        %v771 = vpop.f32.mrf.mxu0
        %v772 = vadd.f32 0.0, %v771
        %v773 = vpop.f32.mrf.mxu0
        %v774 = vadd.f32 0.0, %v773
        %v775 = vpop.f32.mrf.mxu0
        %v776 = vadd.f32 0.0, %v775
        %v777 = vpop.f32.mrf.mxu0
        %v778 = vadd.f32 0.0, %v777
        %779 = vmatprep.mubr.bf16.mxu0 0
        %780 = vmatmul.mubr.bf16.gmra.mxu0 %v543
        %v781 = vpop.f32.mrf.mxu0
        %v782 = vadd.f32 0.0, %v781
        %v783 = vpop.f32.mrf.mxu0
        %v784 = vadd.f32 0.0, %v783
        %v785 = vpop.f32.mrf.mxu0
        %v786 = vadd.f32 0.0, %v785
        %v787 = vpop.f32.mrf.mxu0
        %v788 = vadd.f32 0.0, %v787
        %789 = vmatprep.mubr.bf16.mxu0 0
        %790 = vmatmul.mubr.bf16.gmra.mxu0 %v544
        %v791 = vpop.f32.mrf.mxu0
        %v792 = vadd.f32 0.0, %v791
        %v793 = vpop.f32.mrf.mxu0
        %v794 = vadd.f32 0.0, %v793
        %v795 = vpop.f32.mrf.mxu0
        %v796 = vadd.f32 0.0, %v795
        %v797 = vpop.f32.mrf.mxu0
        %v798 = vadd.f32 0.0, %v797
        %799 = vmatprep.mubr.bf16.mxu0 0
        %800 = vmatmul.mubr.bf16.gmra.mxu0 %v545
        %v801 = vpop.f32.mrf.mxu0
        %v802 = vadd.f32 0.0, %v801
        %v803 = vpop.f32.mrf.mxu0
        %v804 = vadd.f32 0.0, %v803
        %v805 = vpop.f32.mrf.mxu0
        %v806 = vadd.f32 0.0, %v805
        %v807 = vpop.f32.mrf.mxu0
        %v808 = vadd.f32 0.0, %v807
        %809 = vmatprep.mubr.bf16.mxu0 0
        %810 = vmatmul.mubr.bf16.gmra.mxu0 %v546
        %v811 = vpop.f32.mrf.mxu0
        %v812 = vadd.f32 0.0, %v811
        %v813 = vpop.f32.mrf.mxu0
        %v814 = vadd.f32 0.0, %v813
        %v815 = vpop.f32.mrf.mxu0
        %v816 = vadd.f32 0.0, %v815
        %v817 = vpop.f32.mrf.mxu0
        %v818 = vadd.f32 0.0, %v817
        %819 = vdwg.mxu0
        %820 = vmatprep.subr.bf16.mxu0 0
        %821 = vmatpush1.bf16.msra.mxu0 %v682
        %822 = vmatprep.subr.bf16.mxu0 0
        %823 = vmatpush1.bf16.msra.mxu0 %v679
        %824 = vmatprep.subr.bf16.mxu0 0
        %825 = vmatpush1.bf16.msra.mxu0 %v676
        %826 = vmatprep.subr.bf16.mxu0 0
        %827 = vmatpush1.bf16.msra.mxu0 %v673
        %828 = vmatprep.subr.bf16.mxu0 0
        %829 = vmatpush1.bf16.msra.mxu0 %v670
        %830 = vmatprep.subr.bf16.mxu0 0
        %831 = vmatpush1.bf16.msra.mxu0 %v667
        %832 = vmatprep.subr.bf16.mxu0 0
        %833 = vmatpush1.bf16.msra.mxu0 %v664
        %834 = vmatprep.subr.bf16.mxu0 0
        %835 = vmatpush1.bf16.msra.mxu0 %v661
        %836 = vmatprep.subr.bf16.mxu0 0
        %837 = vmatpush2.bf16.msra.mxu0 0
        %838 = vmatprep.subr.bf16.mxu0 0
        %839 = vmatpush2.bf16.msra.mxu0 0
        %840 = vmatprep.subr.bf16.mxu0 0
        %841 = vmatpush2.bf16.msra.mxu0 0
        %842 = vmatprep.subr.bf16.mxu0 0
        %843 = vmatpush2.bf16.msra.mxu0 0
        %844 = vmatprep.subr.bf16.mxu0 0
        %845 = vmatpush2.bf16.msra.mxu0 0
        %846 = vmatprep.subr.bf16.mxu0 0
        %847 = vmatpush2.bf16.msra.mxu0 0
        %848 = vmatprep.subr.bf16.mxu0 0
        %849 = vmatpush2.bf16.msra.mxu0 0
        %850 = vmatprep.subr.bf16.mxu0 0
        %851 = vmatpush2.bf16.msra.mxu0 0
        %852 = vmatprep.mubr.bf16.mxu0 0
        %853 = vmatmul.mubr.bf16.gmra.mxu0 %v539
        %v854 = vpop.f32.mrf.mxu0
        %v855 = vadd.f32 0.0, %v854
        %v856 = vpop.f32.mrf.mxu0
        %v857 = vpop.f32.mrf.mxu0
        %v858 = vadd.f32 0.0, %v857
        %v859 = vpop.f32.mrf.mxu0
        %860 = vmatprep.mubr.bf16.mxu0 0
        %861 = vmatmul.mubr.bf16.gmra.mxu0 %v540
        %v862 = vpop.f32.mrf.mxu0
        %v863 = vadd.f32 0.0, %v862
        %v864 = vpop.f32.mrf.mxu0
        %v865 = vpop.f32.mrf.mxu0
        %v866 = vadd.f32 0.0, %v865
        %v867 = vpop.f32.mrf.mxu0
        %868 = vmatprep.mubr.bf16.mxu0 0
        %869 = vmatmul.mubr.bf16.gmra.mxu0 %v541
        %v870 = vpop.f32.mrf.mxu0
        %v871 = vadd.f32 0.0, %v870
        %v872 = vpop.f32.mrf.mxu0
        %v873 = vpop.f32.mrf.mxu0
        %v874 = vadd.f32 0.0, %v873
        %v875 = vpop.f32.mrf.mxu0
        %876 = vmatprep.mubr.bf16.mxu0 0
        %877 = vmatmul.mubr.bf16.gmra.mxu0 %v542
        %v878 = vpop.f32.mrf.mxu0
        %v879 = vadd.f32 0.0, %v878
        %v880 = vpop.f32.mrf.mxu0
        %v881 = vpop.f32.mrf.mxu0
        %v882 = vadd.f32 0.0, %v881
        %v883 = vpop.f32.mrf.mxu0
        %884 = vmatprep.mubr.bf16.mxu0 0
        %885 = vmatmul.mubr.bf16.gmra.mxu0 %v543
        %v886 = vpop.f32.mrf.mxu0
        %v887 = vadd.f32 0.0, %v886
        %v888 = vpop.f32.mrf.mxu0
        %v889 = vpop.f32.mrf.mxu0
        %v890 = vadd.f32 0.0, %v889
        %v891 = vpop.f32.mrf.mxu0
        %892 = vmatprep.mubr.bf16.mxu0 0
        %893 = vmatmul.mubr.bf16.gmra.mxu0 %v544
        %v894 = vpop.f32.mrf.mxu0
        %v895 = vadd.f32 0.0, %v894
        %v896 = vpop.f32.mrf.mxu0
        %v897 = vpop.f32.mrf.mxu0
        %v898 = vadd.f32 0.0, %v897
        %v899 = vpop.f32.mrf.mxu0
        %900 = vmatprep.mubr.bf16.mxu0 0
        %901 = vmatmul.mubr.bf16.gmra.mxu0 %v545
        %v902 = vpop.f32.mrf.mxu0
        %v903 = vadd.f32 0.0, %v902
        %v904 = vpop.f32.mrf.mxu0
        %v905 = vpop.f32.mrf.mxu0
        %v906 = vadd.f32 0.0, %v905
        %v907 = vpop.f32.mrf.mxu0
        %908 = vmatprep.mubr.bf16.mxu0 0
        %909 = vmatmul.mubr.bf16.gmra.mxu0 %v546
        %v910 = vpop.f32.mrf.mxu0
        %v911 = vadd.f32 0.0, %v910
        %v912 = vpop.f32.mrf.mxu0
        %v913 = vpop.f32.mrf.mxu0
        %v914 = vadd.f32 0.0, %v913
        %v915 = vpop.f32.mrf.mxu0
        %916 = vdwg.mxu0
        %v917 = vmul.f32 %v742, 0.03125
        %v918 = vmul.f32 %v746, 0.03125
        %v919 = vmul.f32 %v752, 0.03125
        %v920 = vmul.f32 %v756, 0.03125
        %v921 = vmul.f32 %v762, 0.03125
        %v922 = vmul.f32 %v766, 0.03125
        %v923 = vmul.f32 %v772, 0.03125
        %v924 = vmul.f32 %v776, 0.03125
        %v925 = vmul.f32 %v782, 0.03125
        %v926 = vmul.f32 %v786, 0.03125
        %v927 = vmul.f32 %v792, 0.03125
        %v928 = vmul.f32 %v796, 0.03125
        %v929 = vmul.f32 %v802, 0.03125
        %v930 = vmul.f32 %v806, 0.03125
        %v931 = vmul.f32 %v812, 0.03125
        %v932 = vmul.f32 %v816, 0.03125
        %v933 = vpack.c.bf16 %v918, %v917
        %v934 = vpack.c.bf16 %v920, %v919
        %v935 = vpack.c.bf16 %v922, %v921
        %v936 = vpack.c.bf16 %v924, %v923
        %v937 = vpack.c.bf16 %v926, %v925
        %v938 = vpack.c.bf16 %v928, %v927
        %v939 = vpack.c.bf16 %v930, %v929
        %v940 = vpack.c.bf16 %v932, %v931
        %v941 = vpack.c.bf16 %v748, %v744
        %v942 = vpack.c.bf16 %v758, %v754
        %v943 = vpack.c.bf16 %v768, %v764
        %v944 = vpack.c.bf16 %v778, %v774
        %v945 = vpack.c.bf16 %v788, %v784
        %v946 = vpack.c.bf16 %v798, %v794
        %v947 = vpack.c.bf16 %v808, %v804
        %v948 = vpack.c.bf16 %v818, %v814
        %v949 = vpack.c.bf16 %v858, %v855
        %v950 = vpack.c.bf16 %v866, %v863
        %v951 = vpack.c.bf16 %v874, %v871
        %v952 = vpack.c.bf16 %v882, %v879
        %v953 = vpack.c.bf16 %v890, %v887
        %v954 = vpack.c.bf16 %v898, %v895
        %v955 = vpack.c.bf16 %v906, %v903
        %v956 = vpack.c.bf16 %v914, %v911
        %vm957 = vcmask 261120
        %v959 = vsel %vm957, %v933, 0
        %v962 = vsel %vm957, %v934, 0
        %v965 = vsel %vm957, %v935, 0
        %v968 = vsel %vm957, %v936, 0
        %v971 = vsel %vm957, %v937, 0
        %v974 = vsel %vm957, %v938, 0
        %v977 = vsel %vm957, %v939, 0
        %v980 = vsel %vm957, %v940, 0
        %v983 = vsel %vm957, %v941, 0
        %v986 = vsel %vm957, %v942, 0
        %v989 = vsel %vm957, %v943, 0
        %v992 = vsel %vm957, %v944, 0
        %v995 = vsel %vm957, %v945, 0
        %v998 = vsel %vm957, %v946, 0
        %v1001 = vsel %vm957, %v947, 0
        %v1004 = vsel %vm957, %v948, 0
        %1006 = vmatprep.subr.bf16.mxu0 0
        %1007 = vmatpush1.bf16.xpose.msra.mxu0 %v1004
        %1008 = vmatprep.subr.bf16.mxu0 0
        %1009 = vmatpush1.bf16.xpose.msra.mxu0 %v1001
        %1010 = vmatprep.subr.bf16.mxu0 0
        %1011 = vmatpush1.bf16.xpose.msra.mxu0 %v998
        %1012 = vmatprep.subr.bf16.mxu0 0
        %1013 = vmatpush1.bf16.xpose.msra.mxu0 %v995
        %1014 = vmatprep.subr.bf16.mxu0 0
        %1015 = vmatpush1.bf16.xpose.msra.mxu0 %v992
        %1016 = vmatprep.subr.bf16.mxu0 0
        %1017 = vmatpush1.bf16.xpose.msra.mxu0 %v989
        %1018 = vmatprep.subr.bf16.mxu0 0
        %1019 = vmatpush1.bf16.xpose.msra.mxu0 %v986
        %1020 = vmatprep.subr.bf16.mxu0 0
        %1021 = vmatpush1.bf16.xpose.msra.mxu0 %v983
        %1022 = vmatprep.subr.bf16.mxu0 0
        %1023 = vmatpush2.bf16.xpose.msra.mxu0 0
        %1024 = vmatprep.subr.bf16.mxu0 0
        %1025 = vmatpush2.bf16.xpose.msra.mxu0 0
        %1026 = vmatprep.subr.bf16.mxu0 0
        %1027 = vmatpush2.bf16.xpose.msra.mxu0 0
        %1028 = vmatprep.subr.bf16.mxu0 0
        %1029 = vmatpush2.bf16.xpose.msra.mxu0 0
        %1030 = vmatprep.subr.bf16.mxu0 0
        %1031 = vmatpush2.bf16.xpose.msra.mxu0 0
        %1032 = vmatprep.subr.bf16.mxu0 0
        %1033 = vmatpush2.bf16.xpose.msra.mxu0 0
        %1034 = vmatprep.subr.bf16.mxu0 0
        %1035 = vmatpush2.bf16.xpose.msra.mxu0 0
        %1036 = vmatprep.subr.bf16.mxu0 0
        %1037 = vmatpush2.bf16.xpose.msra.mxu0 0
        %1038 = vmatprep.mubr.bf16.mxu0 0
        %1039 = vmatmul.mubr.bf16.gmra.mxu0 %v959
        %v1040 = vpop.f32.mrf.mxu0
        %v1041 = vadd.f32 0.0, %v1040
        %v1042 = vpop.f32.mrf.mxu0
        %v1043 = vpop.f32.mrf.mxu0
        %v1044 = vadd.f32 0.0, %v1043
        %v1045 = vpop.f32.mrf.mxu0
        %1046 = vmatprep.mubr.bf16.mxu0 0
        %1047 = vmatmul.mubr.bf16.gmra.mxu0 %v962
        %v1048 = vpop.f32.mrf.mxu0
        %v1049 = vadd.f32 0.0, %v1048
        %v1050 = vpop.f32.mrf.mxu0
        %v1051 = vpop.f32.mrf.mxu0
        %v1052 = vadd.f32 0.0, %v1051
        %v1053 = vpop.f32.mrf.mxu0
        %1054 = vmatprep.mubr.bf16.mxu0 0
        %1055 = vmatmul.mubr.bf16.gmra.mxu0 %v965
        %v1056 = vpop.f32.mrf.mxu0
        %v1057 = vadd.f32 0.0, %v1056
        %v1058 = vpop.f32.mrf.mxu0
        %v1059 = vpop.f32.mrf.mxu0
        %v1060 = vadd.f32 0.0, %v1059
        %v1061 = vpop.f32.mrf.mxu0
        %1062 = vmatprep.mubr.bf16.mxu0 0
        %1063 = vmatmul.mubr.bf16.gmra.mxu0 %v968
        %v1064 = vpop.f32.mrf.mxu0
        %v1065 = vadd.f32 0.0, %v1064
        %v1066 = vpop.f32.mrf.mxu0
        %v1067 = vpop.f32.mrf.mxu0
        %v1068 = vadd.f32 0.0, %v1067
        %v1069 = vpop.f32.mrf.mxu0
        %1070 = vmatprep.mubr.bf16.mxu0 0
        %1071 = vmatmul.mubr.bf16.gmra.mxu0 %v971
        %v1072 = vpop.f32.mrf.mxu0
        %v1073 = vadd.f32 0.0, %v1072
        %v1074 = vpop.f32.mrf.mxu0
        %v1075 = vpop.f32.mrf.mxu0
        %v1076 = vadd.f32 0.0, %v1075
        %v1077 = vpop.f32.mrf.mxu0
        %1078 = vmatprep.mubr.bf16.mxu0 0
        %1079 = vmatmul.mubr.bf16.gmra.mxu0 %v974
        %v1080 = vpop.f32.mrf.mxu0
        %v1081 = vadd.f32 0.0, %v1080
        %v1082 = vpop.f32.mrf.mxu0
        %v1083 = vpop.f32.mrf.mxu0
        %v1084 = vadd.f32 0.0, %v1083
        %v1085 = vpop.f32.mrf.mxu0
        %1086 = vmatprep.mubr.bf16.mxu0 0
        %1087 = vmatmul.mubr.bf16.gmra.mxu0 %v977
        %v1088 = vpop.f32.mrf.mxu0
        %v1089 = vadd.f32 0.0, %v1088
        %v1090 = vpop.f32.mrf.mxu0
        %v1091 = vpop.f32.mrf.mxu0
        %v1092 = vadd.f32 0.0, %v1091
        %v1093 = vpop.f32.mrf.mxu0
        %1094 = vmatprep.mubr.bf16.mxu0 0
        %1095 = vmatmul.mubr.bf16.gmra.mxu0 %v980
        %v1096 = vpop.f32.mrf.mxu0
        %v1097 = vadd.f32 0.0, %v1096
        %v1098 = vpop.f32.mrf.mxu0
        %v1099 = vpop.f32.mrf.mxu0
        %v1100 = vadd.f32 0.0, %v1099
        %v1101 = vpop.f32.mrf.mxu0
        %1102 = vdwg.mxu0
        %1103 = vmax.xlane.f32.xlu0 %v1041
        %v1104 = vpop.xlane.xlu0 %1103
        %1105 = vmax.xlane.f32.xlu0 %v1044
        %v1106 = vpop.xlane.xlu0 %1105
        %1107 = vmax.xlane.f32.xlu0 %v1049
        %v1108 = vpop.xlane.xlu0 %1107
        %1109 = vmax.xlane.f32.xlu0 %v1052
        %v1110 = vpop.xlane.xlu0 %1109
        %1111 = vmax.xlane.f32.xlu0 %v1057
        %v1112 = vpop.xlane.xlu0 %1111
        %1113 = vmax.xlane.f32.xlu0 %v1060
        %v1114 = vpop.xlane.xlu0 %1113
        %1115 = vmax.xlane.f32.xlu0 %v1065
        %v1116 = vpop.xlane.xlu0 %1115
        %1117 = vmax.xlane.f32.xlu0 %v1068
        %v1118 = vpop.xlane.xlu0 %1117
        %1119 = vmax.xlane.f32.xlu0 %v1073
        %v1120 = vpop.xlane.xlu0 %1119
        %1121 = vmax.xlane.f32.xlu0 %v1076
        %v1122 = vpop.xlane.xlu0 %1121
        %1123 = vmax.xlane.f32.xlu0 %v1081
        %v1124 = vpop.xlane.xlu0 %1123
        %1125 = vmax.xlane.f32.xlu0 %v1084
        %v1126 = vpop.xlane.xlu0 %1125
        %1127 = vmax.xlane.f32.xlu0 %v1089
        %v1128 = vpop.xlane.xlu0 %1127
        %1129 = vmax.xlane.f32.xlu0 %v1092
        %v1130 = vpop.xlane.xlu0 %1129
        %1131 = vmax.xlane.f32.xlu0 %v1097
        %v1132 = vpop.xlane.xlu0 %1131
        %1133 = vmax.xlane.f32.xlu0 %v1100
        %v1134 = vpop.xlane.xlu0 %1133
        %v1135 = vsub.f32 %v1041, %v1104
        %v1136 = vsub.f32 %v1044, %v1106
        %v1137 = vsub.f32 %v1049, %v1108
        %v1138 = vsub.f32 %v1052, %v1110
        %v1139 = vsub.f32 %v1057, %v1112
        %v1140 = vsub.f32 %v1060, %v1114
        %v1141 = vsub.f32 %v1065, %v1116
        %v1142 = vsub.f32 %v1068, %v1118
        %v1143 = vsub.f32 %v1073, %v1120
        %v1144 = vsub.f32 %v1076, %v1122
        %v1145 = vsub.f32 %v1081, %v1124
        %v1146 = vsub.f32 %v1084, %v1126
        %v1147 = vsub.f32 %v1089, %v1128
        %v1148 = vsub.f32 %v1092, %v1130
        %v1149 = vsub.f32 %v1097, %v1132
        %v1150 = vsub.f32 %v1100, %v1134
        %v1151 = vmul.f32 %v1135, 1.442695
        %v1152 = vpow.pop %v1151
        %v1153 = vmul.f32 %v1136, 1.442695
        %v1154 = vpow.pop %v1153
        %v1155 = vmul.f32 %v1137, 1.442695
        %v1156 = vpow.pop %v1155
        %v1157 = vmul.f32 %v1138, 1.442695
        %v1158 = vpow.pop %v1157
        %v1159 = vmul.f32 %v1139, 1.442695
        %v1160 = vpow.pop %v1159
        %v1161 = vmul.f32 %v1140, 1.442695
        %v1162 = vpow.pop %v1161
        %v1163 = vmul.f32 %v1141, 1.442695
        %v1164 = vpow.pop %v1163
        %v1165 = vmul.f32 %v1142, 1.442695
        %v1166 = vpow.pop %v1165
        %v1167 = vmul.f32 %v1143, 1.442695
        %v1168 = vpow.pop %v1167
        %v1169 = vmul.f32 %v1144, 1.442695
        %v1170 = vpow.pop %v1169
        %v1171 = vmul.f32 %v1145, 1.442695
        %v1172 = vpow.pop %v1171
        %v1173 = vmul.f32 %v1146, 1.442695
        %v1174 = vpow.pop %v1173
        %v1175 = vmul.f32 %v1147, 1.442695
        %v1176 = vpow.pop %v1175
        %v1177 = vmul.f32 %v1148, 1.442695
        %v1178 = vpow.pop %v1177
        %v1179 = vmul.f32 %v1149, 1.442695
        %v1180 = vpow.pop %v1179
        %v1181 = vmul.f32 %v1150, 1.442695
        %v1182 = vpow.pop %v1181
        %1183 = vadd.xlane.f32.xlu0 %v1152
        %v1184 = vpop.xlane.xlu0 %1183
        %1185 = vadd.xlane.f32.xlu0 %v1154
        %v1186 = vpop.xlane.xlu0 %1185
        %1187 = vadd.xlane.f32.xlu0 %v1156
        %v1188 = vpop.xlane.xlu0 %1187
        %1189 = vadd.xlane.f32.xlu0 %v1158
        %v1190 = vpop.xlane.xlu0 %1189
        %1191 = vadd.xlane.f32.xlu0 %v1160
        %v1192 = vpop.xlane.xlu0 %1191
        %1193 = vadd.xlane.f32.xlu0 %v1162
        %v1194 = vpop.xlane.xlu0 %1193
        %1195 = vadd.xlane.f32.xlu0 %v1164
        %v1196 = vpop.xlane.xlu0 %1195
        %1197 = vadd.xlane.f32.xlu0 %v1166
        %v1198 = vpop.xlane.xlu0 %1197
        %1199 = vadd.xlane.f32.xlu0 %v1168
        %v1200 = vpop.xlane.xlu0 %1199
        %1201 = vadd.xlane.f32.xlu0 %v1170
        %v1202 = vpop.xlane.xlu0 %1201
        %1203 = vadd.xlane.f32.xlu0 %v1172
        %v1204 = vpop.xlane.xlu0 %1203
        %1205 = vadd.xlane.f32.xlu0 %v1174
        %v1206 = vpop.xlane.xlu0 %1205
        %1207 = vadd.xlane.f32.xlu0 %v1176
        %v1208 = vpop.xlane.xlu0 %1207
        %1209 = vadd.xlane.f32.xlu0 %v1178
        %v1210 = vpop.xlane.xlu0 %1209
        %1211 = vadd.xlane.f32.xlu0 %v1180
        %v1212 = vpop.xlane.xlu0 %1211
        %1213 = vadd.xlane.f32.xlu0 %v1182
        %v1214 = vpop.xlane.xlu0 %1213
        %v1215 = vpack.c.bf16 %v1154, %v1152
        %v1216 = vpack.c.bf16 %v1158, %v1156
        %v1217 = vpack.c.bf16 %v1162, %v1160
        %v1218 = vpack.c.bf16 %v1166, %v1164
        %v1219 = vpack.c.bf16 %v1170, %v1168
        %v1220 = vpack.c.bf16 %v1174, %v1172
        %v1221 = vpack.c.bf16 %v1178, %v1176
        %v1222 = vpack.c.bf16 %v1182, %v1180
        %1223 = vmatprep.subr.bf16.mxu0 0
        %1224 = vmatpush1.bf16.msra.mxu0 %v956
        %1225 = vmatprep.subr.bf16.mxu0 0
        %1226 = vmatpush1.bf16.msra.mxu0 %v955
        %1227 = vmatprep.subr.bf16.mxu0 0
        %1228 = vmatpush1.bf16.msra.mxu0 %v954
        %1229 = vmatprep.subr.bf16.mxu0 0
        %1230 = vmatpush1.bf16.msra.mxu0 %v953
        %1231 = vmatprep.subr.bf16.mxu0 0
        %1232 = vmatpush1.bf16.msra.mxu0 %v952
        %1233 = vmatprep.subr.bf16.mxu0 0
        %1234 = vmatpush1.bf16.msra.mxu0 %v951
        %1235 = vmatprep.subr.bf16.mxu0 0
        %1236 = vmatpush1.bf16.msra.mxu0 %v950
        %1237 = vmatprep.subr.bf16.mxu0 0
        %1238 = vmatpush1.bf16.msra.mxu0 %v949
        %1239 = vmatprep.subr.bf16.mxu0 0
        %1240 = vmatpush2.bf16.msra.mxu0 0
        %1241 = vmatprep.subr.bf16.mxu0 0
        %1242 = vmatpush2.bf16.msra.mxu0 0
        %1243 = vmatprep.subr.bf16.mxu0 0
        %1244 = vmatpush2.bf16.msra.mxu0 0
        %1245 = vmatprep.subr.bf16.mxu0 0
        %1246 = vmatpush2.bf16.msra.mxu0 0
        %1247 = vmatprep.subr.bf16.mxu0 0
        %1248 = vmatpush2.bf16.msra.mxu0 0
        %1249 = vmatprep.subr.bf16.mxu0 0
        %1250 = vmatpush2.bf16.msra.mxu0 0
        %1251 = vmatprep.subr.bf16.mxu0 0
        %1252 = vmatpush2.bf16.msra.mxu0 0
        %1253 = vmatprep.subr.bf16.mxu0 0
        %1254 = vmatpush2.bf16.msra.mxu0 0
        %1255 = vmatprep.mubr.bf16.mxu0 0
        %1256 = vmatmul.mubr.bf16.gmra.mxu0 %v1215
        %v1257 = vpop.f32.mrf.mxu0
        %v1258 = vadd.f32 0.0, %v1257
        %v1259 = vpop.f32.mrf.mxu0
        %v1260 = vpop.f32.mrf.mxu0
        %v1261 = vadd.f32 0.0, %v1260
        %v1262 = vpop.f32.mrf.mxu0
        %1263 = vmatprep.mubr.bf16.mxu0 0
        %1264 = vmatmul.mubr.bf16.gmra.mxu0 %v1216
        %v1265 = vpop.f32.mrf.mxu0
        %v1266 = vadd.f32 0.0, %v1265
        %v1267 = vpop.f32.mrf.mxu0
        %v1268 = vpop.f32.mrf.mxu0
        %v1269 = vadd.f32 0.0, %v1268
        %v1270 = vpop.f32.mrf.mxu0
        %1271 = vmatprep.mubr.bf16.mxu0 0
        %1272 = vmatmul.mubr.bf16.gmra.mxu0 %v1217
        %v1273 = vpop.f32.mrf.mxu0
        %v1274 = vadd.f32 0.0, %v1273
        %v1275 = vpop.f32.mrf.mxu0
        %v1276 = vpop.f32.mrf.mxu0
        %v1277 = vadd.f32 0.0, %v1276
        %v1278 = vpop.f32.mrf.mxu0
        %1279 = vmatprep.mubr.bf16.mxu0 0
        %1280 = vmatmul.mubr.bf16.gmra.mxu0 %v1218
        %v1281 = vpop.f32.mrf.mxu0
        %v1282 = vadd.f32 0.0, %v1281
        %v1283 = vpop.f32.mrf.mxu0
        %v1284 = vpop.f32.mrf.mxu0
        %v1285 = vadd.f32 0.0, %v1284
        %v1286 = vpop.f32.mrf.mxu0
        %1287 = vmatprep.mubr.bf16.mxu0 0
        %1288 = vmatmul.mubr.bf16.gmra.mxu0 %v1219
        %v1289 = vpop.f32.mrf.mxu0
        %v1290 = vadd.f32 0.0, %v1289
        %v1291 = vpop.f32.mrf.mxu0
        %v1292 = vpop.f32.mrf.mxu0
        %v1293 = vadd.f32 0.0, %v1292
        %v1294 = vpop.f32.mrf.mxu0
        %1295 = vmatprep.mubr.bf16.mxu0 0
        %1296 = vmatmul.mubr.bf16.gmra.mxu0 %v1220
        %v1297 = vpop.f32.mrf.mxu0
        %v1298 = vadd.f32 0.0, %v1297
        %v1299 = vpop.f32.mrf.mxu0
        %v1300 = vpop.f32.mrf.mxu0
        %v1301 = vadd.f32 0.0, %v1300
        %v1302 = vpop.f32.mrf.mxu0
        %1303 = vmatprep.mubr.bf16.mxu0 0
        %1304 = vmatmul.mubr.bf16.gmra.mxu0 %v1221
        %v1305 = vpop.f32.mrf.mxu0
        %v1306 = vadd.f32 0.0, %v1305
        %v1307 = vpop.f32.mrf.mxu0
        %v1308 = vpop.f32.mrf.mxu0
        %v1309 = vadd.f32 0.0, %v1308
        %v1310 = vpop.f32.mrf.mxu0
        %1311 = vmatprep.mubr.bf16.mxu0 0
        %1312 = vmatmul.mubr.bf16.gmra.mxu0 %v1222
        %v1313 = vpop.f32.mrf.mxu0
        %v1314 = vadd.f32 0.0, %v1313
        %v1315 = vpop.f32.mrf.mxu0
        %v1316 = vpop.f32.mrf.mxu0
        %v1317 = vadd.f32 0.0, %v1316
        %v1318 = vpop.f32.mrf.mxu0
        %1319 = vdwg.mxu0
        %v1320 = vrcp.pop %v1184
        %v1321 = vrcp.pop %v1186
        %v1322 = vrcp.pop %v1188
        %v1323 = vrcp.pop %v1190
        %v1324 = vrcp.pop %v1192
        %v1325 = vrcp.pop %v1194
        %v1326 = vrcp.pop %v1196
        %v1327 = vrcp.pop %v1198
        %v1328 = vrcp.pop %v1200
        %v1329 = vrcp.pop %v1202
        %v1330 = vrcp.pop %v1204
        %v1331 = vrcp.pop %v1206
        %v1332 = vrcp.pop %v1208
        %v1333 = vrcp.pop %v1210
        %v1334 = vrcp.pop %v1212
        %v1335 = vrcp.pop %v1214
        %v1336 = vmul.f32 %v1258, %v1320
        %v1337 = vmul.f32 %v1261, %v1321
        %v1338 = vmul.f32 %v1266, %v1322
        %v1339 = vmul.f32 %v1269, %v1323
        %v1340 = vmul.f32 %v1274, %v1324
        %v1341 = vmul.f32 %v1277, %v1325
        %v1342 = vmul.f32 %v1282, %v1326
        %v1343 = vmul.f32 %v1285, %v1327
        %v1344 = vmul.f32 %v1290, %v1328
        %v1345 = vmul.f32 %v1293, %v1329
        %v1346 = vmul.f32 %v1298, %v1330
        %v1347 = vmul.f32 %v1301, %v1331
        %v1348 = vmul.f32 %v1306, %v1332
        %v1349 = vmul.f32 %v1309, %v1333
        %v1350 = vmul.f32 %v1314, %v1334
        %v1351 = vmul.f32 %v1317, %v1335
        %v1352 = vpack.c.bf16 %v1337, %v1336
        %v1353 = vpack.c.bf16 %v1339, %v1338
        %v1354 = vpack.c.bf16 %v1341, %v1340
        %v1355 = vpack.c.bf16 %v1343, %v1342
        %v1356 = vpack.c.bf16 %v1345, %v1344
        %v1357 = vpack.c.bf16 %v1347, %v1346
        %v1358 = vpack.c.bf16 %v1349, %v1348
        %v1359 = vpack.c.bf16 %v1351, %v1350
        %v1368 = vunpack.c.l.b16 %v1352
        %v1369 = vunpack.c.h.b16 %v1352
        %v1370 = vunpack.c.l.b16 %v1353
        %v1371 = vunpack.c.h.b16 %v1353
        %v1372 = vunpack.c.l.b16 %v1354
        %v1373 = vunpack.c.h.b16 %v1354
        %v1374 = vunpack.c.l.b16 %v1355
        %v1375 = vunpack.c.h.b16 %v1355
        %v1376 = vunpack.c.l.b16 %v1356
        %v1377 = vunpack.c.h.b16 %v1356
        %v1378 = vunpack.c.l.b16 %v1357
        %v1379 = vunpack.c.h.b16 %v1357
        %v1380 = vunpack.c.l.b16 %v1358
        %v1381 = vunpack.c.h.b16 %v1358
        %v1382 = vunpack.c.l.b16 %v1359
        %v1383 = vunpack.c.h.b16 %v1359
        %v1384 = vpack.c.b16 %v1368, %v1368
        %v1385 = vpack.c.b16 %v1369, %v1369
        %v1386 = vpack.c.b16 %v1370, %v1370
        %v1387 = vpack.c.b16 %v1371, %v1371
        %v1388 = vpack.c.b16 %v1372, %v1372
        %v1389 = vpack.c.b16 %v1373, %v1373
        %v1390 = vpack.c.b16 %v1374, %v1374
        %v1391 = vpack.c.b16 %v1375, %v1375
        %v1392 = vpack.c.b16 %v1376, %v1376
        %v1393 = vpack.c.b16 %v1377, %v1377
        %v1394 = vpack.c.b16 %v1378, %v1378
        %v1395 = vpack.c.b16 %v1379, %v1379
        %v1396 = vpack.c.b16 %v1380, %v1380
        %v1397 = vpack.c.b16 %v1381, %v1381
        %v1398 = vpack.c.b16 %v1382, %v1382
        %v1399 = vpack.c.b16 %v1383, %v1383
        %vm1416 = vcmask 257024
        %1417 = vst.msk [vmem:[#allocation2] sm:$0xf] %vm1416, %v1384
        %1418 = vst.msk [vmem:[#allocation2 + $0x4] sm:$0xf] %vm1416, %v1385
        %1419 = vst.msk [vmem:[#allocation2 + $0x8] sm:$0xf] %vm1416, %v1386
        %1420 = vst.msk [vmem:[#allocation2 + $0xc] sm:$0xf] %vm1416, %v1387
        %1421 = vst.msk [vmem:[#allocation2 + $0x10] sm:$0xf] %vm1416, %v1388
        %1422 = vst.msk [vmem:[#allocation2 + $0x14] sm:$0xf] %vm1416, %v1389
        %1423 = vst.msk [vmem:[#allocation2 + $0x18] sm:$0xf] %vm1416, %v1390
        %1424 = vst.msk [vmem:[#allocation2 + $0x1c] sm:$0xf] %vm1416, %v1391
        %1425 = vst.msk [vmem:[#allocation2 + $0x20] sm:$0xf] %vm1416, %v1392
        %1426 = vst.msk [vmem:[#allocation2 + $0x24] sm:$0xf] %vm1416, %v1393
        %1427 = vst.msk [vmem:[#allocation2 + $0x28] sm:$0xf] %vm1416, %v1394
        %1428 = vst.msk [vmem:[#allocation2 + $0x2c] sm:$0xf] %vm1416, %v1395
        %1429 = vst.msk [vmem:[#allocation2 + $0x30] sm:$0xf] %vm1416, %v1396
        %1430 = vst.msk [vmem:[#allocation2 + $0x34] sm:$0xf] %vm1416, %v1397
        %1431 = vst.msk [vmem:[#allocation2 + $0x38] sm:$0xf] %vm1416, %v1398
        %1432 = vst.msk [vmem:[#allocation2 + $0x3c] sm:$0xf] %vm1416, %v1399
        %1441 = vrot.lane.b32.xlu0 %v933, 96
        %v1442 = vpop.permute.xlu0 %1441
        %1443 = vrot.lane.b32.xlu0 %v934, 96
        %v1444 = vpop.permute.xlu0 %1443
        %1445 = vrot.lane.b32.xlu0 %v935, 96
        %v1446 = vpop.permute.xlu0 %1445
        %1447 = vrot.lane.b32.xlu0 %v936, 96
        %v1448 = vpop.permute.xlu0 %1447
        %1449 = vrot.lane.b32.xlu0 %v937, 96
        %v1450 = vpop.permute.xlu0 %1449
        %1451 = vrot.lane.b32.xlu0 %v938, 96
        %v1452 = vpop.permute.xlu0 %1451
        %1453 = vrot.lane.b32.xlu0 %v939, 96
        %v1454 = vpop.permute.xlu0 %1453
        %1455 = vrot.lane.b32.xlu0 %v940, 96
        %v1456 = vpop.permute.xlu0 %1455
        %1465 = vrot.lane.b32.xlu0 %v941, 96
        %v1466 = vpop.permute.xlu0 %1465
        %1467 = vrot.lane.b32.xlu0 %v942, 96
        %v1468 = vpop.permute.xlu0 %1467
        %1469 = vrot.lane.b32.xlu0 %v943, 96
        %v1470 = vpop.permute.xlu0 %1469
        %1471 = vrot.lane.b32.xlu0 %v944, 96
        %v1472 = vpop.permute.xlu0 %1471
        %1473 = vrot.lane.b32.xlu0 %v945, 96
        %v1474 = vpop.permute.xlu0 %1473
        %1475 = vrot.lane.b32.xlu0 %v946, 96
        %v1476 = vpop.permute.xlu0 %1475
        %1477 = vrot.lane.b32.xlu0 %v947, 96
        %v1478 = vpop.permute.xlu0 %1477
        %1479 = vrot.lane.b32.xlu0 %v948, 96
        %v1480 = vpop.permute.xlu0 %1479
        %v1482 = vsel %vm957, %v1442, 0
        %v1485 = vsel %vm957, %v1444, 0
        %v1488 = vsel %vm957, %v1446, 0
        %v1491 = vsel %vm957, %v1448, 0
        %v1494 = vsel %vm957, %v1450, 0
        %v1497 = vsel %vm957, %v1452, 0
        %v1500 = vsel %vm957, %v1454, 0
        %v1503 = vsel %vm957, %v1456, 0
        %v1506 = vsel %vm957, %v1466, 0
        %v1509 = vsel %vm957, %v1468, 0
        %v1512 = vsel %vm957, %v1470, 0
        %v1515 = vsel %vm957, %v1472, 0
        %v1518 = vsel %vm957, %v1474, 0
        %v1521 = vsel %vm957, %v1476, 0
        %v1524 = vsel %vm957, %v1478, 0
        %v1527 = vsel %vm957, %v1480, 0
        %1529 = vmatprep.subr.bf16.mxu0 0
        %1530 = vmatpush1.bf16.xpose.msra.mxu0 %v1527
        %1531 = vmatprep.subr.bf16.mxu0 0
        %1532 = vmatpush1.bf16.xpose.msra.mxu0 %v1524
        %1533 = vmatprep.subr.bf16.mxu0 0
        %1534 = vmatpush1.bf16.xpose.msra.mxu0 %v1521
        %1535 = vmatprep.subr.bf16.mxu0 0
        %1536 = vmatpush1.bf16.xpose.msra.mxu0 %v1518
        %1537 = vmatprep.subr.bf16.mxu0 0
        %1538 = vmatpush1.bf16.xpose.msra.mxu0 %v1515
        %1539 = vmatprep.subr.bf16.mxu0 0
        %1540 = vmatpush1.bf16.xpose.msra.mxu0 %v1512
        %1541 = vmatprep.subr.bf16.mxu0 0
        %1542 = vmatpush1.bf16.xpose.msra.mxu0 %v1509
        %1543 = vmatprep.subr.bf16.mxu0 0
        %1544 = vmatpush1.bf16.xpose.msra.mxu0 %v1506
        %1545 = vmatprep.subr.bf16.mxu0 0
        %1546 = vmatpush2.bf16.xpose.msra.mxu0 0
        %1547 = vmatprep.subr.bf16.mxu0 0
        %1548 = vmatpush2.bf16.xpose.msra.mxu0 0
        %1549 = vmatprep.subr.bf16.mxu0 0
        %1550 = vmatpush2.bf16.xpose.msra.mxu0 0
        %1551 = vmatprep.subr.bf16.mxu0 0
        %1552 = vmatpush2.bf16.xpose.msra.mxu0 0
        %1553 = vmatprep.subr.bf16.mxu0 0
        %1554 = vmatpush2.bf16.xpose.msra.mxu0 0
        %1555 = vmatprep.subr.bf16.mxu0 0
        %1556 = vmatpush2.bf16.xpose.msra.mxu0 0
        %1557 = vmatprep.subr.bf16.mxu0 0
        %1558 = vmatpush2.bf16.xpose.msra.mxu0 0
        %1559 = vmatprep.subr.bf16.mxu0 0
        %1560 = vmatpush2.bf16.xpose.msra.mxu0 0
        %1561 = vmatprep.mubr.bf16.mxu0 0
        %1562 = vmatmul.mubr.bf16.gmra.mxu0 %v1482
        %v1563 = vpop.f32.mrf.mxu0
        %v1564 = vadd.f32 0.0, %v1563
        %v1565 = vpop.f32.mrf.mxu0
        %v1566 = vpop.f32.mrf.mxu0
        %v1567 = vadd.f32 0.0, %v1566
        %v1568 = vpop.f32.mrf.mxu0
        %1569 = vmatprep.mubr.bf16.mxu0 0
        %1570 = vmatmul.mubr.bf16.gmra.mxu0 %v1485
        %v1571 = vpop.f32.mrf.mxu0
        %v1572 = vadd.f32 0.0, %v1571
        %v1573 = vpop.f32.mrf.mxu0
        %v1574 = vpop.f32.mrf.mxu0
        %v1575 = vadd.f32 0.0, %v1574
        %v1576 = vpop.f32.mrf.mxu0
        %1577 = vmatprep.mubr.bf16.mxu0 0
        %1578 = vmatmul.mubr.bf16.gmra.mxu0 %v1488
        %v1579 = vpop.f32.mrf.mxu0
        %v1580 = vadd.f32 0.0, %v1579
        %v1581 = vpop.f32.mrf.mxu0
        %v1582 = vpop.f32.mrf.mxu0
        %v1583 = vadd.f32 0.0, %v1582
        %v1584 = vpop.f32.mrf.mxu0
        %1585 = vmatprep.mubr.bf16.mxu0 0
        %1586 = vmatmul.mubr.bf16.gmra.mxu0 %v1491
        %v1587 = vpop.f32.mrf.mxu0
        %v1588 = vadd.f32 0.0, %v1587
        %v1589 = vpop.f32.mrf.mxu0
        %v1590 = vpop.f32.mrf.mxu0
        %v1591 = vadd.f32 0.0, %v1590
        %v1592 = vpop.f32.mrf.mxu0
        %1593 = vmatprep.mubr.bf16.mxu0 0
        %1594 = vmatmul.mubr.bf16.gmra.mxu0 %v1494
        %v1595 = vpop.f32.mrf.mxu0
        %v1596 = vadd.f32 0.0, %v1595
        %v1597 = vpop.f32.mrf.mxu0
        %v1598 = vpop.f32.mrf.mxu0
        %v1599 = vadd.f32 0.0, %v1598
        %v1600 = vpop.f32.mrf.mxu0
        %1601 = vmatprep.mubr.bf16.mxu0 0
        %1602 = vmatmul.mubr.bf16.gmra.mxu0 %v1497
        %v1603 = vpop.f32.mrf.mxu0
        %v1604 = vadd.f32 0.0, %v1603
        %v1605 = vpop.f32.mrf.mxu0
        %v1606 = vpop.f32.mrf.mxu0
        %v1607 = vadd.f32 0.0, %v1606
        %v1608 = vpop.f32.mrf.mxu0
        %1609 = vmatprep.mubr.bf16.mxu0 0
        %1610 = vmatmul.mubr.bf16.gmra.mxu0 %v1500
        %v1611 = vpop.f32.mrf.mxu0
        %v1612 = vadd.f32 0.0, %v1611
        %v1613 = vpop.f32.mrf.mxu0
        %v1614 = vpop.f32.mrf.mxu0
        %v1615 = vadd.f32 0.0, %v1614
        %v1616 = vpop.f32.mrf.mxu0
        %1617 = vmatprep.mubr.bf16.mxu0 0
        %1618 = vmatmul.mubr.bf16.gmra.mxu0 %v1503
        %v1619 = vpop.f32.mrf.mxu0
        %v1620 = vadd.f32 0.0, %v1619
        %v1621 = vpop.f32.mrf.mxu0
        %v1622 = vpop.f32.mrf.mxu0
        %v1623 = vadd.f32 0.0, %v1622
        %v1624 = vpop.f32.mrf.mxu0
        %1625 = vdwg.mxu0
        %1626 = vmax.xlane.f32.xlu0 %v1564
        %v1627 = vpop.xlane.xlu0 %1626
        %1628 = vmax.xlane.f32.xlu0 %v1567
        %v1629 = vpop.xlane.xlu0 %1628
        %1630 = vmax.xlane.f32.xlu0 %v1572
        %v1631 = vpop.xlane.xlu0 %1630
        %1632 = vmax.xlane.f32.xlu0 %v1575
        %v1633 = vpop.xlane.xlu0 %1632
        %1634 = vmax.xlane.f32.xlu0 %v1580
        %v1635 = vpop.xlane.xlu0 %1634
        %1636 = vmax.xlane.f32.xlu0 %v1583
        %v1637 = vpop.xlane.xlu0 %1636
        %1638 = vmax.xlane.f32.xlu0 %v1588
        %v1639 = vpop.xlane.xlu0 %1638
        %1640 = vmax.xlane.f32.xlu0 %v1591
        %v1641 = vpop.xlane.xlu0 %1640
        %1642 = vmax.xlane.f32.xlu0 %v1596
        %v1643 = vpop.xlane.xlu0 %1642
        %1644 = vmax.xlane.f32.xlu0 %v1599
        %v1645 = vpop.xlane.xlu0 %1644
        %1646 = vmax.xlane.f32.xlu0 %v1604
        %v1647 = vpop.xlane.xlu0 %1646
        %1648 = vmax.xlane.f32.xlu0 %v1607
        %v1649 = vpop.xlane.xlu0 %1648
        %1650 = vmax.xlane.f32.xlu0 %v1612
        %v1651 = vpop.xlane.xlu0 %1650
        %1652 = vmax.xlane.f32.xlu0 %v1615
        %v1653 = vpop.xlane.xlu0 %1652
        %1654 = vmax.xlane.f32.xlu0 %v1620
        %v1655 = vpop.xlane.xlu0 %1654
        %1656 = vmax.xlane.f32.xlu0 %v1623
        %v1657 = vpop.xlane.xlu0 %1656
        %v1658 = vsub.f32 %v1564, %v1627
        %v1659 = vsub.f32 %v1567, %v1629
        %v1660 = vsub.f32 %v1572, %v1631
        %v1661 = vsub.f32 %v1575, %v1633
        %v1662 = vsub.f32 %v1580, %v1635
        %v1663 = vsub.f32 %v1583, %v1637
        %v1664 = vsub.f32 %v1588, %v1639
        %v1665 = vsub.f32 %v1591, %v1641
        %v1666 = vsub.f32 %v1596, %v1643
        %v1667 = vsub.f32 %v1599, %v1645
        %v1668 = vsub.f32 %v1604, %v1647
        %v1669 = vsub.f32 %v1607, %v1649
        %v1670 = vsub.f32 %v1612, %v1651
        %v1671 = vsub.f32 %v1615, %v1653
        %v1672 = vsub.f32 %v1620, %v1655
        %v1673 = vsub.f32 %v1623, %v1657
        %v1674 = vmul.f32 %v1658, 1.442695
        %v1675 = vpow.pop %v1674
        %v1676 = vmul.f32 %v1659, 1.442695
        %v1677 = vpow.pop %v1676
        %v1678 = vmul.f32 %v1660, 1.442695
        %v1679 = vpow.pop %v1678
        %v1680 = vmul.f32 %v1661, 1.442695
        %v1681 = vpow.pop %v1680
        %v1682 = vmul.f32 %v1662, 1.442695
        %v1683 = vpow.pop %v1682
        %v1684 = vmul.f32 %v1663, 1.442695
        %v1685 = vpow.pop %v1684
        %v1686 = vmul.f32 %v1664, 1.442695
        %v1687 = vpow.pop %v1686
        %v1688 = vmul.f32 %v1665, 1.442695
        %v1689 = vpow.pop %v1688
        %v1690 = vmul.f32 %v1666, 1.442695
        %v1691 = vpow.pop %v1690
        %v1692 = vmul.f32 %v1667, 1.442695
        %v1693 = vpow.pop %v1692
        %v1694 = vmul.f32 %v1668, 1.442695
        %v1695 = vpow.pop %v1694
        %v1696 = vmul.f32 %v1669, 1.442695
        %v1697 = vpow.pop %v1696
        %v1698 = vmul.f32 %v1670, 1.442695
        %v1699 = vpow.pop %v1698
        %v1700 = vmul.f32 %v1671, 1.442695
        %v1701 = vpow.pop %v1700
        %v1702 = vmul.f32 %v1672, 1.442695
        %v1703 = vpow.pop %v1702
        %v1704 = vmul.f32 %v1673, 1.442695
        %v1705 = vpow.pop %v1704
        %1706 = vadd.xlane.f32.xlu0 %v1675
        %v1707 = vpop.xlane.xlu0 %1706
        %1708 = vadd.xlane.f32.xlu0 %v1677
        %v1709 = vpop.xlane.xlu0 %1708
        %1710 = vadd.xlane.f32.xlu0 %v1679
        %v1711 = vpop.xlane.xlu0 %1710
        %1712 = vadd.xlane.f32.xlu0 %v1681
        %v1713 = vpop.xlane.xlu0 %1712
        %1714 = vadd.xlane.f32.xlu0 %v1683
        %v1715 = vpop.xlane.xlu0 %1714
        %1716 = vadd.xlane.f32.xlu0 %v1685
        %v1717 = vpop.xlane.xlu0 %1716
        %1718 = vadd.xlane.f32.xlu0 %v1687
        %v1719 = vpop.xlane.xlu0 %1718
        %1720 = vadd.xlane.f32.xlu0 %v1689
        %v1721 = vpop.xlane.xlu0 %1720
        %1722 = vadd.xlane.f32.xlu0 %v1691
        %v1723 = vpop.xlane.xlu0 %1722
        %1724 = vadd.xlane.f32.xlu0 %v1693
        %v1725 = vpop.xlane.xlu0 %1724
        %1726 = vadd.xlane.f32.xlu0 %v1695
        %v1727 = vpop.xlane.xlu0 %1726
        %1728 = vadd.xlane.f32.xlu0 %v1697
        %v1729 = vpop.xlane.xlu0 %1728
        %1730 = vadd.xlane.f32.xlu0 %v1699
        %v1731 = vpop.xlane.xlu0 %1730
        %1732 = vadd.xlane.f32.xlu0 %v1701
        %v1733 = vpop.xlane.xlu0 %1732
        %1734 = vadd.xlane.f32.xlu0 %v1703
        %v1735 = vpop.xlane.xlu0 %1734
        %1736 = vadd.xlane.f32.xlu0 %v1705
        %v1737 = vpop.xlane.xlu0 %1736
        %v1738 = vpack.c.bf16 %v1677, %v1675
        %v1739 = vpack.c.bf16 %v1681, %v1679
        %v1740 = vpack.c.bf16 %v1685, %v1683
        %v1741 = vpack.c.bf16 %v1689, %v1687
        %v1742 = vpack.c.bf16 %v1693, %v1691
        %v1743 = vpack.c.bf16 %v1697, %v1695
        %v1744 = vpack.c.bf16 %v1701, %v1699
        %v1745 = vpack.c.bf16 %v1705, %v1703
        %1754 = vrot.lane.b32.xlu0 %v949, 96
        %v1755 = vpop.permute.xlu0 %1754
        %1756 = vrot.lane.b32.xlu0 %v950, 96
        %v1757 = vpop.permute.xlu0 %1756
        %1758 = vrot.lane.b32.xlu0 %v951, 96
        %v1759 = vpop.permute.xlu0 %1758
        %1760 = vrot.lane.b32.xlu0 %v952, 96
        %v1761 = vpop.permute.xlu0 %1760
        %1762 = vrot.lane.b32.xlu0 %v953, 96
        %v1763 = vpop.permute.xlu0 %1762
        %1764 = vrot.lane.b32.xlu0 %v954, 96
        %v1765 = vpop.permute.xlu0 %1764
        %1766 = vrot.lane.b32.xlu0 %v955, 96
        %v1767 = vpop.permute.xlu0 %1766
        %1768 = vrot.lane.b32.xlu0 %v956, 96
        %v1769 = vpop.permute.xlu0 %1768
        %1778 = vmatprep.subr.bf16.mxu0 0
        %1779 = vmatpush1.bf16.msra.mxu0 %v1769
        %1780 = vmatprep.subr.bf16.mxu0 0
        %1781 = vmatpush1.bf16.msra.mxu0 %v1767
        %1782 = vmatprep.subr.bf16.mxu0 0
        %1783 = vmatpush1.bf16.msra.mxu0 %v1765
        %1784 = vmatprep.subr.bf16.mxu0 0
        %1785 = vmatpush1.bf16.msra.mxu0 %v1763
        %1786 = vmatprep.subr.bf16.mxu0 0
        %1787 = vmatpush1.bf16.msra.mxu0 %v1761
        %1788 = vmatprep.subr.bf16.mxu0 0
        %1789 = vmatpush1.bf16.msra.mxu0 %v1759
        %1790 = vmatprep.subr.bf16.mxu0 0
        %1791 = vmatpush1.bf16.msra.mxu0 %v1757
        %1792 = vmatprep.subr.bf16.mxu0 0
        %1793 = vmatpush1.bf16.msra.mxu0 %v1755
        %1794 = vmatprep.subr.bf16.mxu0 0
        %1795 = vmatpush2.bf16.msra.mxu0 0
        %1796 = vmatprep.subr.bf16.mxu0 0
        %1797 = vmatpush2.bf16.msra.mxu0 0
        %1798 = vmatprep.subr.bf16.mxu0 0
        %1799 = vmatpush2.bf16.msra.mxu0 0
        %1800 = vmatprep.subr.bf16.mxu0 0
        %1801 = vmatpush2.bf16.msra.mxu0 0
        %1802 = vmatprep.subr.bf16.mxu0 0
        %1803 = vmatpush2.bf16.msra.mxu0 0
        %1804 = vmatprep.subr.bf16.mxu0 0
        %1805 = vmatpush2.bf16.msra.mxu0 0
        %1806 = vmatprep.subr.bf16.mxu0 0
        %1807 = vmatpush2.bf16.msra.mxu0 0
        %1808 = vmatprep.subr.bf16.mxu0 0
        %1809 = vmatpush2.bf16.msra.mxu0 0
        %1810 = vmatprep.mubr.bf16.mxu0 0
        %1811 = vmatmul.mubr.bf16.gmra.mxu0 %v1738
        %v1812 = vpop.f32.mrf.mxu0
        %v1813 = vadd.f32 0.0, %v1812
        %v1814 = vpop.f32.mrf.mxu0
        %v1815 = vpop.f32.mrf.mxu0
        %v1816 = vadd.f32 0.0, %v1815
        %v1817 = vpop.f32.mrf.mxu0
        %1818 = vmatprep.mubr.bf16.mxu0 0
        %1819 = vmatmul.mubr.bf16.gmra.mxu0 %v1739
        %v1820 = vpop.f32.mrf.mxu0
        %v1821 = vadd.f32 0.0, %v1820
        %v1822 = vpop.f32.mrf.mxu0
        %v1823 = vpop.f32.mrf.mxu0
        %v1824 = vadd.f32 0.0, %v1823
        %v1825 = vpop.f32.mrf.mxu0
        %1826 = vmatprep.mubr.bf16.mxu0 0
        %1827 = vmatmul.mubr.bf16.gmra.mxu0 %v1740
        %v1828 = vpop.f32.mrf.mxu0
        %v1829 = vadd.f32 0.0, %v1828
        %v1830 = vpop.f32.mrf.mxu0
        %v1831 = vpop.f32.mrf.mxu0
        %v1832 = vadd.f32 0.0, %v1831
        %v1833 = vpop.f32.mrf.mxu0
        %1834 = vmatprep.mubr.bf16.mxu0 0
        %1835 = vmatmul.mubr.bf16.gmra.mxu0 %v1741
        %v1836 = vpop.f32.mrf.mxu0
        %v1837 = vadd.f32 0.0, %v1836
        %v1838 = vpop.f32.mrf.mxu0
        %v1839 = vpop.f32.mrf.mxu0
        %v1840 = vadd.f32 0.0, %v1839
        %v1841 = vpop.f32.mrf.mxu0
        %1842 = vmatprep.mubr.bf16.mxu0 0
        %1843 = vmatmul.mubr.bf16.gmra.mxu0 %v1742
        %v1844 = vpop.f32.mrf.mxu0
        %v1845 = vadd.f32 0.0, %v1844
        %v1846 = vpop.f32.mrf.mxu0
        %v1847 = vpop.f32.mrf.mxu0
        %v1848 = vadd.f32 0.0, %v1847
        %v1849 = vpop.f32.mrf.mxu0
        %1850 = vmatprep.mubr.bf16.mxu0 0
        %1851 = vmatmul.mubr.bf16.gmra.mxu0 %v1743
        %v1852 = vpop.f32.mrf.mxu0
        %v1853 = vadd.f32 0.0, %v1852
        %v1854 = vpop.f32.mrf.mxu0
        %v1855 = vpop.f32.mrf.mxu0
        %v1856 = vadd.f32 0.0, %v1855
        %v1857 = vpop.f32.mrf.mxu0
        %1858 = vmatprep.mubr.bf16.mxu0 0
        %1859 = vmatmul.mubr.bf16.gmra.mxu0 %v1744
        %v1860 = vpop.f32.mrf.mxu0
        %v1861 = vadd.f32 0.0, %v1860
        %v1862 = vpop.f32.mrf.mxu0
        %v1863 = vpop.f32.mrf.mxu0
        %v1864 = vadd.f32 0.0, %v1863
        %v1865 = vpop.f32.mrf.mxu0
        %1866 = vmatprep.mubr.bf16.mxu0 0
        %1867 = vmatmul.mubr.bf16.gmra.mxu0 %v1745
        %v1868 = vpop.f32.mrf.mxu0
        %v1869 = vadd.f32 0.0, %v1868
        %v1870 = vpop.f32.mrf.mxu0
        %v1871 = vpop.f32.mrf.mxu0
        %v1872 = vadd.f32 0.0, %v1871
        %v1873 = vpop.f32.mrf.mxu0
        %1874 = vdwg.mxu0
        %v1875 = vrcp.pop %v1707
        %v1876 = vrcp.pop %v1709
        %v1877 = vrcp.pop %v1711
        %v1878 = vrcp.pop %v1713
        %v1879 = vrcp.pop %v1715
        %v1880 = vrcp.pop %v1717
        %v1881 = vrcp.pop %v1719
        %v1882 = vrcp.pop %v1721
        %v1883 = vrcp.pop %v1723
        %v1884 = vrcp.pop %v1725
        %v1885 = vrcp.pop %v1727
        %v1886 = vrcp.pop %v1729
        %v1887 = vrcp.pop %v1731
        %v1888 = vrcp.pop %v1733
        %v1889 = vrcp.pop %v1735
        %v1890 = vrcp.pop %v1737
        %v1891 = vmul.f32 %v1813, %v1875
        %v1892 = vmul.f32 %v1816, %v1876
        %v1893 = vmul.f32 %v1821, %v1877
        %v1894 = vmul.f32 %v1824, %v1878
        %v1895 = vmul.f32 %v1829, %v1879
        %v1896 = vmul.f32 %v1832, %v1880
        %v1897 = vmul.f32 %v1837, %v1881
        %v1898 = vmul.f32 %v1840, %v1882
        %v1899 = vmul.f32 %v1845, %v1883
        %v1900 = vmul.f32 %v1848, %v1884
        %v1901 = vmul.f32 %v1853, %v1885
        %v1902 = vmul.f32 %v1856, %v1886
        %v1903 = vmul.f32 %v1861, %v1887
        %v1904 = vmul.f32 %v1864, %v1888
        %v1905 = vmul.f32 %v1869, %v1889
        %v1906 = vmul.f32 %v1872, %v1890
        %v1907 = vpack.c.bf16 %v1892, %v1891
        %v1908 = vpack.c.bf16 %v1894, %v1893
        %v1909 = vpack.c.bf16 %v1896, %v1895
        %v1910 = vpack.c.bf16 %v1898, %v1897
        %v1911 = vpack.c.bf16 %v1900, %v1899
        %v1912 = vpack.c.bf16 %v1902, %v1901
        %v1913 = vpack.c.bf16 %v1904, %v1903
        %v1914 = vpack.c.bf16 %v1906, %v1905
        %v1923 = vunpack.c.l.b16 %v1907
        %v1924 = vunpack.c.h.b16 %v1907
        %v1925 = vunpack.c.l.b16 %v1908
        %v1926 = vunpack.c.h.b16 %v1908
        %v1927 = vunpack.c.l.b16 %v1909
        %v1928 = vunpack.c.h.b16 %v1909
        %v1929 = vunpack.c.l.b16 %v1910
        %v1930 = vunpack.c.h.b16 %v1910
        %v1931 = vunpack.c.l.b16 %v1911
        %v1932 = vunpack.c.h.b16 %v1911
        %v1933 = vunpack.c.l.b16 %v1912
        %v1934 = vunpack.c.h.b16 %v1912
        %v1935 = vunpack.c.l.b16 %v1913
        %v1936 = vunpack.c.h.b16 %v1913
        %v1937 = vunpack.c.l.b16 %v1914
        %v1938 = vunpack.c.h.b16 %v1914
        %v1939 = vpack.c.b16 %v1923, %v1923
        %v1940 = vpack.c.b16 %v1924, %v1924
        %v1941 = vpack.c.b16 %v1925, %v1925
        %v1942 = vpack.c.b16 %v1926, %v1926
        %v1943 = vpack.c.b16 %v1927, %v1927
        %v1944 = vpack.c.b16 %v1928, %v1928
        %v1945 = vpack.c.b16 %v1929, %v1929
        %v1946 = vpack.c.b16 %v1930, %v1930
        %v1947 = vpack.c.b16 %v1931, %v1931
        %v1948 = vpack.c.b16 %v1932, %v1932
        %v1949 = vpack.c.b16 %v1933, %v1933
        %v1950 = vpack.c.b16 %v1934, %v1934
        %v1951 = vpack.c.b16 %v1935, %v1935
        %v1952 = vpack.c.b16 %v1936, %v1936
        %v1953 = vpack.c.b16 %v1937, %v1937
        %v1954 = vpack.c.b16 %v1938, %v1938
        %1955 = vrot.lane.b32.xlu0 %v1939, 32
        %v1956 = vpop.permute.xlu0 %1955
        %1957 = vrot.lane.b32.xlu0 %v1940, 32
        %v1958 = vpop.permute.xlu0 %1957
        %1959 = vrot.lane.b32.xlu0 %v1941, 32
        %v1960 = vpop.permute.xlu0 %1959
        %1961 = vrot.lane.b32.xlu0 %v1942, 32
        %v1962 = vpop.permute.xlu0 %1961
        %1963 = vrot.lane.b32.xlu0 %v1943, 32
        %v1964 = vpop.permute.xlu0 %1963
        %1965 = vrot.lane.b32.xlu0 %v1944, 32
        %v1966 = vpop.permute.xlu0 %1965
        %1967 = vrot.lane.b32.xlu0 %v1945, 32
        %v1968 = vpop.permute.xlu0 %1967
        %1969 = vrot.lane.b32.xlu0 %v1946, 32
        %v1970 = vpop.permute.xlu0 %1969
        %1971 = vrot.lane.b32.xlu0 %v1947, 32
        %v1972 = vpop.permute.xlu0 %1971
        %1973 = vrot.lane.b32.xlu0 %v1948, 32
        %v1974 = vpop.permute.xlu0 %1973
        %1975 = vrot.lane.b32.xlu0 %v1949, 32
        %v1976 = vpop.permute.xlu0 %1975
        %1977 = vrot.lane.b32.xlu0 %v1950, 32
        %v1978 = vpop.permute.xlu0 %1977
        %1979 = vrot.lane.b32.xlu0 %v1951, 32
        %v1980 = vpop.permute.xlu0 %1979
        %1981 = vrot.lane.b32.xlu0 %v1952, 32
        %v1982 = vpop.permute.xlu0 %1981
        %1983 = vrot.lane.b32.xlu0 %v1953, 32
        %v1984 = vpop.permute.xlu0 %1983
        %1985 = vrot.lane.b32.xlu0 %v1954, 32
        %v1986 = vpop.permute.xlu0 %1985
        %vm2003 = vcmask 519424
        %2004 = vst.msk [vmem:[#allocation2] sm:$0xf] %vm2003, %v1956
        %2005 = vst.msk [vmem:[#allocation2 + $0x4] sm:$0xf] %vm2003, %v1958
        %2006 = vst.msk [vmem:[#allocation2 + $0x8] sm:$0xf] %vm2003, %v1960
        %2007 = vst.msk [vmem:[#allocation2 + $0xc] sm:$0xf] %vm2003, %v1962
        %2008 = vst.msk [vmem:[#allocation2 + $0x10] sm:$0xf] %vm2003, %v1964
        %2009 = vst.msk [vmem:[#allocation2 + $0x14] sm:$0xf] %vm2003, %v1966
        %2010 = vst.msk [vmem:[#allocation2 + $0x18] sm:$0xf] %vm2003, %v1968
        %2011 = vst.msk [vmem:[#allocation2 + $0x1c] sm:$0xf] %vm2003, %v1970
        %2012 = vst.msk [vmem:[#allocation2 + $0x20] sm:$0xf] %vm2003, %v1972
        %2013 = vst.msk [vmem:[#allocation2 + $0x24] sm:$0xf] %vm2003, %v1974
        %2014 = vst.msk [vmem:[#allocation2 + $0x28] sm:$0xf] %vm2003, %v1976
        %2015 = vst.msk [vmem:[#allocation2 + $0x2c] sm:$0xf] %vm2003, %v1978
        %2016 = vst.msk [vmem:[#allocation2 + $0x30] sm:$0xf] %vm2003, %v1980
        %2017 = vst.msk [vmem:[#allocation2 + $0x34] sm:$0xf] %vm2003, %v1982
        %2018 = vst.msk [vmem:[#allocation2 + $0x38] sm:$0xf] %vm2003, %v1984
        %2019 = vst.msk [vmem:[#allocation2 + $0x3c] sm:$0xf] %vm2003, %v1986
        %2020 = vrot.lane.b32.xlu0 %v933, 64
        %v2021 = vpop.permute.xlu0 %2020
        %2022 = vrot.lane.b32.xlu0 %v934, 64
        %v2023 = vpop.permute.xlu0 %2022
        %2024 = vrot.lane.b32.xlu0 %v935, 64
        %v2025 = vpop.permute.xlu0 %2024
        %2026 = vrot.lane.b32.xlu0 %v936, 64
        %v2027 = vpop.permute.xlu0 %2026
        %2028 = vrot.lane.b32.xlu0 %v937, 64
        %v2029 = vpop.permute.xlu0 %2028
        %2030 = vrot.lane.b32.xlu0 %v938, 64
        %v2031 = vpop.permute.xlu0 %2030
        %2032 = vrot.lane.b32.xlu0 %v939, 64
        %v2033 = vpop.permute.xlu0 %2032
        %2034 = vrot.lane.b32.xlu0 %v940, 64
        %v2035 = vpop.permute.xlu0 %2034
        %2036 = vrot.lane.b32.xlu0 %v941, 64
        %v2037 = vpop.permute.xlu0 %2036
        %2038 = vrot.lane.b32.xlu0 %v942, 64
        %v2039 = vpop.permute.xlu0 %2038
        %2040 = vrot.lane.b32.xlu0 %v943, 64
        %v2041 = vpop.permute.xlu0 %2040
        %2042 = vrot.lane.b32.xlu0 %v944, 64
        %v2043 = vpop.permute.xlu0 %2042
        %2044 = vrot.lane.b32.xlu0 %v945, 64
        %v2045 = vpop.permute.xlu0 %2044
        %2046 = vrot.lane.b32.xlu0 %v946, 64
        %v2047 = vpop.permute.xlu0 %2046
        %2048 = vrot.lane.b32.xlu0 %v947, 64
        %v2049 = vpop.permute.xlu0 %2048
        %2050 = vrot.lane.b32.xlu0 %v948, 64
        %v2051 = vpop.permute.xlu0 %2050
        %v2053 = vsel %vm957, %v2021, 0
        %v2056 = vsel %vm957, %v2023, 0
        %v2059 = vsel %vm957, %v2025, 0
        %v2062 = vsel %vm957, %v2027, 0
        %v2065 = vsel %vm957, %v2029, 0
        %v2068 = vsel %vm957, %v2031, 0
        %v2071 = vsel %vm957, %v2033, 0
        %v2074 = vsel %vm957, %v2035, 0
        %v2077 = vsel %vm957, %v2037, 0
        %v2080 = vsel %vm957, %v2039, 0
        %v2083 = vsel %vm957, %v2041, 0
        %v2086 = vsel %vm957, %v2043, 0
        %v2089 = vsel %vm957, %v2045, 0
        %v2092 = vsel %vm957, %v2047, 0
        %v2095 = vsel %vm957, %v2049, 0
        %v2098 = vsel %vm957, %v2051, 0
        %2100 = vmatprep.subr.bf16.mxu0 0
        %2101 = vmatpush1.bf16.xpose.msra.mxu0 %v2098
        %2102 = vmatprep.subr.bf16.mxu0 0
        %2103 = vmatpush1.bf16.xpose.msra.mxu0 %v2095
        %2104 = vmatprep.subr.bf16.mxu0 0
        %2105 = vmatpush1.bf16.xpose.msra.mxu0 %v2092
        %2106 = vmatprep.subr.bf16.mxu0 0
        %2107 = vmatpush1.bf16.xpose.msra.mxu0 %v2089
        %2108 = vmatprep.subr.bf16.mxu0 0
        %2109 = vmatpush1.bf16.xpose.msra.mxu0 %v2086
        %2110 = vmatprep.subr.bf16.mxu0 0
        %2111 = vmatpush1.bf16.xpose.msra.mxu0 %v2083
        %2112 = vmatprep.subr.bf16.mxu0 0
        %2113 = vmatpush1.bf16.xpose.msra.mxu0 %v2080
        %2114 = vmatprep.subr.bf16.mxu0 0
        %2115 = vmatpush1.bf16.xpose.msra.mxu0 %v2077
        %2116 = vmatprep.subr.bf16.mxu0 0
        %2117 = vmatpush2.bf16.xpose.msra.mxu0 0
        %2118 = vmatprep.subr.bf16.mxu0 0
        %2119 = vmatpush2.bf16.xpose.msra.mxu0 0
        %2120 = vmatprep.subr.bf16.mxu0 0
        %2121 = vmatpush2.bf16.xpose.msra.mxu0 0
        %2122 = vmatprep.subr.bf16.mxu0 0
        %2123 = vmatpush2.bf16.xpose.msra.mxu0 0
        %2124 = vmatprep.subr.bf16.mxu0 0
        %2125 = vmatpush2.bf16.xpose.msra.mxu0 0
        %2126 = vmatprep.subr.bf16.mxu0 0
        %2127 = vmatpush2.bf16.xpose.msra.mxu0 0
        %2128 = vmatprep.subr.bf16.mxu0 0
        %2129 = vmatpush2.bf16.xpose.msra.mxu0 0
        %2130 = vmatprep.subr.bf16.mxu0 0
        %2131 = vmatpush2.bf16.xpose.msra.mxu0 0
        %2132 = vmatprep.mubr.bf16.mxu0 0
        %2133 = vmatmul.mubr.bf16.gmra.mxu0 %v2053
        %v2134 = vpop.f32.mrf.mxu0
        %v2135 = vadd.f32 0.0, %v2134
        %v2136 = vpop.f32.mrf.mxu0
        %v2137 = vpop.f32.mrf.mxu0
        %v2138 = vadd.f32 0.0, %v2137
        %v2139 = vpop.f32.mrf.mxu0
        %2140 = vmatprep.mubr.bf16.mxu0 0
        %2141 = vmatmul.mubr.bf16.gmra.mxu0 %v2056
        %v2142 = vpop.f32.mrf.mxu0
        %v2143 = vadd.f32 0.0, %v2142
        %v2144 = vpop.f32.mrf.mxu0
        %v2145 = vpop.f32.mrf.mxu0
        %v2146 = vadd.f32 0.0, %v2145
        %v2147 = vpop.f32.mrf.mxu0
        %2148 = vmatprep.mubr.bf16.mxu0 0
        %2149 = vmatmul.mubr.bf16.gmra.mxu0 %v2059
        %v2150 = vpop.f32.mrf.mxu0
        %v2151 = vadd.f32 0.0, %v2150
        %v2152 = vpop.f32.mrf.mxu0
        %v2153 = vpop.f32.mrf.mxu0
        %v2154 = vadd.f32 0.0, %v2153
        %v2155 = vpop.f32.mrf.mxu0
        %2156 = vmatprep.mubr.bf16.mxu0 0
        %2157 = vmatmul.mubr.bf16.gmra.mxu0 %v2062
        %v2158 = vpop.f32.mrf.mxu0
        %v2159 = vadd.f32 0.0, %v2158
        %v2160 = vpop.f32.mrf.mxu0
        %v2161 = vpop.f32.mrf.mxu0
        %v2162 = vadd.f32 0.0, %v2161
        %v2163 = vpop.f32.mrf.mxu0
        %2164 = vmatprep.mubr.bf16.mxu0 0
        %2165 = vmatmul.mubr.bf16.gmra.mxu0 %v2065
        %v2166 = vpop.f32.mrf.mxu0
        %v2167 = vadd.f32 0.0, %v2166
        %v2168 = vpop.f32.mrf.mxu0
        %v2169 = vpop.f32.mrf.mxu0
        %v2170 = vadd.f32 0.0, %v2169
        %v2171 = vpop.f32.mrf.mxu0
        %2172 = vmatprep.mubr.bf16.mxu0 0
        %2173 = vmatmul.mubr.bf16.gmra.mxu0 %v2068
        %v2174 = vpop.f32.mrf.mxu0
        %v2175 = vadd.f32 0.0, %v2174
        %v2176 = vpop.f32.mrf.mxu0
        %v2177 = vpop.f32.mrf.mxu0
        %v2178 = vadd.f32 0.0, %v2177
        %v2179 = vpop.f32.mrf.mxu0
        %2180 = vmatprep.mubr.bf16.mxu0 0
        %2181 = vmatmul.mubr.bf16.gmra.mxu0 %v2071
        %v2182 = vpop.f32.mrf.mxu0
        %v2183 = vadd.f32 0.0, %v2182
        %v2184 = vpop.f32.mrf.mxu0
        %v2185 = vpop.f32.mrf.mxu0
        %v2186 = vadd.f32 0.0, %v2185
        %v2187 = vpop.f32.mrf.mxu0
        %2188 = vmatprep.mubr.bf16.mxu0 0
        %2189 = vmatmul.mubr.bf16.gmra.mxu0 %v2074
        %v2190 = vpop.f32.mrf.mxu0
        %v2191 = vadd.f32 0.0, %v2190
        %v2192 = vpop.f32.mrf.mxu0
        %v2193 = vpop.f32.mrf.mxu0
        %v2194 = vadd.f32 0.0, %v2193
        %v2195 = vpop.f32.mrf.mxu0
        %2196 = vdwg.mxu0
        %2197 = vmax.xlane.f32.xlu0 %v2135
        %v2198 = vpop.xlane.xlu0 %2197
        %2199 = vmax.xlane.f32.xlu0 %v2138
        %v2200 = vpop.xlane.xlu0 %2199
        %2201 = vmax.xlane.f32.xlu0 %v2143
        %v2202 = vpop.xlane.xlu0 %2201
        %2203 = vmax.xlane.f32.xlu0 %v2146
        %v2204 = vpop.xlane.xlu0 %2203
        %2205 = vmax.xlane.f32.xlu0 %v2151
        %v2206 = vpop.xlane.xlu0 %2205
        %2207 = vmax.xlane.f32.xlu0 %v2154
        %v2208 = vpop.xlane.xlu0 %2207
        %2209 = vmax.xlane.f32.xlu0 %v2159
        %v2210 = vpop.xlane.xlu0 %2209
        %2211 = vmax.xlane.f32.xlu0 %v2162
        %v2212 = vpop.xlane.xlu0 %2211
        %2213 = vmax.xlane.f32.xlu0 %v2167
        %v2214 = vpop.xlane.xlu0 %2213
        %2215 = vmax.xlane.f32.xlu0 %v2170
        %v2216 = vpop.xlane.xlu0 %2215
        %2217 = vmax.xlane.f32.xlu0 %v2175
        %v2218 = vpop.xlane.xlu0 %2217
        %2219 = vmax.xlane.f32.xlu0 %v2178
        %v2220 = vpop.xlane.xlu0 %2219
        %2221 = vmax.xlane.f32.xlu0 %v2183
        %v2222 = vpop.xlane.xlu0 %2221
        %2223 = vmax.xlane.f32.xlu0 %v2186
        %v2224 = vpop.xlane.xlu0 %2223
        %2225 = vmax.xlane.f32.xlu0 %v2191
        %v2226 = vpop.xlane.xlu0 %2225
        %2227 = vmax.xlane.f32.xlu0 %v2194
        %v2228 = vpop.xlane.xlu0 %2227
        %v2229 = vsub.f32 %v2135, %v2198
        %v2230 = vsub.f32 %v2138, %v2200
        %v2231 = vsub.f32 %v2143, %v2202
        %v2232 = vsub.f32 %v2146, %v2204
        %v2233 = vsub.f32 %v2151, %v2206
        %v2234 = vsub.f32 %v2154, %v2208
        %v2235 = vsub.f32 %v2159, %v2210
        %v2236 = vsub.f32 %v2162, %v2212
        %v2237 = vsub.f32 %v2167, %v2214
        %v2238 = vsub.f32 %v2170, %v2216
        %v2239 = vsub.f32 %v2175, %v2218
        %v2240 = vsub.f32 %v2178, %v2220
        %v2241 = vsub.f32 %v2183, %v2222
        %v2242 = vsub.f32 %v2186, %v2224
        %v2243 = vsub.f32 %v2191, %v2226
        %v2244 = vsub.f32 %v2194, %v2228
        %v2245 = vmul.f32 %v2229, 1.442695
        %v2246 = vpow.pop %v2245
        %v2247 = vmul.f32 %v2230, 1.442695
        %v2248 = vpow.pop %v2247
        %v2249 = vmul.f32 %v2231, 1.442695
        %v2250 = vpow.pop %v2249
        %v2251 = vmul.f32 %v2232, 1.442695
        %v2252 = vpow.pop %v2251
        %v2253 = vmul.f32 %v2233, 1.442695
        %v2254 = vpow.pop %v2253
        %v2255 = vmul.f32 %v2234, 1.442695
        %v2256 = vpow.pop %v2255
        %v2257 = vmul.f32 %v2235, 1.442695
        %v2258 = vpow.pop %v2257
        %v2259 = vmul.f32 %v2236, 1.442695
        %v2260 = vpow.pop %v2259
        %v2261 = vmul.f32 %v2237, 1.442695
        %v2262 = vpow.pop %v2261
        %v2263 = vmul.f32 %v2238, 1.442695
        %v2264 = vpow.pop %v2263
        %v2265 = vmul.f32 %v2239, 1.442695
        %v2266 = vpow.pop %v2265
        %v2267 = vmul.f32 %v2240, 1.442695
        %v2268 = vpow.pop %v2267
        %v2269 = vmul.f32 %v2241, 1.442695
        %v2270 = vpow.pop %v2269
        %v2271 = vmul.f32 %v2242, 1.442695
        %v2272 = vpow.pop %v2271
        %v2273 = vmul.f32 %v2243, 1.442695
        %v2274 = vpow.pop %v2273
        %v2275 = vmul.f32 %v2244, 1.442695
        %v2276 = vpow.pop %v2275
        %2277 = vadd.xlane.f32.xlu0 %v2246
        %v2278 = vpop.xlane.xlu0 %2277
        %2279 = vadd.xlane.f32.xlu0 %v2248
        %v2280 = vpop.xlane.xlu0 %2279
        %2281 = vadd.xlane.f32.xlu0 %v2250
        %v2282 = vpop.xlane.xlu0 %2281
        %2283 = vadd.xlane.f32.xlu0 %v2252
        %v2284 = vpop.xlane.xlu0 %2283
        %2285 = vadd.xlane.f32.xlu0 %v2254
        %v2286 = vpop.xlane.xlu0 %2285
        %2287 = vadd.xlane.f32.xlu0 %v2256
        %v2288 = vpop.xlane.xlu0 %2287
        %2289 = vadd.xlane.f32.xlu0 %v2258
        %v2290 = vpop.xlane.xlu0 %2289
        %2291 = vadd.xlane.f32.xlu0 %v2260
        %v2292 = vpop.xlane.xlu0 %2291
        %2293 = vadd.xlane.f32.xlu0 %v2262
        %v2294 = vpop.xlane.xlu0 %2293
        %2295 = vadd.xlane.f32.xlu0 %v2264
        %v2296 = vpop.xlane.xlu0 %2295
        %2297 = vadd.xlane.f32.xlu0 %v2266
        %v2298 = vpop.xlane.xlu0 %2297
        %2299 = vadd.xlane.f32.xlu0 %v2268
        %v2300 = vpop.xlane.xlu0 %2299
        %2301 = vadd.xlane.f32.xlu0 %v2270
        %v2302 = vpop.xlane.xlu0 %2301
        %2303 = vadd.xlane.f32.xlu0 %v2272
        %v2304 = vpop.xlane.xlu0 %2303
        %2305 = vadd.xlane.f32.xlu0 %v2274
        %v2306 = vpop.xlane.xlu0 %2305
        %2307 = vadd.xlane.f32.xlu0 %v2276
        %v2308 = vpop.xlane.xlu0 %2307
        %v2309 = vpack.c.bf16 %v2248, %v2246
        %v2310 = vpack.c.bf16 %v2252, %v2250
        %v2311 = vpack.c.bf16 %v2256, %v2254
        %v2312 = vpack.c.bf16 %v2260, %v2258
        %v2313 = vpack.c.bf16 %v2264, %v2262
        %v2314 = vpack.c.bf16 %v2268, %v2266
        %v2315 = vpack.c.bf16 %v2272, %v2270
        %v2316 = vpack.c.bf16 %v2276, %v2274
        %2317 = vrot.lane.b32.xlu0 %v949, 64
        %v2318 = vpop.permute.xlu0 %2317
        %2319 = vrot.lane.b32.xlu0 %v950, 64
        %v2320 = vpop.permute.xlu0 %2319
        %2321 = vrot.lane.b32.xlu0 %v951, 64
        %v2322 = vpop.permute.xlu0 %2321
        %2323 = vrot.lane.b32.xlu0 %v952, 64
        %v2324 = vpop.permute.xlu0 %2323
        %2325 = vrot.lane.b32.xlu0 %v953, 64
        %v2326 = vpop.permute.xlu0 %2325
        %2327 = vrot.lane.b32.xlu0 %v954, 64
        %v2328 = vpop.permute.xlu0 %2327
        %2329 = vrot.lane.b32.xlu0 %v955, 64
        %v2330 = vpop.permute.xlu0 %2329
        %2331 = vrot.lane.b32.xlu0 %v956, 64
        %v2332 = vpop.permute.xlu0 %2331
        %2341 = vmatprep.subr.bf16.mxu0 0
        %2342 = vmatpush1.bf16.msra.mxu0 %v2332
        %2343 = vmatprep.subr.bf16.mxu0 0
        %2344 = vmatpush1.bf16.msra.mxu0 %v2330
        %2345 = vmatprep.subr.bf16.mxu0 0
        %2346 = vmatpush1.bf16.msra.mxu0 %v2328
        %2347 = vmatprep.subr.bf16.mxu0 0
        %2348 = vmatpush1.bf16.msra.mxu0 %v2326
        %2349 = vmatprep.subr.bf16.mxu0 0
        %2350 = vmatpush1.bf16.msra.mxu0 %v2324
        %2351 = vmatprep.subr.bf16.mxu0 0
        %2352 = vmatpush1.bf16.msra.mxu0 %v2322
        %2353 = vmatprep.subr.bf16.mxu0 0
        %2354 = vmatpush1.bf16.msra.mxu0 %v2320
        %2355 = vmatprep.subr.bf16.mxu0 0
        %2356 = vmatpush1.bf16.msra.mxu0 %v2318
        %2357 = vmatprep.subr.bf16.mxu0 0
        %2358 = vmatpush2.bf16.msra.mxu0 0
        %2359 = vmatprep.subr.bf16.mxu0 0
        %2360 = vmatpush2.bf16.msra.mxu0 0
        %2361 = vmatprep.subr.bf16.mxu0 0
        %2362 = vmatpush2.bf16.msra.mxu0 0
        %2363 = vmatprep.subr.bf16.mxu0 0
        %2364 = vmatpush2.bf16.msra.mxu0 0
        %2365 = vmatprep.subr.bf16.mxu0 0
        %2366 = vmatpush2.bf16.msra.mxu0 0
        %2367 = vmatprep.subr.bf16.mxu0 0
        %2368 = vmatpush2.bf16.msra.mxu0 0
        %2369 = vmatprep.subr.bf16.mxu0 0
        %2370 = vmatpush2.bf16.msra.mxu0 0
        %2371 = vmatprep.subr.bf16.mxu0 0
        %2372 = vmatpush2.bf16.msra.mxu0 0
        %2373 = vmatprep.mubr.bf16.mxu0 0
        %2374 = vmatmul.mubr.bf16.gmra.mxu0 %v2309
        %v2375 = vpop.f32.mrf.mxu0
        %v2376 = vadd.f32 0.0, %v2375
        %v2377 = vpop.f32.mrf.mxu0
        %v2378 = vpop.f32.mrf.mxu0
        %v2379 = vadd.f32 0.0, %v2378
        %v2380 = vpop.f32.mrf.mxu0
        %2381 = vmatprep.mubr.bf16.mxu0 0
        %2382 = vmatmul.mubr.bf16.gmra.mxu0 %v2310
        %v2383 = vpop.f32.mrf.mxu0
        %v2384 = vadd.f32 0.0, %v2383
        %v2385 = vpop.f32.mrf.mxu0
        %v2386 = vpop.f32.mrf.mxu0
        %v2387 = vadd.f32 0.0, %v2386
        %v2388 = vpop.f32.mrf.mxu0
        %2389 = vmatprep.mubr.bf16.mxu0 0
        %2390 = vmatmul.mubr.bf16.gmra.mxu0 %v2311
        %v2391 = vpop.f32.mrf.mxu0
        %v2392 = vadd.f32 0.0, %v2391
        %v2393 = vpop.f32.mrf.mxu0
        %v2394 = vpop.f32.mrf.mxu0
        %v2395 = vadd.f32 0.0, %v2394
        %v2396 = vpop.f32.mrf.mxu0
        %2397 = vmatprep.mubr.bf16.mxu0 0
        %2398 = vmatmul.mubr.bf16.gmra.mxu0 %v2312
        %v2399 = vpop.f32.mrf.mxu0
        %v2400 = vadd.f32 0.0, %v2399
        %v2401 = vpop.f32.mrf.mxu0
        %v2402 = vpop.f32.mrf.mxu0
        %v2403 = vadd.f32 0.0, %v2402
        %v2404 = vpop.f32.mrf.mxu0
        %2405 = vmatprep.mubr.bf16.mxu0 0
        %2406 = vmatmul.mubr.bf16.gmra.mxu0 %v2313
        %v2407 = vpop.f32.mrf.mxu0
        %v2408 = vadd.f32 0.0, %v2407
        %v2409 = vpop.f32.mrf.mxu0
        %v2410 = vpop.f32.mrf.mxu0
        %v2411 = vadd.f32 0.0, %v2410
        %v2412 = vpop.f32.mrf.mxu0
        %2413 = vmatprep.mubr.bf16.mxu0 0
        %2414 = vmatmul.mubr.bf16.gmra.mxu0 %v2314
        %v2415 = vpop.f32.mrf.mxu0
        %v2416 = vadd.f32 0.0, %v2415
        %v2417 = vpop.f32.mrf.mxu0
        %v2418 = vpop.f32.mrf.mxu0
        %v2419 = vadd.f32 0.0, %v2418
        %v2420 = vpop.f32.mrf.mxu0
        %2421 = vmatprep.mubr.bf16.mxu0 0
        %2422 = vmatmul.mubr.bf16.gmra.mxu0 %v2315
        %v2423 = vpop.f32.mrf.mxu0
        %v2424 = vadd.f32 0.0, %v2423
        %v2425 = vpop.f32.mrf.mxu0
        %v2426 = vpop.f32.mrf.mxu0
        %v2427 = vadd.f32 0.0, %v2426
        %v2428 = vpop.f32.mrf.mxu0
        %2429 = vmatprep.mubr.bf16.mxu0 0
        %2430 = vmatmul.mubr.bf16.gmra.mxu0 %v2316
        %v2431 = vpop.f32.mrf.mxu0
        %v2432 = vadd.f32 0.0, %v2431
        %v2433 = vpop.f32.mrf.mxu0
        %v2434 = vpop.f32.mrf.mxu0
        %v2435 = vadd.f32 0.0, %v2434
        %v2436 = vpop.f32.mrf.mxu0
        %2437 = vdwg.mxu0
        %v2438 = vrcp.pop %v2278
        %v2439 = vrcp.pop %v2280
        %v2440 = vrcp.pop %v2282
        %v2441 = vrcp.pop %v2284
        %v2442 = vrcp.pop %v2286
        %v2443 = vrcp.pop %v2288
        %v2444 = vrcp.pop %v2290
        %v2445 = vrcp.pop %v2292
        %v2446 = vrcp.pop %v2294
        %v2447 = vrcp.pop %v2296
        %v2448 = vrcp.pop %v2298
        %v2449 = vrcp.pop %v2300
        %v2450 = vrcp.pop %v2302
        %v2451 = vrcp.pop %v2304
        %v2452 = vrcp.pop %v2306
        %v2453 = vrcp.pop %v2308
        %v2454 = vmul.f32 %v2376, %v2438
        %v2455 = vmul.f32 %v2379, %v2439
        %v2456 = vmul.f32 %v2384, %v2440
        %v2457 = vmul.f32 %v2387, %v2441
        %v2458 = vmul.f32 %v2392, %v2442
        %v2459 = vmul.f32 %v2395, %v2443
        %v2460 = vmul.f32 %v2400, %v2444
        %v2461 = vmul.f32 %v2403, %v2445
        %v2462 = vmul.f32 %v2408, %v2446
        %v2463 = vmul.f32 %v2411, %v2447
        %v2464 = vmul.f32 %v2416, %v2448
        %v2465 = vmul.f32 %v2419, %v2449
        %v2466 = vmul.f32 %v2424, %v2450
        %v2467 = vmul.f32 %v2427, %v2451
        %v2468 = vmul.f32 %v2432, %v2452
        %v2469 = vmul.f32 %v2435, %v2453
        %v2470 = vpack.c.bf16 %v2455, %v2454
        %v2471 = vpack.c.bf16 %v2457, %v2456
        %v2472 = vpack.c.bf16 %v2459, %v2458
        %v2473 = vpack.c.bf16 %v2461, %v2460
        %v2474 = vpack.c.bf16 %v2463, %v2462
        %v2475 = vpack.c.bf16 %v2465, %v2464
        %v2476 = vpack.c.bf16 %v2467, %v2466
        %v2477 = vpack.c.bf16 %v2469, %v2468
        %v2486 = vunpack.c.l.b16 %v2470
        %v2487 = vunpack.c.h.b16 %v2470
        %v2488 = vunpack.c.l.b16 %v2471
        %v2489 = vunpack.c.h.b16 %v2471
        %v2490 = vunpack.c.l.b16 %v2472
        %v2491 = vunpack.c.h.b16 %v2472
        %v2492 = vunpack.c.l.b16 %v2473
        %v2493 = vunpack.c.h.b16 %v2473
        %v2494 = vunpack.c.l.b16 %v2474
        %v2495 = vunpack.c.h.b16 %v2474
        %v2496 = vunpack.c.l.b16 %v2475
        %v2497 = vunpack.c.h.b16 %v2475
        %v2498 = vunpack.c.l.b16 %v2476
        %v2499 = vunpack.c.h.b16 %v2476
        %v2500 = vunpack.c.l.b16 %v2477
        %v2501 = vunpack.c.h.b16 %v2477
        %v2502 = vpack.c.b16 %v2486, %v2486
        %v2503 = vpack.c.b16 %v2487, %v2487
        %v2504 = vpack.c.b16 %v2488, %v2488
        %v2505 = vpack.c.b16 %v2489, %v2489
        %v2506 = vpack.c.b16 %v2490, %v2490
        %v2507 = vpack.c.b16 %v2491, %v2491
        %v2508 = vpack.c.b16 %v2492, %v2492
        %v2509 = vpack.c.b16 %v2493, %v2493
        %v2510 = vpack.c.b16 %v2494, %v2494
        %v2511 = vpack.c.b16 %v2495, %v2495
        %v2512 = vpack.c.b16 %v2496, %v2496
        %v2513 = vpack.c.b16 %v2497, %v2497
        %v2514 = vpack.c.b16 %v2498, %v2498
        %v2515 = vpack.c.b16 %v2499, %v2499
        %v2516 = vpack.c.b16 %v2500, %v2500
        %v2517 = vpack.c.b16 %v2501, %v2501
        %2518 = vrot.lane.b32.xlu0 %v2502, 64
        %v2519 = vpop.permute.xlu0 %2518
        %2520 = vrot.lane.b32.xlu0 %v2503, 64
        %v2521 = vpop.permute.xlu0 %2520
        %2522 = vrot.lane.b32.xlu0 %v2504, 64
        %v2523 = vpop.permute.xlu0 %2522
        %2524 = vrot.lane.b32.xlu0 %v2505, 64
        %v2525 = vpop.permute.xlu0 %2524
        %2526 = vrot.lane.b32.xlu0 %v2506, 64
        %v2527 = vpop.permute.xlu0 %2526
        %2528 = vrot.lane.b32.xlu0 %v2507, 64
        %v2529 = vpop.permute.xlu0 %2528
        %2530 = vrot.lane.b32.xlu0 %v2508, 64
        %v2531 = vpop.permute.xlu0 %2530
        %2532 = vrot.lane.b32.xlu0 %v2509, 64
        %v2533 = vpop.permute.xlu0 %2532
        %2534 = vrot.lane.b32.xlu0 %v2510, 64
        %v2535 = vpop.permute.xlu0 %2534
        %2536 = vrot.lane.b32.xlu0 %v2511, 64
        %v2537 = vpop.permute.xlu0 %2536
        %2538 = vrot.lane.b32.xlu0 %v2512, 64
        %v2539 = vpop.permute.xlu0 %2538
        %2540 = vrot.lane.b32.xlu0 %v2513, 64
        %v2541 = vpop.permute.xlu0 %2540
        %2542 = vrot.lane.b32.xlu0 %v2514, 64
        %v2543 = vpop.permute.xlu0 %2542
        %2544 = vrot.lane.b32.xlu0 %v2515, 64
        %v2545 = vpop.permute.xlu0 %2544
        %2546 = vrot.lane.b32.xlu0 %v2516, 64
        %v2547 = vpop.permute.xlu0 %2546
        %2548 = vrot.lane.b32.xlu0 %v2517, 64
        %v2549 = vpop.permute.xlu0 %2548
        %vm2566 = vcmask 781824
        %2567 = vst.msk [vmem:[#allocation2] sm:$0xf] %vm2566, %v2519
        %2568 = vst.msk [vmem:[#allocation2 + $0x4] sm:$0xf] %vm2566, %v2521
        %2569 = vst.msk [vmem:[#allocation2 + $0x8] sm:$0xf] %vm2566, %v2523
        %2570 = vst.msk [vmem:[#allocation2 + $0xc] sm:$0xf] %vm2566, %v2525
        %2571 = vst.msk [vmem:[#allocation2 + $0x10] sm:$0xf] %vm2566, %v2527
        %2572 = vst.msk [vmem:[#allocation2 + $0x14] sm:$0xf] %vm2566, %v2529
        %2573 = vst.msk [vmem:[#allocation2 + $0x18] sm:$0xf] %vm2566, %v2531
        %2574 = vst.msk [vmem:[#allocation2 + $0x1c] sm:$0xf] %vm2566, %v2533
        %2575 = vst.msk [vmem:[#allocation2 + $0x20] sm:$0xf] %vm2566, %v2535
        %2576 = vst.msk [vmem:[#allocation2 + $0x24] sm:$0xf] %vm2566, %v2537
        %2577 = vst.msk [vmem:[#allocation2 + $0x28] sm:$0xf] %vm2566, %v2539
        %2578 = vst.msk [vmem:[#allocation2 + $0x2c] sm:$0xf] %vm2566, %v2541
        %2579 = vst.msk [vmem:[#allocation2 + $0x30] sm:$0xf] %vm2566, %v2543
        %2580 = vst.msk [vmem:[#allocation2 + $0x34] sm:$0xf] %vm2566, %v2545
        %2581 = vst.msk [vmem:[#allocation2 + $0x38] sm:$0xf] %vm2566, %v2547
        %2582 = vst.msk [vmem:[#allocation2 + $0x3c] sm:$0xf] %vm2566, %v2549
        %2583 = vrot.lane.b32.xlu0 %v933, 32
        %v2584 = vpop.permute.xlu0 %2583
        %2585 = vrot.lane.b32.xlu0 %v934, 32
        %v2586 = vpop.permute.xlu0 %2585
        %2587 = vrot.lane.b32.xlu0 %v935, 32
        %v2588 = vpop.permute.xlu0 %2587
        %2589 = vrot.lane.b32.xlu0 %v936, 32
        %v2590 = vpop.permute.xlu0 %2589
        %2591 = vrot.lane.b32.xlu0 %v937, 32
        %v2592 = vpop.permute.xlu0 %2591
        %2593 = vrot.lane.b32.xlu0 %v938, 32
        %v2594 = vpop.permute.xlu0 %2593
        %2595 = vrot.lane.b32.xlu0 %v939, 32
        %v2596 = vpop.permute.xlu0 %2595
        %2597 = vrot.lane.b32.xlu0 %v940, 32
        %v2598 = vpop.permute.xlu0 %2597
        %2599 = vrot.lane.b32.xlu0 %v941, 32
        %v2600 = vpop.permute.xlu0 %2599
        %2601 = vrot.lane.b32.xlu0 %v942, 32
        %v2602 = vpop.permute.xlu0 %2601
        %2603 = vrot.lane.b32.xlu0 %v943, 32
        %v2604 = vpop.permute.xlu0 %2603
        %2605 = vrot.lane.b32.xlu0 %v944, 32
        %v2606 = vpop.permute.xlu0 %2605
        %2607 = vrot.lane.b32.xlu0 %v945, 32
        %v2608 = vpop.permute.xlu0 %2607
        %2609 = vrot.lane.b32.xlu0 %v946, 32
        %v2610 = vpop.permute.xlu0 %2609
        %2611 = vrot.lane.b32.xlu0 %v947, 32
        %v2612 = vpop.permute.xlu0 %2611
        %2613 = vrot.lane.b32.xlu0 %v948, 32
        %v2614 = vpop.permute.xlu0 %2613
        %v2616 = vsel %vm957, %v2584, 0
        %v2619 = vsel %vm957, %v2586, 0
        %v2622 = vsel %vm957, %v2588, 0
        %v2625 = vsel %vm957, %v2590, 0
        %v2628 = vsel %vm957, %v2592, 0
        %v2631 = vsel %vm957, %v2594, 0
        %v2634 = vsel %vm957, %v2596, 0
        %v2637 = vsel %vm957, %v2598, 0
        %v2640 = vsel %vm957, %v2600, 0
        %v2643 = vsel %vm957, %v2602, 0
        %v2646 = vsel %vm957, %v2604, 0
        %v2649 = vsel %vm957, %v2606, 0
        %v2652 = vsel %vm957, %v2608, 0
        %v2655 = vsel %vm957, %v2610, 0
        %v2658 = vsel %vm957, %v2612, 0
        %v2661 = vsel %vm957, %v2614, 0
        %2663 = vmatprep.subr.bf16.mxu0 0
        %2664 = vmatpush1.bf16.xpose.msra.mxu0 %v2661
        %2665 = vmatprep.subr.bf16.mxu0 0
        %2666 = vmatpush1.bf16.xpose.msra.mxu0 %v2658
        %2667 = vmatprep.subr.bf16.mxu0 0
        %2668 = vmatpush1.bf16.xpose.msra.mxu0 %v2655
        %2669 = vmatprep.subr.bf16.mxu0 0
        %2670 = vmatpush1.bf16.xpose.msra.mxu0 %v2652
        %2671 = vmatprep.subr.bf16.mxu0 0
        %2672 = vmatpush1.bf16.xpose.msra.mxu0 %v2649
        %2673 = vmatprep.subr.bf16.mxu0 0
        %2674 = vmatpush1.bf16.xpose.msra.mxu0 %v2646
        %2675 = vmatprep.subr.bf16.mxu0 0
        %2676 = vmatpush1.bf16.xpose.msra.mxu0 %v2643
        %2677 = vmatprep.subr.bf16.mxu0 0
        %2678 = vmatpush1.bf16.xpose.msra.mxu0 %v2640
        %2679 = vmatprep.subr.bf16.mxu0 0
        %2680 = vmatpush2.bf16.xpose.msra.mxu0 0
        %2681 = vmatprep.subr.bf16.mxu0 0
        %2682 = vmatpush2.bf16.xpose.msra.mxu0 0
        %2683 = vmatprep.subr.bf16.mxu0 0
        %2684 = vmatpush2.bf16.xpose.msra.mxu0 0
        %2685 = vmatprep.subr.bf16.mxu0 0
        %2686 = vmatpush2.bf16.xpose.msra.mxu0 0
        %2687 = vmatprep.subr.bf16.mxu0 0
        %2688 = vmatpush2.bf16.xpose.msra.mxu0 0
        %2689 = vmatprep.subr.bf16.mxu0 0
        %2690 = vmatpush2.bf16.xpose.msra.mxu0 0
        %2691 = vmatprep.subr.bf16.mxu0 0
        %2692 = vmatpush2.bf16.xpose.msra.mxu0 0
        %2693 = vmatprep.subr.bf16.mxu0 0
        %2694 = vmatpush2.bf16.xpose.msra.mxu0 0
        %2695 = vmatprep.mubr.bf16.mxu0 0
        %2696 = vmatmul.mubr.bf16.gmra.mxu0 %v2616
        %v2697 = vpop.f32.mrf.mxu0
        %v2698 = vadd.f32 0.0, %v2697
        %v2699 = vpop.f32.mrf.mxu0
        %v2700 = vpop.f32.mrf.mxu0
        %v2701 = vadd.f32 0.0, %v2700
        %v2702 = vpop.f32.mrf.mxu0
        %2703 = vmatprep.mubr.bf16.mxu0 0
        %2704 = vmatmul.mubr.bf16.gmra.mxu0 %v2619
        %v2705 = vpop.f32.mrf.mxu0
        %v2706 = vadd.f32 0.0, %v2705
        %v2707 = vpop.f32.mrf.mxu0
        %v2708 = vpop.f32.mrf.mxu0
        %v2709 = vadd.f32 0.0, %v2708
        %v2710 = vpop.f32.mrf.mxu0
        %2711 = vmatprep.mubr.bf16.mxu0 0
        %2712 = vmatmul.mubr.bf16.gmra.mxu0 %v2622
        %v2713 = vpop.f32.mrf.mxu0
        %v2714 = vadd.f32 0.0, %v2713
        %v2715 = vpop.f32.mrf.mxu0
        %v2716 = vpop.f32.mrf.mxu0
        %v2717 = vadd.f32 0.0, %v2716
        %v2718 = vpop.f32.mrf.mxu0
        %2719 = vmatprep.mubr.bf16.mxu0 0
        %2720 = vmatmul.mubr.bf16.gmra.mxu0 %v2625
        %v2721 = vpop.f32.mrf.mxu0
        %v2722 = vadd.f32 0.0, %v2721
        %v2723 = vpop.f32.mrf.mxu0
        %v2724 = vpop.f32.mrf.mxu0
        %v2725 = vadd.f32 0.0, %v2724
        %v2726 = vpop.f32.mrf.mxu0
        %2727 = vmatprep.mubr.bf16.mxu0 0
        %2728 = vmatmul.mubr.bf16.gmra.mxu0 %v2628
        %v2729 = vpop.f32.mrf.mxu0
        %v2730 = vadd.f32 0.0, %v2729
        %v2731 = vpop.f32.mrf.mxu0
        %v2732 = vpop.f32.mrf.mxu0
        %v2733 = vadd.f32 0.0, %v2732
        %v2734 = vpop.f32.mrf.mxu0
        %2735 = vmatprep.mubr.bf16.mxu0 0
        %2736 = vmatmul.mubr.bf16.gmra.mxu0 %v2631
        %v2737 = vpop.f32.mrf.mxu0
        %v2738 = vadd.f32 0.0, %v2737
        %v2739 = vpop.f32.mrf.mxu0
        %v2740 = vpop.f32.mrf.mxu0
        %v2741 = vadd.f32 0.0, %v2740
        %v2742 = vpop.f32.mrf.mxu0
        %2743 = vmatprep.mubr.bf16.mxu0 0
        %2744 = vmatmul.mubr.bf16.gmra.mxu0 %v2634
        %v2745 = vpop.f32.mrf.mxu0
        %v2746 = vadd.f32 0.0, %v2745
        %v2747 = vpop.f32.mrf.mxu0
        %v2748 = vpop.f32.mrf.mxu0
        %v2749 = vadd.f32 0.0, %v2748
        %v2750 = vpop.f32.mrf.mxu0
        %2751 = vmatprep.mubr.bf16.mxu0 0
        %2752 = vmatmul.mubr.bf16.gmra.mxu0 %v2637
        %v2753 = vpop.f32.mrf.mxu0
        %v2754 = vadd.f32 0.0, %v2753
        %v2755 = vpop.f32.mrf.mxu0
        %v2756 = vpop.f32.mrf.mxu0
        %v2757 = vadd.f32 0.0, %v2756
        %v2758 = vpop.f32.mrf.mxu0
        %2759 = vdwg.mxu0
        %2760 = vmax.xlane.f32.xlu0 %v2698
        %v2761 = vpop.xlane.xlu0 %2760
        %2762 = vmax.xlane.f32.xlu0 %v2701
        %v2763 = vpop.xlane.xlu0 %2762
        %2764 = vmax.xlane.f32.xlu0 %v2706
        %v2765 = vpop.xlane.xlu0 %2764
        %2766 = vmax.xlane.f32.xlu0 %v2709
        %v2767 = vpop.xlane.xlu0 %2766
        %2768 = vmax.xlane.f32.xlu0 %v2714
        %v2769 = vpop.xlane.xlu0 %2768
        %2770 = vmax.xlane.f32.xlu0 %v2717
        %v2771 = vpop.xlane.xlu0 %2770
        %2772 = vmax.xlane.f32.xlu0 %v2722
        %v2773 = vpop.xlane.xlu0 %2772
        %2774 = vmax.xlane.f32.xlu0 %v2725
        %v2775 = vpop.xlane.xlu0 %2774
        %2776 = vmax.xlane.f32.xlu0 %v2730
        %v2777 = vpop.xlane.xlu0 %2776
        %2778 = vmax.xlane.f32.xlu0 %v2733
        %v2779 = vpop.xlane.xlu0 %2778
        %2780 = vmax.xlane.f32.xlu0 %v2738
        %v2781 = vpop.xlane.xlu0 %2780
        %2782 = vmax.xlane.f32.xlu0 %v2741
        %v2783 = vpop.xlane.xlu0 %2782
        %2784 = vmax.xlane.f32.xlu0 %v2746
        %v2785 = vpop.xlane.xlu0 %2784
        %2786 = vmax.xlane.f32.xlu0 %v2749
        %v2787 = vpop.xlane.xlu0 %2786
        %2788 = vmax.xlane.f32.xlu0 %v2754
        %v2789 = vpop.xlane.xlu0 %2788
        %2790 = vmax.xlane.f32.xlu0 %v2757
        %v2791 = vpop.xlane.xlu0 %2790
        %v2792 = vsub.f32 %v2698, %v2761
        %v2793 = vsub.f32 %v2701, %v2763
        %v2794 = vsub.f32 %v2706, %v2765
        %v2795 = vsub.f32 %v2709, %v2767
        %v2796 = vsub.f32 %v2714, %v2769
        %v2797 = vsub.f32 %v2717, %v2771
        %v2798 = vsub.f32 %v2722, %v2773
        %v2799 = vsub.f32 %v2725, %v2775
        %v2800 = vsub.f32 %v2730, %v2777
        %v2801 = vsub.f32 %v2733, %v2779
        %v2802 = vsub.f32 %v2738, %v2781
        %v2803 = vsub.f32 %v2741, %v2783
        %v2804 = vsub.f32 %v2746, %v2785
        %v2805 = vsub.f32 %v2749, %v2787
        %v2806 = vsub.f32 %v2754, %v2789
        %v2807 = vsub.f32 %v2757, %v2791
        %v2808 = vmul.f32 %v2792, 1.442695
        %v2809 = vpow.pop %v2808
        %v2810 = vmul.f32 %v2793, 1.442695
        %v2811 = vpow.pop %v2810
        %v2812 = vmul.f32 %v2794, 1.442695
        %v2813 = vpow.pop %v2812
        %v2814 = vmul.f32 %v2795, 1.442695
        %v2815 = vpow.pop %v2814
        %v2816 = vmul.f32 %v2796, 1.442695
        %v2817 = vpow.pop %v2816
        %v2818 = vmul.f32 %v2797, 1.442695
        %v2819 = vpow.pop %v2818
        %v2820 = vmul.f32 %v2798, 1.442695
        %v2821 = vpow.pop %v2820
        %v2822 = vmul.f32 %v2799, 1.442695
        %v2823 = vpow.pop %v2822
        %v2824 = vmul.f32 %v2800, 1.442695
        %v2825 = vpow.pop %v2824
        %v2826 = vmul.f32 %v2801, 1.442695
        %v2827 = vpow.pop %v2826
        %v2828 = vmul.f32 %v2802, 1.442695
        %v2829 = vpow.pop %v2828
        %v2830 = vmul.f32 %v2803, 1.442695
        %v2831 = vpow.pop %v2830
        %v2832 = vmul.f32 %v2804, 1.442695
        %v2833 = vpow.pop %v2832
        %v2834 = vmul.f32 %v2805, 1.442695
        %v2835 = vpow.pop %v2834
        %v2836 = vmul.f32 %v2806, 1.442695
        %v2837 = vpow.pop %v2836
        %v2838 = vmul.f32 %v2807, 1.442695
        %v2839 = vpow.pop %v2838
        %2840 = vadd.xlane.f32.xlu0 %v2809
        %v2841 = vpop.xlane.xlu0 %2840
        %2842 = vadd.xlane.f32.xlu0 %v2811
        %v2843 = vpop.xlane.xlu0 %2842
        %2844 = vadd.xlane.f32.xlu0 %v2813
        %v2845 = vpop.xlane.xlu0 %2844
        %2846 = vadd.xlane.f32.xlu0 %v2815
        %v2847 = vpop.xlane.xlu0 %2846
        %2848 = vadd.xlane.f32.xlu0 %v2817
        %v2849 = vpop.xlane.xlu0 %2848
        %2850 = vadd.xlane.f32.xlu0 %v2819
        %v2851 = vpop.xlane.xlu0 %2850
        %2852 = vadd.xlane.f32.xlu0 %v2821
        %v2853 = vpop.xlane.xlu0 %2852
        %2854 = vadd.xlane.f32.xlu0 %v2823
        %v2855 = vpop.xlane.xlu0 %2854
        %2856 = vadd.xlane.f32.xlu0 %v2825
        %v2857 = vpop.xlane.xlu0 %2856
        %2858 = vadd.xlane.f32.xlu0 %v2827
        %v2859 = vpop.xlane.xlu0 %2858
        %2860 = vadd.xlane.f32.xlu0 %v2829
        %v2861 = vpop.xlane.xlu0 %2860
        %2862 = vadd.xlane.f32.xlu0 %v2831
        %v2863 = vpop.xlane.xlu0 %2862
        %2864 = vadd.xlane.f32.xlu0 %v2833
        %v2865 = vpop.xlane.xlu0 %2864
        %2866 = vadd.xlane.f32.xlu0 %v2835
        %v2867 = vpop.xlane.xlu0 %2866
        %2868 = vadd.xlane.f32.xlu0 %v2837
        %v2869 = vpop.xlane.xlu0 %2868
        %2870 = vadd.xlane.f32.xlu0 %v2839
        %v2871 = vpop.xlane.xlu0 %2870
        %v2872 = vpack.c.bf16 %v2811, %v2809
        %v2873 = vpack.c.bf16 %v2815, %v2813
        %v2874 = vpack.c.bf16 %v2819, %v2817
        %v2875 = vpack.c.bf16 %v2823, %v2821
        %v2876 = vpack.c.bf16 %v2827, %v2825
        %v2877 = vpack.c.bf16 %v2831, %v2829
        %v2878 = vpack.c.bf16 %v2835, %v2833
        %v2879 = vpack.c.bf16 %v2839, %v2837
        %2880 = vrot.lane.b32.xlu0 %v949, 32
        %v2881 = vpop.permute.xlu0 %2880
        %2882 = vrot.lane.b32.xlu0 %v950, 32
        %v2883 = vpop.permute.xlu0 %2882
        %2884 = vrot.lane.b32.xlu0 %v951, 32
        %v2885 = vpop.permute.xlu0 %2884
        %2886 = vrot.lane.b32.xlu0 %v952, 32
        %v2887 = vpop.permute.xlu0 %2886
        %2888 = vrot.lane.b32.xlu0 %v953, 32
        %v2889 = vpop.permute.xlu0 %2888
        %2890 = vrot.lane.b32.xlu0 %v954, 32
        %v2891 = vpop.permute.xlu0 %2890
        %2892 = vrot.lane.b32.xlu0 %v955, 32
        %v2893 = vpop.permute.xlu0 %2892
        %2894 = vrot.lane.b32.xlu0 %v956, 32
        %v2895 = vpop.permute.xlu0 %2894
        %2904 = vmatprep.subr.bf16.mxu0 0
        %2905 = vmatpush1.bf16.msra.mxu0 %v2895
        %2906 = vmatprep.subr.bf16.mxu0 0
        %2907 = vmatpush1.bf16.msra.mxu0 %v2893
        %2908 = vmatprep.subr.bf16.mxu0 0
        %2909 = vmatpush1.bf16.msra.mxu0 %v2891
        %2910 = vmatprep.subr.bf16.mxu0 0
        %2911 = vmatpush1.bf16.msra.mxu0 %v2889
        %2912 = vmatprep.subr.bf16.mxu0 0
        %2913 = vmatpush1.bf16.msra.mxu0 %v2887
        %2914 = vmatprep.subr.bf16.mxu0 0
        %2915 = vmatpush1.bf16.msra.mxu0 %v2885
        %2916 = vmatprep.subr.bf16.mxu0 0
        %2917 = vmatpush1.bf16.msra.mxu0 %v2883
        %2918 = vmatprep.subr.bf16.mxu0 0
        %2919 = vmatpush1.bf16.msra.mxu0 %v2881
        %2920 = vmatprep.subr.bf16.mxu0 0
        %2921 = vmatpush2.bf16.msra.mxu0 0
        %2922 = vmatprep.subr.bf16.mxu0 0
        %2923 = vmatpush2.bf16.msra.mxu0 0
        %2924 = vmatprep.subr.bf16.mxu0 0
        %2925 = vmatpush2.bf16.msra.mxu0 0
        %2926 = vmatprep.subr.bf16.mxu0 0
        %2927 = vmatpush2.bf16.msra.mxu0 0
        %2928 = vmatprep.subr.bf16.mxu0 0
        %2929 = vmatpush2.bf16.msra.mxu0 0
        %2930 = vmatprep.subr.bf16.mxu0 0
        %2931 = vmatpush2.bf16.msra.mxu0 0
        %2932 = vmatprep.subr.bf16.mxu0 0
        %2933 = vmatpush2.bf16.msra.mxu0 0
        %2934 = vmatprep.subr.bf16.mxu0 0
        %2935 = vmatpush2.bf16.msra.mxu0 0
        %2936 = vmatprep.mubr.bf16.mxu0 0
        %2937 = vmatmul.mubr.bf16.gmra.mxu0 %v2872
        %v2938 = vpop.f32.mrf.mxu0
        %v2939 = vadd.f32 0.0, %v2938
        %v2940 = vpop.f32.mrf.mxu0
        %v2941 = vpop.f32.mrf.mxu0
        %v2942 = vadd.f32 0.0, %v2941
        %v2943 = vpop.f32.mrf.mxu0
        %2944 = vmatprep.mubr.bf16.mxu0 0
        %2945 = vmatmul.mubr.bf16.gmra.mxu0 %v2873
        %v2946 = vpop.f32.mrf.mxu0
        %v2947 = vadd.f32 0.0, %v2946
        %v2948 = vpop.f32.mrf.mxu0
        %v2949 = vpop.f32.mrf.mxu0
        %v2950 = vadd.f32 0.0, %v2949
        %v2951 = vpop.f32.mrf.mxu0
        %2952 = vmatprep.mubr.bf16.mxu0 0
        %2953 = vmatmul.mubr.bf16.gmra.mxu0 %v2874
        %v2954 = vpop.f32.mrf.mxu0
        %v2955 = vadd.f32 0.0, %v2954
        %v2956 = vpop.f32.mrf.mxu0
        %v2957 = vpop.f32.mrf.mxu0
        %v2958 = vadd.f32 0.0, %v2957
        %v2959 = vpop.f32.mrf.mxu0
        %2960 = vmatprep.mubr.bf16.mxu0 0
        %2961 = vmatmul.mubr.bf16.gmra.mxu0 %v2875
        %v2962 = vpop.f32.mrf.mxu0
        %v2963 = vadd.f32 0.0, %v2962
        %v2964 = vpop.f32.mrf.mxu0
        %v2965 = vpop.f32.mrf.mxu0
        %v2966 = vadd.f32 0.0, %v2965
        %v2967 = vpop.f32.mrf.mxu0
        %2968 = vmatprep.mubr.bf16.mxu0 0
        %2969 = vmatmul.mubr.bf16.gmra.mxu0 %v2876
        %v2970 = vpop.f32.mrf.mxu0
        %v2971 = vadd.f32 0.0, %v2970
        %v2972 = vpop.f32.mrf.mxu0
        %v2973 = vpop.f32.mrf.mxu0
        %v2974 = vadd.f32 0.0, %v2973
        %v2975 = vpop.f32.mrf.mxu0
        %2976 = vmatprep.mubr.bf16.mxu0 0
        %2977 = vmatmul.mubr.bf16.gmra.mxu0 %v2877
        %v2978 = vpop.f32.mrf.mxu0
        %v2979 = vadd.f32 0.0, %v2978
        %v2980 = vpop.f32.mrf.mxu0
        %v2981 = vpop.f32.mrf.mxu0
        %v2982 = vadd.f32 0.0, %v2981
        %v2983 = vpop.f32.mrf.mxu0
        %2984 = vmatprep.mubr.bf16.mxu0 0
        %2985 = vmatmul.mubr.bf16.gmra.mxu0 %v2878
        %v2986 = vpop.f32.mrf.mxu0
        %v2987 = vadd.f32 0.0, %v2986
        %v2988 = vpop.f32.mrf.mxu0
        %v2989 = vpop.f32.mrf.mxu0
        %v2990 = vadd.f32 0.0, %v2989
        %v2991 = vpop.f32.mrf.mxu0
        %2992 = vmatprep.mubr.bf16.mxu0 0
        %2993 = vmatmul.mubr.bf16.gmra.mxu0 %v2879
        %v2994 = vpop.f32.mrf.mxu0
        %v2995 = vadd.f32 0.0, %v2994
        %v2996 = vpop.f32.mrf.mxu0
        %v2997 = vpop.f32.mrf.mxu0
        %v2998 = vadd.f32 0.0, %v2997
        %v2999 = vpop.f32.mrf.mxu0
        %3000 = vdwg.mxu0
        %v3001 = vrcp.pop %v2841
        %v3002 = vrcp.pop %v2843
        %v3003 = vrcp.pop %v2845
        %v3004 = vrcp.pop %v2847
        %v3005 = vrcp.pop %v2849
        %v3006 = vrcp.pop %v2851
        %v3007 = vrcp.pop %v2853
        %v3008 = vrcp.pop %v2855
        %v3009 = vrcp.pop %v2857
        %v3010 = vrcp.pop %v2859
        %v3011 = vrcp.pop %v2861
        %v3012 = vrcp.pop %v2863
        %v3013 = vrcp.pop %v2865
        %v3014 = vrcp.pop %v2867
        %v3015 = vrcp.pop %v2869
        %v3016 = vrcp.pop %v2871
        %v3017 = vmul.f32 %v2939, %v3001
        %v3018 = vmul.f32 %v2942, %v3002
        %v3019 = vmul.f32 %v2947, %v3003
        %v3020 = vmul.f32 %v2950, %v3004
        %v3021 = vmul.f32 %v2955, %v3005
        %v3022 = vmul.f32 %v2958, %v3006
        %v3023 = vmul.f32 %v2963, %v3007
        %v3024 = vmul.f32 %v2966, %v3008
        %v3025 = vmul.f32 %v2971, %v3009
        %v3026 = vmul.f32 %v2974, %v3010
        %v3027 = vmul.f32 %v2979, %v3011
        %v3028 = vmul.f32 %v2982, %v3012
        %v3029 = vmul.f32 %v2987, %v3013
        %v3030 = vmul.f32 %v2990, %v3014
        %v3031 = vmul.f32 %v2995, %v3015
        %v3032 = vmul.f32 %v2998, %v3016
        %v3033 = vpack.c.bf16 %v3018, %v3017
        %v3034 = vpack.c.bf16 %v3020, %v3019
        %v3035 = vpack.c.bf16 %v3022, %v3021
        %v3036 = vpack.c.bf16 %v3024, %v3023
        %v3037 = vpack.c.bf16 %v3026, %v3025
        %v3038 = vpack.c.bf16 %v3028, %v3027
        %v3039 = vpack.c.bf16 %v3030, %v3029
        %v3040 = vpack.c.bf16 %v3032, %v3031
        %v3049 = vunpack.c.l.b16 %v3033
        %v3050 = vunpack.c.h.b16 %v3033
        %v3051 = vunpack.c.l.b16 %v3034
        %v3052 = vunpack.c.h.b16 %v3034
        %v3053 = vunpack.c.l.b16 %v3035
        %v3054 = vunpack.c.h.b16 %v3035
        %v3055 = vunpack.c.l.b16 %v3036
        %v3056 = vunpack.c.h.b16 %v3036
        %v3057 = vunpack.c.l.b16 %v3037
        %v3058 = vunpack.c.h.b16 %v3037
        %v3059 = vunpack.c.l.b16 %v3038
        %v3060 = vunpack.c.h.b16 %v3038
        %v3061 = vunpack.c.l.b16 %v3039
        %v3062 = vunpack.c.h.b16 %v3039
        %v3063 = vunpack.c.l.b16 %v3040
        %v3064 = vunpack.c.h.b16 %v3040
        %v3065 = vpack.c.b16 %v3049, %v3049
        %v3066 = vpack.c.b16 %v3050, %v3050
        %v3067 = vpack.c.b16 %v3051, %v3051
        %v3068 = vpack.c.b16 %v3052, %v3052
        %v3069 = vpack.c.b16 %v3053, %v3053
        %v3070 = vpack.c.b16 %v3054, %v3054
        %v3071 = vpack.c.b16 %v3055, %v3055
        %v3072 = vpack.c.b16 %v3056, %v3056
        %v3073 = vpack.c.b16 %v3057, %v3057
        %v3074 = vpack.c.b16 %v3058, %v3058
        %v3075 = vpack.c.b16 %v3059, %v3059
        %v3076 = vpack.c.b16 %v3060, %v3060
        %v3077 = vpack.c.b16 %v3061, %v3061
        %v3078 = vpack.c.b16 %v3062, %v3062
        %v3079 = vpack.c.b16 %v3063, %v3063
        %v3080 = vpack.c.b16 %v3064, %v3064
        %3081 = vrot.lane.b32.xlu0 %v3065, 96
        %v3082 = vpop.permute.xlu0 %3081
        %3083 = vrot.lane.b32.xlu0 %v3066, 96
        %v3084 = vpop.permute.xlu0 %3083
        %3085 = vrot.lane.b32.xlu0 %v3067, 96
        %v3086 = vpop.permute.xlu0 %3085
        %3087 = vrot.lane.b32.xlu0 %v3068, 96
        %v3088 = vpop.permute.xlu0 %3087
        %3089 = vrot.lane.b32.xlu0 %v3069, 96
        %v3090 = vpop.permute.xlu0 %3089
        %3091 = vrot.lane.b32.xlu0 %v3070, 96
        %v3092 = vpop.permute.xlu0 %3091
        %3093 = vrot.lane.b32.xlu0 %v3071, 96
        %v3094 = vpop.permute.xlu0 %3093
        %3095 = vrot.lane.b32.xlu0 %v3072, 96
        %v3096 = vpop.permute.xlu0 %3095
        %3097 = vrot.lane.b32.xlu0 %v3073, 96
        %v3098 = vpop.permute.xlu0 %3097
        %3099 = vrot.lane.b32.xlu0 %v3074, 96
        %v3100 = vpop.permute.xlu0 %3099
        %3101 = vrot.lane.b32.xlu0 %v3075, 96
        %v3102 = vpop.permute.xlu0 %3101
        %3103 = vrot.lane.b32.xlu0 %v3076, 96
        %v3104 = vpop.permute.xlu0 %3103
        %3105 = vrot.lane.b32.xlu0 %v3077, 96
        %v3106 = vpop.permute.xlu0 %3105
        %3107 = vrot.lane.b32.xlu0 %v3078, 96
        %v3108 = vpop.permute.xlu0 %3107
        %3109 = vrot.lane.b32.xlu0 %v3079, 96
        %v3110 = vpop.permute.xlu0 %3109
        %3111 = vrot.lane.b32.xlu0 %v3080, 96
        %v3112 = vpop.permute.xlu0 %3111
        %vm3129 = vcmask 1044224
        %3130 = vst.msk [vmem:[#allocation2] sm:$0xf] %vm3129, %v3082
        %3131 = vst.msk [vmem:[#allocation2 + $0x4] sm:$0xf] %vm3129, %v3084
        %3132 = vst.msk [vmem:[#allocation2 + $0x8] sm:$0xf] %vm3129, %v3086
        %3133 = vst.msk [vmem:[#allocation2 + $0xc] sm:$0xf] %vm3129, %v3088
        %3134 = vst.msk [vmem:[#allocation2 + $0x10] sm:$0xf] %vm3129, %v3090
        %3135 = vst.msk [vmem:[#allocation2 + $0x14] sm:$0xf] %vm3129, %v3092
        %3136 = vst.msk [vmem:[#allocation2 + $0x18] sm:$0xf] %vm3129, %v3094
        %3137 = vst.msk [vmem:[#allocation2 + $0x1c] sm:$0xf] %vm3129, %v3096
        %3138 = vst.msk [vmem:[#allocation2 + $0x20] sm:$0xf] %vm3129, %v3098
        %3139 = vst.msk [vmem:[#allocation2 + $0x24] sm:$0xf] %vm3129, %v3100
        %3140 = vst.msk [vmem:[#allocation2 + $0x28] sm:$0xf] %vm3129, %v3102
        %3141 = vst.msk [vmem:[#allocation2 + $0x2c] sm:$0xf] %vm3129, %v3104
        %3142 = vst.msk [vmem:[#allocation2 + $0x30] sm:$0xf] %vm3129, %v3106
        %3143 = vst.msk [vmem:[#allocation2 + $0x34] sm:$0xf] %vm3129, %v3108
        %3144 = vst.msk [vmem:[#allocation2 + $0x38] sm:$0xf] %vm3129, %v3110
        %3145 = vst.msk [vmem:[#allocation2 + $0x3c] sm:$0xf] %vm3129, %v3112
        %v3146 = vld [vmem:[#allocation2] sm:$0xf]
        %v3147 = vld [vmem:[#allocation2 + $0x4] sm:$0xf]
        %v3148 = vld [vmem:[#allocation2 + $0x8] sm:$0xf]
        %v3149 = vld [vmem:[#allocation2 + $0xc] sm:$0xf]
        %v3150 = vld [vmem:[#allocation2 + $0x10] sm:$0xf]
        %v3151 = vld [vmem:[#allocation2 + $0x14] sm:$0xf]
        %v3152 = vld [vmem:[#allocation2 + $0x18] sm:$0xf]
        %v3153 = vld [vmem:[#allocation2 + $0x1c] sm:$0xf]
        %v3154 = vld [vmem:[#allocation2 + $0x20] sm:$0xf]
        %v3155 = vld [vmem:[#allocation2 + $0x24] sm:$0xf]
        %v3156 = vld [vmem:[#allocation2 + $0x28] sm:$0xf]
        %v3157 = vld [vmem:[#allocation2 + $0x2c] sm:$0xf]
        %v3158 = vld [vmem:[#allocation2 + $0x30] sm:$0xf]
        %v3159 = vld [vmem:[#allocation2 + $0x34] sm:$0xf]
        %v3160 = vld [vmem:[#allocation2 + $0x38] sm:$0xf]
        %v3161 = vld [vmem:[#allocation2 + $0x3c] sm:$0xf]
        %v3162 = vld [vmem:[#allocation8] sm:$0xf]
        %v3163 = vld [vmem:[#allocation8 + $0x4] sm:$0xf]
        %v3164 = vld [vmem:[#allocation8 + $0x8] sm:$0xf]
        %v3165 = vld [vmem:[#allocation8 + $0xc] sm:$0xf]
        %v3166 = vld [vmem:[#allocation8 + $0x10] sm:$0xf]
        %v3167 = vld [vmem:[#allocation8 + $0x14] sm:$0xf]
        %v3168 = vld [vmem:[#allocation8 + $0x18] sm:$0xf]
        %v3169 = vld [vmem:[#allocation8 + $0x1c] sm:$0xf]
        %v3170 = vld [vmem:[#allocation8 + $0x20] sm:$0xf]
        %v3171 = vld [vmem:[#allocation8 + $0x24] sm:$0xf]
        %v3172 = vld [vmem:[#allocation8 + $0x28] sm:$0xf]
        %v3173 = vld [vmem:[#allocation8 + $0x2c] sm:$0xf]
        %v3174 = vld [vmem:[#allocation8 + $0x30] sm:$0xf]
        %v3175 = vld [vmem:[#allocation8 + $0x34] sm:$0xf]
        %v3176 = vld [vmem:[#allocation8 + $0x38] sm:$0xf]
        %v3177 = vld [vmem:[#allocation8 + $0x3c] sm:$0xf]
        %v3178 = vld [vmem:[%s5] sm:$0x1]
        %v3180 = vlaneseq
        %v3181 = vshrl.u32 %v3180, 7
        %v3182 = vsub.s32 0, %v3181
        %v3183 = vrot.slane %v3178, %v3182
        %v3201 = vunpack.c.l.b16 %v3146
        %v3202 = vunpack.c.l.b16 %v3147
        %v3203 = vunpack.c.l.b16 %v3148
        %v3204 = vunpack.c.l.b16 %v3149
        %v3205 = vunpack.c.l.b16 %v3150
        %v3206 = vunpack.c.l.b16 %v3151
        %v3207 = vunpack.c.l.b16 %v3152
        %v3208 = vunpack.c.l.b16 %v3153
        %v3209 = vunpack.c.l.b16 %v3154
        %v3210 = vunpack.c.l.b16 %v3155
        %v3211 = vunpack.c.l.b16 %v3156
        %v3212 = vunpack.c.l.b16 %v3157
        %v3213 = vunpack.c.l.b16 %v3158
        %v3214 = vunpack.c.l.b16 %v3159
        %v3215 = vunpack.c.l.b16 %v3160
        %v3216 = vunpack.c.l.b16 %v3161
        %v3217 = vpack.c.b16 %v3202, %v3201
        %v3218 = vpack.c.b16 %v3204, %v3203
        %v3219 = vpack.c.b16 %v3206, %v3205
        %v3220 = vpack.c.b16 %v3208, %v3207
        %v3221 = vpack.c.b16 %v3210, %v3209
        %v3222 = vpack.c.b16 %v3212, %v3211
        %v3223 = vpack.c.b16 %v3214, %v3213
        %v3224 = vpack.c.b16 %v3216, %v3215
        %v3249 = vunpack.c.l.b16 %v3162
        %v3250 = vunpack.c.l.b16 %v3163
        %v3251 = vunpack.c.l.b16 %v3164
        %v3252 = vunpack.c.l.b16 %v3165
        %v3253 = vunpack.c.l.b16 %v3166
        %v3254 = vunpack.c.l.b16 %v3167
        %v3255 = vunpack.c.l.b16 %v3168
        %v3256 = vunpack.c.l.b16 %v3169
        %v3257 = vunpack.c.l.b16 %v3170
        %v3258 = vunpack.c.l.b16 %v3171
        %v3259 = vunpack.c.l.b16 %v3172
        %v3260 = vunpack.c.l.b16 %v3173
        %v3261 = vunpack.c.l.b16 %v3174
        %v3262 = vunpack.c.l.b16 %v3175
        %v3263 = vunpack.c.l.b16 %v3176
        %v3264 = vunpack.c.l.b16 %v3177
        %v3265 = vpack.c.b16 %v3250, %v3249
        %v3266 = vpack.c.b16 %v3252, %v3251
        %v3267 = vpack.c.b16 %v3254, %v3253
        %v3268 = vpack.c.b16 %v3256, %v3255
        %v3269 = vpack.c.b16 %v3258, %v3257
        %v3270 = vpack.c.b16 %v3260, %v3259
        %v3271 = vpack.c.b16 %v3262, %v3261
        %v3272 = vpack.c.b16 %v3264, %v3263
        %3281 = vmatprep.subr.bf16.mxu0 0
        %3282 = vmatpush1.bf16.msra.mxu0 %v3272
        %3283 = vmatprep.subr.bf16.mxu0 0
        %3284 = vmatpush1.bf16.msra.mxu0 %v3271
        %3285 = vmatprep.subr.bf16.mxu0 0
        %3286 = vmatpush1.bf16.msra.mxu0 %v3270
        %3287 = vmatprep.subr.bf16.mxu0 0
        %3288 = vmatpush1.bf16.msra.mxu0 %v3269
        %3289 = vmatprep.subr.bf16.mxu0 0
        %3290 = vmatpush1.bf16.msra.mxu0 %v3268
        %3291 = vmatprep.subr.bf16.mxu0 0
        %3292 = vmatpush1.bf16.msra.mxu0 %v3267
        %3293 = vmatprep.subr.bf16.mxu0 0
        %3294 = vmatpush1.bf16.msra.mxu0 %v3266
        %3295 = vmatprep.subr.bf16.mxu0 0
        %3296 = vmatpush1.bf16.msra.mxu0 %v3265
        %3297 = vmatprep.subr.bf16.mxu0 0
        %3298 = vmatpush2.bf16.msra.mxu0 0
        %3299 = vmatprep.subr.bf16.mxu0 0
        %3300 = vmatpush2.bf16.msra.mxu0 0
        %3301 = vmatprep.subr.bf16.mxu0 0
        %3302 = vmatpush2.bf16.msra.mxu0 0
        %3303 = vmatprep.subr.bf16.mxu0 0
        %3304 = vmatpush2.bf16.msra.mxu0 0
        %3305 = vmatprep.subr.bf16.mxu0 0
        %3306 = vmatpush2.bf16.msra.mxu0 0
        %3307 = vmatprep.subr.bf16.mxu0 0
        %3308 = vmatpush2.bf16.msra.mxu0 0
        %3309 = vmatprep.subr.bf16.mxu0 0
        %3310 = vmatpush2.bf16.msra.mxu0 0
        %3311 = vmatprep.subr.bf16.mxu0 0
        %3312 = vmatpush2.bf16.msra.mxu0 0
        %3313 = vmatprep.mubr.bf16.mxu0 0
        %3314 = vmatmul.mubr.bf16.gmra.mxu0 %v3217
        %v3315 = vpop.f32.mrf.mxu0
        %v3316 = vadd.f32 %v3183, %v3315
        %v3317 = vpop.f32.mrf.mxu0
        %v3318 = vpop.f32.mrf.mxu0
        %v3319 = vadd.f32 %v3183, %v3318
        %v3320 = vpop.f32.mrf.mxu0
        %3321 = vmatprep.mubr.bf16.mxu0 0
        %3322 = vmatmul.mubr.bf16.gmra.mxu0 %v3218
        %v3323 = vpop.f32.mrf.mxu0
        %v3324 = vadd.f32 %v3183, %v3323
        %v3325 = vpop.f32.mrf.mxu0
        %v3326 = vpop.f32.mrf.mxu0
        %v3327 = vadd.f32 %v3183, %v3326
        %v3328 = vpop.f32.mrf.mxu0
        %3329 = vmatprep.mubr.bf16.mxu0 0
        %3330 = vmatmul.mubr.bf16.gmra.mxu0 %v3219
        %v3331 = vpop.f32.mrf.mxu0
        %v3332 = vadd.f32 %v3183, %v3331
        %v3333 = vpop.f32.mrf.mxu0
        %v3334 = vpop.f32.mrf.mxu0
        %v3335 = vadd.f32 %v3183, %v3334
        %v3336 = vpop.f32.mrf.mxu0
        %3337 = vmatprep.mubr.bf16.mxu0 0
        %3338 = vmatmul.mubr.bf16.gmra.mxu0 %v3220
        %v3339 = vpop.f32.mrf.mxu0
        %v3340 = vadd.f32 %v3183, %v3339
        %v3341 = vpop.f32.mrf.mxu0
        %v3342 = vpop.f32.mrf.mxu0
        %v3343 = vadd.f32 %v3183, %v3342
        %v3344 = vpop.f32.mrf.mxu0
        %3345 = vmatprep.mubr.bf16.mxu0 0
        %3346 = vmatmul.mubr.bf16.gmra.mxu0 %v3221
        %v3347 = vpop.f32.mrf.mxu0
        %v3348 = vadd.f32 %v3183, %v3347
        %v3349 = vpop.f32.mrf.mxu0
        %v3350 = vpop.f32.mrf.mxu0
        %v3351 = vadd.f32 %v3183, %v3350
        %v3352 = vpop.f32.mrf.mxu0
        %3353 = vmatprep.mubr.bf16.mxu0 0
        %3354 = vmatmul.mubr.bf16.gmra.mxu0 %v3222
        %v3355 = vpop.f32.mrf.mxu0
        %v3356 = vadd.f32 %v3183, %v3355
        %v3357 = vpop.f32.mrf.mxu0
        %v3358 = vpop.f32.mrf.mxu0
        %v3359 = vadd.f32 %v3183, %v3358
        %v3360 = vpop.f32.mrf.mxu0
        %3361 = vmatprep.mubr.bf16.mxu0 0
        %3362 = vmatmul.mubr.bf16.gmra.mxu0 %v3223
        %v3363 = vpop.f32.mrf.mxu0
        %v3364 = vadd.f32 %v3183, %v3363
        %v3365 = vpop.f32.mrf.mxu0
        %v3366 = vpop.f32.mrf.mxu0
        %v3367 = vadd.f32 %v3183, %v3366
        %v3368 = vpop.f32.mrf.mxu0
        %3369 = vmatprep.mubr.bf16.mxu0 0
        %3370 = vmatmul.mubr.bf16.gmra.mxu0 %v3224
        %v3371 = vpop.f32.mrf.mxu0
        %v3372 = vadd.f32 %v3183, %v3371
        %v3373 = vpop.f32.mrf.mxu0
        %v3374 = vpop.f32.mrf.mxu0
        %v3375 = vadd.f32 %v3183, %v3374
        %v3376 = vpop.f32.mrf.mxu0
        %3377 = vdwg.mxu0
        %v3378 = vadd.f32 %v300, %v3316
        %v3379 = vadd.f32 %v301, %v3319
        %v3380 = vadd.f32 %v302, %v3324
        %v3381 = vadd.f32 %v303, %v3327
        %v3382 = vadd.f32 %v304, %v3332
        %v3383 = vadd.f32 %v305, %v3335
        %v3384 = vadd.f32 %v306, %v3340
        %v3385 = vadd.f32 %v307, %v3343
        %v3386 = vadd.f32 %v308, %v3348
        %v3387 = vadd.f32 %v309, %v3351
        %v3388 = vadd.f32 %v310, %v3356
        %v3389 = vadd.f32 %v311, %v3359
        %v3390 = vadd.f32 %v312, %v3364
        %v3391 = vadd.f32 %v313, %v3367
        %v3392 = vadd.f32 %v314, %v3372
        %v3393 = vadd.f32 %v315, %v3375
        %3394 = vst [vmem:[%s298] sm:$0xff] %v3378
        %3395 = vst [vmem:[%s298 + $0x8] sm:$0xff] %v3379
        %3396 = vst [vmem:[%s298 + $0x10] sm:$0xff] %v3380
        %3397 = vst [vmem:[%s298 + $0x18] sm:$0xff] %v3381
        %3398 = vst [vmem:[%s298 + $0x20] sm:$0xff] %v3382
        %3399 = vst [vmem:[%s298 + $0x28] sm:$0xff] %v3383
        %3400 = vst [vmem:[%s298 + $0x30] sm:$0xff] %v3384
        %3401 = vst [vmem:[%s298 + $0x38] sm:$0xff] %v3385
        %3402 = vst [vmem:[%s298 + $0x40] sm:$0xff] %v3386
        %3403 = vst [vmem:[%s298 + $0x48] sm:$0xff] %v3387
        %3404 = vst [vmem:[%s298 + $0x50] sm:$0xff] %v3388
        %3405 = vst [vmem:[%s298 + $0x58] sm:$0xff] %v3389
        %3406 = vst [vmem:[%s298 + $0x60] sm:$0xff] %v3390
        %3407 = vst [vmem:[%s298 + $0x68] sm:$0xff] %v3391
        %3408 = vst [vmem:[%s298 + $0x70] sm:$0xff] %v3392
        %3409 = vst [vmem:[%s298 + $0x78] sm:$0xff] %v3393
        %s3410 = sand.u32 %s163, 1
        %s3411 = scalar_lea.sflag [#allocation5], %s3410
        %s3412 = sand.u32 %s163, 1
        %s3413 = smul.addr %s3412, 128
        %s3414 = scalar_lea.vmem [#allocation9], %s3413
        // Predicated region
        $region57: #{tpu_custom_call.1} parent=43 // pred_check
          %p3415 = pneg %p173
        $region58: #{tpu_custom_call.1} parent=43 // pred_check_branch
          %3417 = sbr.rel (%p3415) target = $region60
        $region59: #{tpu_custom_call.1} parent=43 // pred_region
          %s3419 = ssub.s32 2048, 2048
          %3420 = vsyncadd %s3411, %s3419
          %s3421 = smul.addr %s24, 16
          %s3422 = smul.addr %s3421, 128
          %s3423 = scalar_lea.hbm %s6, %s3422
          %s3424 = sshll.u32 %s3414, 4
          %s3425 = int_to_ptr.vmem [resolvable:$true] %s3424
          %3430 = dma.vmem_to_hbm [thread:$0]  %s3425, 2048, %s3423, %s3411, 128, 128, 8
        $region60: #{tpu_custom_call.1} parent=43 // pred_fallthru
          _
      $region44: #{tpu_custom_call.1} parent=5 // pred_fallthru
        _
      %p3431 = scmp.le.s32.totalorder 2, %s19
      // Predicated region
      $region61: #{tpu_custom_call.1} parent=5 // pred_check
        %p3432 = pneg %p3431
      $region62: #{tpu_custom_call.1} parent=5 // pred_check_branch
        %3434 = sbr.rel (%p3432) target = $region64
      $region63: #{tpu_custom_call.1} parent=5 // pred_region
        %s3435 = ssub.s32 %s19, 2
        // Predicated region
        $region65: #{tpu_custom_call.1} parent=63 // pred_check
          %p3436 = pneg %p179
        $region66: #{tpu_custom_call.1} parent=63 // pred_check_branch
          %3438 = sbr.rel (%p3436) target = $region68
        $region67: #{tpu_custom_call.1} parent=63 // pred_region
          %s3439 = sand.u32 %s164, 1
          %s3440 = scalar_lea.sflag [#allocation5], %s3439
          %s3441 = sand.u32 %s164, 1
          %s3442 = smul.addr %s3441, 128
          %s3443 = scalar_lea.vmem [#allocation9], %s3442
          %3444 = dma.done %s3440, 2048
        $region68: #{tpu_custom_call.1} parent=63 // pred_fallthru
          _
      $region64: #{tpu_custom_call.1} parent=5 // pred_fallthru
        _
    $region6: #{tpu_custom_call.1} parent=1 // loop_footer
      %s23 = sadd.s32 1, %s19
    $region7: #{tpu_custom_call.1} parent=1 // loop_footer_branch
      %18 = sbr.rel target = $region3
    $region8: #{tpu_custom_call.1} parent=1 // loop_exit
      _
    %3445 = vsyncpa [#allocation4], 1
    %s3446 = scalar_lea.sflag [#allocation4], 1
    %3447 = vsyncpa %s3446, 1
    %3448 = vsyncpa [#allocation7], 1
    %3449 = vsyncpa [#allocation5], 1
    %s3450 = scalar_lea.sflag [#allocation5], 1
    %3451 = vsyncpa %s3450, 1

</llo_original>
